<compile_context>
chip_gen: v6e
topology: v6e:2x2x1
jax: 0.10.0
libtpu: 0.0.40
codegen_flags: <defaults>
</compile_context>

<pallas_src>
import jax
import jax.numpy as jnp
from jax.experimental import pallas as pl
from jax.experimental.pallas import tpu as pltpu


_W_ORDER = ('we1', 'be1', 'we2', 'be2',
            'wer', 'wes', 'beb1', 'web2', 'beb2',
            'wne', 'wnn', 'bn1', 'wn2', 'bn2',
            'wge', 'wgn', 'bg1', 'wg2', 'bg2')


def _cdiv(a, b):
    return -(-a // b)


def _pack_weights(params):
    """Pack every weight/bias into one [rows, max_cols] f32 slab.

    Row offsets are padded to multiples of 8 so every in-kernel static slice
    is sublane-aligned; columns are zero-padded to the widest matrix (32),
    which is below one lane tile anyway.
    """
    max_cols = max(int(params[k].shape[1]) for k in _W_ORDER)
    layout = {}
    chunks = []
    off = 0
    for k in _W_ORDER:
        w = jnp.asarray(params[k], jnp.float32)
        r, c = int(w.shape[0]), int(w.shape[1])
        r_pad = _cdiv(r, 8) * 8
        layout[k] = (off, r, c)
        chunks.append(jnp.pad(w, ((0, r_pad - r), (0, max_cols - c))))
        off += r_pad
    return jnp.concatenate(chunks, axis=0), layout


def _make_kernel(layout, G, K, edge_dtype):
    f32 = jnp.float32
    M = G * K
    inv_km1 = 1.0 / (K - 1)
    inv_k = 1.0 / K

    def kernel(theta_ref, wpack_ref, out_ref):
        def w(name):
            off, r, c = layout[name]
            return wpack_ref[off:off + r, 0:c]          # static slice, zero-cost view load

        theta = theta_ref[...]                           # [M, input_dim], already flat 2D

        # ---- encoder: per-node MLP over the whole G*K slab ------------------
        h = jnp.maximum(
            jnp.dot(theta, w('we1'), preferred_element_type=f32) + w('be1'), 0.0)
        h = jnp.dot(h, w('we2'), preferred_element_type=f32) + w('be2')       # [M, node_attr]

        # ---- edge block: hidden only; output projection deferred ------------
        hr = jnp.dot(h, w('wer'), preferred_element_type=f32)                 # [M, latent]
        hs = jnp.dot(h, w('wes'), preferred_element_type=f32)                 # [M, latent]
        L = hr.shape[-1]

        # Sender accumulation WITHOUT materializing the [G,K,K,L] tensor:
        #   acc[g, r] = sum_s relu(hr[g,r] + hs[g,s] + beb1)
        hr3 = (hr + w('beb1')).reshape(G, K, L).astype(edge_dtype)            # bias added once
        hs3 = hs.reshape(G, K, L).astype(edge_dtype)
        acc = jnp.zeros((G, K, L), edge_dtype)
        for s in range(K):                       # static unrolled loop, K is small (8)
            acc = acc + jnp.maximum(hr3 + hs3[:, s:s + 1, :], 0.0)
        diag = jnp.maximum(hr3 + hs3, 0.0)                                    # self-loop term
        # mean over the K-1 non-self senders
        agg_hidden = ((acc - diag).astype(f32) * inv_km1).reshape(M, L)

        # project the sender-mean (linear commutes with the mean); beb2 added once
        agg_recv = (jnp.dot(agg_hidden, w('web2'), preferred_element_type=f32)
                    + w('beb2'))                                              # [M, edge_attr]
        E = agg_recv.shape[-1]

        # ---- node block: v = MLP([agg_recv, h]) as two matmuls + add --------
        n_hid = jnp.maximum(
            jnp.dot(agg_recv, w('wne'), preferred_element_type=f32)
            + jnp.dot(h, w('wnn'), preferred_element_type=f32) + w('bn1'), 0.0)
        v = jnp.dot(n_hid, w('wn2'), preferred_element_type=f32) + w('bn2')   # [M, node_attr]
        N = v.shape[-1]

        # ---- global block: q = MLP([mean_edges, mean_nodes]) ----------------
        # mean over all (non-self) edges == mean over receivers of agg_recv
        edge_agg = jnp.sum(agg_recv.reshape(G, K, E), axis=1) * inv_k         # [G, edge_attr]
        node_agg = jnp.sum(v.reshape(G, K, N), axis=1) * inv_k                # [G, node_attr]
        g_hid = jnp.maximum(
            jnp.dot(edge_agg, w('wge'), preferred_element_type=f32)
            + jnp.dot(node_agg, w('wgn'), preferred_element_type=f32) + w('bg1'), 0.0)
        q = jnp.dot(g_hid, w('wg2'), preferred_element_type=f32) + w('bg2')   # [G, n_actions]

        out_ref[...] = q                       # dense (G, n_actions) store per grid step

    return kernel


def simple_gn_forward(theta, params, *, K, graphs_per_step=128,
                      edge_phase_dtype=jnp.float32,
                      vmem_limit_bytes=32 * 1024 * 1024):
    """theta: [B*K, input_dim] float32 -> global_attr [B, n_actions].

    edge_phase_dtype=jnp.bfloat16 halves the edge-phase VPU/vreg cost on
    v6e/v7x (requires ~1e-2 tolerance); keep float32 on v5e.
    """
    BK, input_dim = theta.shape
    assert BK % K == 0
    assert K > 1, "mean over senders requires K > 1"
    B = BK // K
    n_actions = int(params['wg2'].shape[1])

    wpack, layout = _pack_weights(params)

    # --- G graphs per grid step ---------------------------------------------
    # Big steps amortize the ~0.35us/step fixed pipeline overhead, but keep
    # >= 2 grid steps when possible so ("parallel",) can shard the grid across
    # both v7x TensorCores.  Multi-step grids need G to be 8-row aligned for
    # the dense (G, n_actions) output block.
    G = min(graphs_per_step, B)
    if B > 1 and _cdiv(B, G) < 2:
        G = _cdiv(B, 2)
    if _cdiv(B, G) > 1:
        G = _cdiv(G, 8) * 8
    if _cdiv(B, G) <= 1:
        G = B                       # single-step grid: block dims equal full dims
    n_steps = _cdiv(B, G)
    B_pad = n_steps * G

    theta = jnp.asarray(theta, jnp.float32)
    if B_pad != B:                  # pad with zero graphs; results sliced off below
        theta = jnp.pad(theta, ((0, (B_pad - B) * K), (0, 0)))

    kernel = _make_kernel(layout, G, K, edge_phase_dtype)

    grid_spec = pltpu.PrefetchScalarGridSpec(
        num_scalar_prefetch=0,
        grid=(n_steps,),
        in_specs=[
            pl.BlockSpec((G * K, input_dim), lambda b: (b, 0)),   # flat theta slab
            pl.BlockSpec(wpack.shape, lambda b: (0, 0)),          # packed weights, resident
        ],
        out_specs=pl.BlockSpec((G, n_actions), lambda b: (b, 0)),
    )

    out = pl.pallas_call(
        kernel,
        out_shape=jax.ShapeDtypeStruct((B_pad, n_actions), jnp.float32),
        grid_spec=grid_spec,
        compiler_params=pltpu.CompilerParams(
            dimension_semantics=("parallel",),
            vmem_limit_bytes=vmem_limit_bytes),
    )(theta, wpack)
    return out[:B]


def init_params(key, *, input_dim, node_attr_dim, edge_attr_dim, latent_dim, n_actions):
    def dense(k, fan_in, fan_out):
        return jax.random.normal(k, (fan_in, fan_out), jnp.float32) / jnp.sqrt(
            jnp.float32(fan_in))

    def bias(k, n):
        return 0.1 * jax.random.normal(k, (1, n), jnp.float32)

    ks = jax.random.split(key, 22)
    p = {}
    # encoder: input_dim -> latent -> node_attr
    p['we1'] = dense(ks[0], input_dim, latent_dim)
    p['be1'] = bias(ks[11], latent_dim)
    p['we2'] = dense(ks[1], latent_dim, node_attr_dim)
    p['be2'] = bias(ks[12], node_attr_dim)
    # edge block: (2*node_attr) -> latent -> edge_attr (receiver / sender halves)
    p['wer'] = dense(ks[2], node_attr_dim, latent_dim)
    p['wes'] = dense(ks[3], node_attr_dim, latent_dim)
    p['beb1'] = bias(ks[13], latent_dim)
    p['web2'] = dense(ks[4], latent_dim, edge_attr_dim)
    p['beb2'] = bias(ks[14], edge_attr_dim)
    # node block: (edge_attr + node_attr) -> latent -> node_attr
    p['wne'] = dense(ks[5], edge_attr_dim, latent_dim)
    p['wnn'] = dense(ks[6], node_attr_dim, latent_dim)
    p['bn1'] = bias(ks[15], latent_dim)
    p['wn2'] = dense(ks[7], latent_dim, node_attr_dim)
    p['bn2'] = bias(ks[16], node_attr_dim)
    # global block: (edge_attr + node_attr) -> latent -> n_actions
    p['wge'] = dense(ks[8], edge_attr_dim, latent_dim)
    p['wgn'] = dense(ks[9], node_attr_dim, latent_dim)
    p['bg1'] = bias(ks[17], latent_dim)
    p['wg2'] = dense(ks[10], latent_dim, n_actions)
    p['bg2'] = bias(ks[18], n_actions)
    return p


def reference_forward(theta, params, *, K):
    """Pure-JAX reference of the same GN forward (for correctness check)."""
    B = theta.shape[0] // K
    x = theta.reshape(B, K, -1)
    h = jax.nn.relu(x @ params['we1'] + params['be1']) @ params['we2'] + params['be2']
    hr = h @ params['wer']
    hs = h @ params['wes']
    e_hid = jax.nn.relu(hr[:, :, None, :] + hs[:, None, :, :] + params['beb1'])
    e = e_hid @ params['web2'] + params['beb2']
    mask = (~jnp.eye(K, dtype=bool))[None, :, :, None]
    e_m = jnp.where(mask, e, 0.0)
    agg_recv = e_m.sum(axis=2) / (K - 1)
    v = (jax.nn.relu(agg_recv @ params['wne'] + h @ params['wnn'] + params['bn1'])
         @ params['wn2'] + params['bn2'])
    edge_agg = e_m.sum(axis=(1, 2)) / (K * (K - 1))
    node_agg = v.mean(axis=1)
    q = (jax.nn.relu(edge_agg @ params['wge'] + node_agg @ params['wgn'] + params['bg1'])
         @ params['wg2'] + params['bg2'])
    return q


if __name__ == "__main__":
    # small shapes consistent with the module's forward
    B = 51           # exercises >=2 grid steps + 8-aligned G + zero-graph padding
    K = 8            # nodes per graph
    input_dim = 16
    latent_dim = 32
    node_attr_dim = 16
    edge_attr_dim = 16
    n_actions = 4

    key = jax.random.PRNGKey(0)
    k_theta, k_params = jax.random.split(key)
    theta = jax.random.normal(k_theta, (B * K, input_dim), jnp.float32)
    params = init_params(k_params, input_dim=input_dim, node_attr_dim=node_attr_dim,
                         edge_attr_dim=edge_attr_dim, latent_dim=latent_dim,
                         n_actions=n_actions)

    q = simple_gn_forward(theta, params, K=K)
    q = jax.block_until_ready(q)

    q_ref = jax.block_until_ready(reference_forward(theta, params, K=K))
    assert q.shape == (B, n_actions)
    assert jnp.allclose(q, q_ref, rtol=1e-4, atol=1e-4), (q, q_ref)

    print("KERNEL_OK")
</pallas_src>

<mosaic_0001>
module attributes {stable_mosaic.version = 11 : i64} {
  func.func @kernel(%arg0: i32, %arg1: memref<256x16xf32, #tpu.memory_space<vmem>>, %arg2: memref<304x32xf32, #tpu.memory_space<vmem>>, %arg3: memref<32x4xf32, #tpu.memory_space<vmem>>) attributes {dimension_semantics = [#tpu.dimension_semantics<parallel>], iteration_bounds = array<i64: 2>, scalar_prefetch = 0 : i64, scratch_operands = 0 : i64, tpu.core_type = #tpu.core_type<tc>, window_params = [{transform_indices = @transform_0, window_bounds = array<i64: 256, 16>}, {pipeline_mode = #tpu.pipeline_mode<synchronous>, transform_indices = @transform_1, window_bounds = array<i64: 304, 32>}, {transform_indices = @transform_2, window_bounds = array<i64: 32, 4>}]} {
    %c0 = arith.constant 0 : index
    %c0_0 = arith.constant 0 : index
    %0 = vector.load %arg1[%c0, %c0_0] : memref<256x16xf32, #tpu.memory_space<vmem>>, vector<256x16xf32>
    %c0_1 = arith.constant 0 : index
    %c0_2 = arith.constant 0 : index
    %1 = vector.load %arg2[%c0_1, %c0_2] : memref<304x32xf32, #tpu.memory_space<vmem>>, vector<16x32xf32>
    %cst = arith.constant dense<0.000000e+00> : vector<256x32xf32>
    %2 = tpu.matmul %0, %1, %cst {dimension_numbers = #tpu.dot_dimension_numbers<[1], [0], [0], [1], [0, 0, 1, 1], [], []>} : vector<256x16xf32>, vector<16x32xf32>, vector<256x32xf32> -> vector<256x32xf32>
    %c16 = arith.constant 16 : index
    %c0_3 = arith.constant 0 : index
    %3 = vector.load %arg2[%c16, %c0_3] : memref<304x32xf32, #tpu.memory_space<vmem>>, vector<1x32xf32>
    %4 = vector.broadcast %3 : vector<1x32xf32> to vector<256x32xf32>
    %5 = arith.addf %2, %4 : vector<256x32xf32>
    %cst_4 = arith.constant 0.000000e+00 : f32
    %6 = vector.broadcast %cst_4 : f32 to vector<256x32xf32>
    %7 = arith.maximumf %5, %6 : vector<256x32xf32>
    %c24 = arith.constant 24 : index
    %c0_5 = arith.constant 0 : index
    %8 = vector.load %arg2[%c24, %c0_5] : memref<304x32xf32, #tpu.memory_space<vmem>>, vector<32x16xf32>
    %cst_6 = arith.constant dense<0.000000e+00> : vector<256x16xf32>
    %9 = tpu.matmul %7, %8, %cst_6 {dimension_numbers = #tpu.dot_dimension_numbers<[1], [0], [0], [1], [0, 0, 1, 1], [], []>} : vector<256x32xf32>, vector<32x16xf32>, vector<256x16xf32> -> vector<256x16xf32>
    %c56 = arith.constant 56 : index
    %c0_7 = arith.constant 0 : index
    %10 = vector.load %arg2[%c56, %c0_7] : memref<304x32xf32, #tpu.memory_space<vmem>>, vector<1x16xf32>
    %11 = vector.broadcast %10 : vector<1x16xf32> to vector<256x16xf32>
    %12 = arith.addf %9, %11 : vector<256x16xf32>
    %c64 = arith.constant 64 : index
    %c0_8 = arith.constant 0 : index
    %13 = vector.load %arg2[%c64, %c0_8] : memref<304x32xf32, #tpu.memory_space<vmem>>, vector<16x32xf32>
    %cst_9 = arith.constant dense<0.000000e+00> : vector<256x32xf32>
    %14 = tpu.matmul %12, %13, %cst_9 {dimension_numbers = #tpu.dot_dimension_numbers<[1], [0], [0], [1], [0, 0, 1, 1], [], []>} : vector<256x16xf32>, vector<16x32xf32>, vector<256x32xf32> -> vector<256x32xf32>
    %c80 = arith.constant 80 : index
    %c0_10 = arith.constant 0 : index
    %15 = vector.load %arg2[%c80, %c0_10] : memref<304x32xf32, #tpu.memory_space<vmem>>, vector<16x32xf32>
    %cst_11 = arith.constant dense<0.000000e+00> : vector<256x32xf32>
    %16 = tpu.matmul %12, %15, %cst_11 {dimension_numbers = #tpu.dot_dimension_numbers<[1], [0], [0], [1], [0, 0, 1, 1], [], []>} : vector<256x16xf32>, vector<16x32xf32>, vector<256x32xf32> -> vector<256x32xf32>
    %c96 = arith.constant 96 : index
    %c0_12 = arith.constant 0 : index
    %17 = vector.load %arg2[%c96, %c0_12] : memref<304x32xf32, #tpu.memory_space<vmem>>, vector<1x32xf32>
    %18 = vector.broadcast %17 : vector<1x32xf32> to vector<256x32xf32>
    %19 = arith.addf %14, %18 : vector<256x32xf32>
    %20 = vector.shape_cast %19 : vector<256x32xf32> to vector<32x8x32xf32>
    %21 = vector.shape_cast %16 : vector<256x32xf32> to vector<32x8x32xf32>
    %cst_13 = arith.constant 0.000000e+00 : f32
    %22 = vector.broadcast %cst_13 : f32 to vector<32x8x32xf32>
    %23 = vector.extract_strided_slice %21 {offsets = [0, 0, 0], sizes = [32, 1, 32], strides = [1, 1, 1]} : vector<32x8x32xf32> to vector<32x1x32xf32>
    %24 = vector.broadcast %23 : vector<32x1x32xf32> to vector<32x8x32xf32>
    %25 = arith.addf %20, %24 : vector<32x8x32xf32>
    %cst_14 = arith.constant 0.000000e+00 : f32
    %26 = vector.broadcast %cst_14 : f32 to vector<32x8x32xf32>
    %27 = arith.maximumf %25, %26 : vector<32x8x32xf32>
    %28 = arith.addf %22, %27 : vector<32x8x32xf32>
    %29 = vector.extract_strided_slice %21 {offsets = [0, 1, 0], sizes = [32, 1, 32], strides = [1, 1, 1]} : vector<32x8x32xf32> to vector<32x1x32xf32>
    %30 = vector.broadcast %29 : vector<32x1x32xf32> to vector<32x8x32xf32>
    %31 = arith.addf %20, %30 : vector<32x8x32xf32>
    %cst_15 = arith.constant 0.000000e+00 : f32
    %32 = vector.broadcast %cst_15 : f32 to vector<32x8x32xf32>
    %33 = arith.maximumf %31, %32 : vector<32x8x32xf32>
    %34 = arith.addf %28, %33 : vector<32x8x32xf32>
    %35 = vector.extract_strided_slice %21 {offsets = [0, 2, 0], sizes = [32, 1, 32], strides = [1, 1, 1]} : vector<32x8x32xf32> to vector<32x1x32xf32>
    %36 = vector.broadcast %35 : vector<32x1x32xf32> to vector<32x8x32xf32>
    %37 = arith.addf %20, %36 : vector<32x8x32xf32>
    %cst_16 = arith.constant 0.000000e+00 : f32
    %38 = vector.broadcast %cst_16 : f32 to vector<32x8x32xf32>
    %39 = arith.maximumf %37, %38 : vector<32x8x32xf32>
    %40 = arith.addf %34, %39 : vector<32x8x32xf32>
    %41 = vector.extract_strided_slice %21 {offsets = [0, 3, 0], sizes = [32, 1, 32], strides = [1, 1, 1]} : vector<32x8x32xf32> to vector<32x1x32xf32>
    %42 = vector.broadcast %41 : vector<32x1x32xf32> to vector<32x8x32xf32>
    %43 = arith.addf %20, %42 : vector<32x8x32xf32>
    %cst_17 = arith.constant 0.000000e+00 : f32
    %44 = vector.broadcast %cst_17 : f32 to vector<32x8x32xf32>
    %45 = arith.maximumf %43, %44 : vector<32x8x32xf32>
    %46 = arith.addf %40, %45 : vector<32x8x32xf32>
    %47 = vector.extract_strided_slice %21 {offsets = [0, 4, 0], sizes = [32, 1, 32], strides = [1, 1, 1]} : vector<32x8x32xf32> to vector<32x1x32xf32>
    %48 = vector.broadcast %47 : vector<32x1x32xf32> to vector<32x8x32xf32>
    %49 = arith.addf %20, %48 : vector<32x8x32xf32>
    %cst_18 = arith.constant 0.000000e+00 : f32
    %50 = vector.broadcast %cst_18 : f32 to vector<32x8x32xf32>
    %51 = arith.maximumf %49, %50 : vector<32x8x32xf32>
    %52 = arith.addf %46, %51 : vector<32x8x32xf32>
    %53 = vector.extract_strided_slice %21 {offsets = [0, 5, 0], sizes = [32, 1, 32], strides = [1, 1, 1]} : vector<32x8x32xf32> to vector<32x1x32xf32>
    %54 = vector.broadcast %53 : vector<32x1x32xf32> to vector<32x8x32xf32>
    %55 = arith.addf %20, %54 : vector<32x8x32xf32>
    %cst_19 = arith.constant 0.000000e+00 : f32
    %56 = vector.broadcast %cst_19 : f32 to vector<32x8x32xf32>
    %57 = arith.maximumf %55, %56 : vector<32x8x32xf32>
    %58 = arith.addf %52, %57 : vector<32x8x32xf32>
    %59 = vector.extract_strided_slice %21 {offsets = [0, 6, 0], sizes = [32, 1, 32], strides = [1, 1, 1]} : vector<32x8x32xf32> to vector<32x1x32xf32>
    %60 = vector.broadcast %59 : vector<32x1x32xf32> to vector<32x8x32xf32>
    %61 = arith.addf %20, %60 : vector<32x8x32xf32>
    %cst_20 = arith.constant 0.000000e+00 : f32
    %62 = vector.broadcast %cst_20 : f32 to vector<32x8x32xf32>
    %63 = arith.maximumf %61, %62 : vector<32x8x32xf32>
    %64 = arith.addf %58, %63 : vector<32x8x32xf32>
    %65 = vector.extract_strided_slice %21 {offsets = [0, 7, 0], sizes = [32, 1, 32], strides = [1, 1, 1]} : vector<32x8x32xf32> to vector<32x1x32xf32>
    %66 = vector.broadcast %65 : vector<32x1x32xf32> to vector<32x8x32xf32>
    %67 = arith.addf %20, %66 : vector<32x8x32xf32>
    %cst_21 = arith.constant 0.000000e+00 : f32
    %68 = vector.broadcast %cst_21 : f32 to vector<32x8x32xf32>
    %69 = arith.maximumf %67, %68 : vector<32x8x32xf32>
    %70 = arith.addf %64, %69 : vector<32x8x32xf32>
    %71 = arith.addf %20, %21 : vector<32x8x32xf32>
    %cst_22 = arith.constant 0.000000e+00 : f32
    %72 = vector.broadcast %cst_22 : f32 to vector<32x8x32xf32>
    %73 = arith.maximumf %71, %72 : vector<32x8x32xf32>
    %74 = arith.subf %70, %73 : vector<32x8x32xf32>
    %cst_23 = arith.constant 0.142857149 : f32
    %75 = vector.broadcast %cst_23 : f32 to vector<32x8x32xf32>
    %76 = arith.mulf %74, %75 : vector<32x8x32xf32>
    %77 = vector.shape_cast %76 : vector<32x8x32xf32> to vector<256x32xf32>
    %c104 = arith.constant 104 : index
    %c0_24 = arith.constant 0 : index
    %78 = vector.load %arg2[%c104, %c0_24] : memref<304x32xf32, #tpu.memory_space<vmem>>, vector<32x16xf32>
    %cst_25 = arith.constant dense<0.000000e+00> : vector<256x16xf32>
    %79 = tpu.matmul %77, %78, %cst_25 {dimension_numbers = #tpu.dot_dimension_numbers<[1], [0], [0], [1], [0, 0, 1, 1], [], []>} : vector<256x32xf32>, vector<32x16xf32>, vector<256x16xf32> -> vector<256x16xf32>
    %c136 = arith.constant 136 : index
    %c0_26 = arith.constant 0 : index
    %80 = vector.load %arg2[%c136, %c0_26] : memref<304x32xf32, #tpu.memory_space<vmem>>, vector<1x16xf32>
    %81 = vector.broadcast %80 : vector<1x16xf32> to vector<256x16xf32>
    %82 = arith.addf %79, %81 : vector<256x16xf32>
    %c144 = arith.constant 144 : index
    %c0_27 = arith.constant 0 : index
    %83 = vector.load %arg2[%c144, %c0_27] : memref<304x32xf32, #tpu.memory_space<vmem>>, vector<16x32xf32>
    %cst_28 = arith.constant dense<0.000000e+00> : vector<256x32xf32>
    %84 = tpu.matmul %82, %83, %cst_28 {dimension_numbers = #tpu.dot_dimension_numbers<[1], [0], [0], [1], [0, 0, 1, 1], [], []>} : vector<256x16xf32>, vector<16x32xf32>, vector<256x32xf32> -> vector<256x32xf32>
    %c160 = arith.constant 160 : index
    %c0_29 = arith.constant 0 : index
    %85 = vector.load %arg2[%c160, %c0_29] : memref<304x32xf32, #tpu.memory_space<vmem>>, vector<16x32xf32>
    %cst_30 = arith.constant dense<0.000000e+00> : vector<256x32xf32>
    %86 = tpu.matmul %12, %85, %cst_30 {dimension_numbers = #tpu.dot_dimension_numbers<[1], [0], [0], [1], [0, 0, 1, 1], [], []>} : vector<256x16xf32>, vector<16x32xf32>, vector<256x32xf32> -> vector<256x32xf32>
    %87 = arith.addf %84, %86 : vector<256x32xf32>
    %c176 = arith.constant 176 : index
    %c0_31 = arith.constant 0 : index
    %88 = vector.load %arg2[%c176, %c0_31] : memref<304x32xf32, #tpu.memory_space<vmem>>, vector<1x32xf32>
    %89 = vector.broadcast %88 : vector<1x32xf32> to vector<256x32xf32>
    %90 = arith.addf %87, %89 : vector<256x32xf32>
    %cst_32 = arith.constant 0.000000e+00 : f32
    %91 = vector.broadcast %cst_32 : f32 to vector<256x32xf32>
    %92 = arith.maximumf %90, %91 : vector<256x32xf32>
    %c184 = arith.constant 184 : index
    %c0_33 = arith.constant 0 : index
    %93 = vector.load %arg2[%c184, %c0_33] : memref<304x32xf32, #tpu.memory_space<vmem>>, vector<32x16xf32>
    %cst_34 = arith.constant dense<0.000000e+00> : vector<256x16xf32>
    %94 = tpu.matmul %92, %93, %cst_34 {dimension_numbers = #tpu.dot_dimension_numbers<[1], [0], [0], [1], [0, 0, 1, 1], [], []>} : vector<256x32xf32>, vector<32x16xf32>, vector<256x16xf32> -> vector<256x16xf32>
    %c216 = arith.constant 216 : index
    %c0_35 = arith.constant 0 : index
    %95 = vector.load %arg2[%c216, %c0_35] : memref<304x32xf32, #tpu.memory_space<vmem>>, vector<1x16xf32>
    %96 = vector.broadcast %95 : vector<1x16xf32> to vector<256x16xf32>
    %97 = arith.addf %94, %96 : vector<256x16xf32>
    %98 = vector.shape_cast %82 : vector<256x16xf32> to vector<32x8x16xf32>
    %cst_36 = arith.constant dense<0.000000e+00> : vector<32x16xf32>
    %99 = vector.multi_reduction <add>, %98, %cst_36 [1] : vector<32x8x16xf32> to vector<32x16xf32>
    %cst_37 = arith.constant 1.250000e-01 : f32
    %100 = vector.broadcast %cst_37 : f32 to vector<32x16xf32>
    %101 = arith.mulf %99, %100 : vector<32x16xf32>
    %102 = vector.shape_cast %97 : vector<256x16xf32> to vector<32x8x16xf32>
    %cst_38 = arith.constant dense<0.000000e+00> : vector<32x16xf32>
    %103 = vector.multi_reduction <add>, %102, %cst_38 [1] : vector<32x8x16xf32> to vector<32x16xf32>
    %cst_39 = arith.constant 1.250000e-01 : f32
    %104 = vector.broadcast %cst_39 : f32 to vector<32x16xf32>
    %105 = arith.mulf %103, %104 : vector<32x16xf32>
    %c224 = arith.constant 224 : index
    %c0_40 = arith.constant 0 : index
    %106 = vector.load %arg2[%c224, %c0_40] : memref<304x32xf32, #tpu.memory_space<vmem>>, vector<16x32xf32>
    %cst_41 = arith.constant dense<0.000000e+00> : vector<32x32xf32>
    %107 = tpu.matmul %101, %106, %cst_41 {dimension_numbers = #tpu.dot_dimension_numbers<[1], [0], [0], [1], [0, 0, 1, 1], [], []>} : vector<32x16xf32>, vector<16x32xf32>, vector<32x32xf32> -> vector<32x32xf32>
    %c240 = arith.constant 240 : index
    %c0_42 = arith.constant 0 : index
    %108 = vector.load %arg2[%c240, %c0_42] : memref<304x32xf32, #tpu.memory_space<vmem>>, vector<16x32xf32>
    %cst_43 = arith.constant dense<0.000000e+00> : vector<32x32xf32>
    %109 = tpu.matmul %105, %108, %cst_43 {dimension_numbers = #tpu.dot_dimension_numbers<[1], [0], [0], [1], [0, 0, 1, 1], [], []>} : vector<32x16xf32>, vector<16x32xf32>, vector<32x32xf32> -> vector<32x32xf32>
    %110 = arith.addf %107, %109 : vector<32x32xf32>
    %c256 = arith.constant 256 : index
    %c0_44 = arith.constant 0 : index
    %111 = vector.load %arg2[%c256, %c0_44] : memref<304x32xf32, #tpu.memory_space<vmem>>, vector<1x32xf32>
    %112 = vector.broadcast %111 : vector<1x32xf32> to vector<32x32xf32>
    %113 = arith.addf %110, %112 : vector<32x32xf32>
    %cst_45 = arith.constant 0.000000e+00 : f32
    %114 = vector.broadcast %cst_45 : f32 to vector<32x32xf32>
    %115 = arith.maximumf %113, %114 : vector<32x32xf32>
    %c264 = arith.constant 264 : index
    %c0_46 = arith.constant 0 : index
    %116 = vector.load %arg2[%c264, %c0_46] : memref<304x32xf32, #tpu.memory_space<vmem>>, vector<32x4xf32>
    %cst_47 = arith.constant dense<0.000000e+00> : vector<32x4xf32>
    %117 = tpu.matmul %115, %116, %cst_47 {dimension_numbers = #tpu.dot_dimension_numbers<[1], [0], [0], [1], [0, 0, 1, 1], [], []>} : vector<32x32xf32>, vector<32x4xf32>, vector<32x4xf32> -> vector<32x4xf32>
    %c296 = arith.constant 296 : index
    %c0_48 = arith.constant 0 : index
    %118 = vector.load %arg2[%c296, %c0_48] : memref<304x32xf32, #tpu.memory_space<vmem>>, vector<1x4xf32>
    %119 = vector.broadcast %118 : vector<1x4xf32> to vector<32x4xf32>
    %120 = arith.addf %117, %119 : vector<32x4xf32>
    %c0_49 = arith.constant 0 : index
    %c0_50 = arith.constant 0 : index
    %121 = vector.load %arg3[%c0_49, %c0_50] : memref<32x4xf32, #tpu.memory_space<vmem>>, vector<32x4xf32>
    tpu.vector_store %arg3[%c0_49, %c0_50], %120 {strides = array<i32>} : memref<32x4xf32, #tpu.memory_space<vmem>>, vector<32x4xf32>,
    return
  }
  func.func @transform_0(%arg0: i32) -> (i32, i32) {
    %c0_i32 = arith.constant 0 : i32
    %c0_i32_0 = arith.constant 0 : i32
    return %arg0, %c0_i32 : i32, i32
  }
  func.func @transform_1(%arg0: i32) -> (i32, i32) {
    %c0_i32 = arith.constant 0 : i32
    %c0_i32_0 = arith.constant 0 : i32
    %c0_i32_1 = arith.constant 0 : i32
    return %c0_i32, %c0_i32_0 : i32, i32
  }
  func.func @transform_2(%arg0: i32) -> (i32, i32) {
    %c0_i32 = arith.constant 0 : i32
    %c0_i32_0 = arith.constant 0 : i32
    return %arg0, %c0_i32 : i32, i32
  }
}

</mosaic_0001>

<llo_original>
// kernel: tpu_custom_call.1
$region0: #{tpu_custom_call.1}
  #allocation0 [shape = 'u32[]', space=smem, size = 0x4, offset = 0x4, fixed_abs, tag = 'smem constant byte address 0x4 - core index']
  #allocation1 [shape = 'u32[144,128]{1,0:T(1,128)}', space=vmem, size = 0x12000, scoped, tag = 'internal scratch']
  %s0 = inlined_call_operand.vmem [shape: f32[512,16], index: 0, kind: input, shape index: {}]
  %s1 = inlined_call_operand.vmem [shape: f32[304,32], index: 1, kind: input, shape index: {}]
  %s2 = inlined_call_operand.vmem [shape: f32[64,4], index: 2, kind: output, shape index: {}]
  %s3 = sld [smem:[#allocation0]]
  $region41: #{tpu_custom_call.1} parent=0
    _
  %s5 = ssub.s32 1, %s3
  %s6 = scalar_select 0, %s5, %s3
  loop: start=0, step=1, limit=4
  $region2: #{tpu_custom_call.1} parent=0 // loop_pre_header
    _
  $region3: #{tpu_custom_call.1} parent=0 // loop_header
    %s8 = sphi 0, %s12
    %p9 = scmp.ge.s32.totalorder %s8, 4
    %s18 = sphi 0, %s20
    %s21 = sphi 0, %s18
    %s22 = sphi 0, %s21
    %s38 = sphi 0, %s22
    %s42 = sphi 0, %s42
    %s44 = sphi 0, %s42
    %s45 = sphi 0, %s44
    %s59 = sphi 0, %s45
    %s65 = sphi 0, %s67
    %s68 = sphi 0, %s65
    %s69 = sphi 0, %s68
    %s85 = sphi 0, %s69
  $region4: #{tpu_custom_call.1} parent=0 // loop_header_branch
    %11 = sbr.rel (%p9) target = $region8
  $region5: #{tpu_custom_call.1} parent=0 // loop_body
    %s13 = ssub.s32 %s8, 1
    %s14 = ssub.s32 %s8, 2
    %s15 = sadd.s32 %s8, 1
    %s16 = ssub.s32 %s8, %s15
    %p17 = scmp.eq.s32.totalorder %s16, 0
    %s19 = sadd.s32 %s18, 1
    %s20 = scalar_select %p17, %s18, %s19
    %p23 = pneg %p17
    %p24 = scmp.eq.s32.totalorder %s8, 1
    %p25 = por %p23, %p24
    %p26 = scmp.ne.s32.totalorder %s18, %s21
    %p27 = scmp.eq.s32.totalorder %s8, 0
    %p28 = por %p26, %p27
    %p29 = scmp.ne.s32.totalorder %s18, %s21
    %p30 = scmp.eq.s32.totalorder %s13, 1
    %p31 = por %p29, %p30
    %p32 = scmp.ne.s32.totalorder %s21, %s22
    %p33 = scmp.eq.s32.totalorder %s13, 0
    %p34 = por %p32, %p33
    %p35 = scmp.ne.s32.totalorder %s21, %s22
    %p36 = scmp.eq.s32.totalorder %s14, 1
    %p37 = por %p35, %p36
    %p39 = scmp.ne.s32.totalorder %s22, %s38
    %p40 = scmp.eq.s32.totalorder %s14, 0
    %p41 = por %p39, %p40
    %s43 = sadd.s32 %s42, 1
    %p46 = scmp.eq.s32.totalorder %s8, 1
    %p47 = scmp.ne.s32.totalorder %s42, %s44
    %p48 = scmp.eq.s32.totalorder %s8, 0
    %p49 = por %p47, %p48
    %p50 = scmp.ne.s32.totalorder %s42, %s44
    %p51 = scmp.eq.s32.totalorder %s13, 1
    %p52 = por %p50, %p51
    %p53 = scmp.ne.s32.totalorder %s44, %s45
    %p54 = scmp.eq.s32.totalorder %s13, 0
    %p55 = por %p53, %p54
    %p56 = scmp.ne.s32.totalorder %s44, %s45
    %p57 = scmp.eq.s32.totalorder %s14, 1
    %p58 = por %p56, %p57
    %p60 = scmp.ne.s32.totalorder %s45, %s59
    %p61 = scmp.eq.s32.totalorder %s14, 0
    %p62 = por %p60, %p61
    %s63 = ssub.s32 %s8, %s15
    %p64 = scmp.eq.s32.totalorder %s63, 0
    %s66 = sadd.s32 %s65, 1
    %s67 = scalar_select %p64, %s65, %s66
    %p70 = pneg %p64
    %p71 = scmp.eq.s32.totalorder %s8, 1
    %p72 = por %p70, %p71
    %p73 = scmp.ne.s32.totalorder %s65, %s68
    %p74 = scmp.eq.s32.totalorder %s8, 0
    %p75 = por %p73, %p74
    %p76 = scmp.ne.s32.totalorder %s65, %s68
    %p77 = scmp.eq.s32.totalorder %s13, 1
    %p78 = por %p76, %p77
    %p79 = scmp.ne.s32.totalorder %s68, %s69
    %p80 = scmp.eq.s32.totalorder %s13, 0
    %p81 = por %p79, %p80
    %p82 = scmp.ne.s32.totalorder %s68, %s69
    %p83 = scmp.eq.s32.totalorder %s14, 1
    %p84 = por %p82, %p83
    %p86 = scmp.ne.s32.totalorder %s69, %s85
    %p87 = scmp.eq.s32.totalorder %s14, 0
    %p88 = por %p86, %p87
    %p89 = scmp.le.s32.totalorder 1, %s8
    %p90 = scmp.lt.s32.totalorder %s8, 3
    %p91 = pnand %p89, %p90
    %p92 = pneg %p91
    // Predicated region
    $region9: #{tpu_custom_call.1} parent=5 // pred_check
      _
    $region10: #{tpu_custom_call.1} parent=5 // pred_check_branch
      %94 = sbr.rel (%p91) target = $region12
    $region11: #{tpu_custom_call.1} parent=5 // pred_region
      %s95 = ssub.s32 %s8, 1
      // Predicated region
      $region13: #{tpu_custom_call.1} parent=11 // pred_check
        %p96 = pneg %p55
      $region14: #{tpu_custom_call.1} parent=11 // pred_check_branch
        %98 = sbr.rel (%p96) target = $region16
      $region15: #{tpu_custom_call.1} parent=11 // pred_region
        _
      $region16: #{tpu_custom_call.1} parent=11 // pred_fallthru
        _
    $region12: #{tpu_custom_call.1} parent=5 // pred_fallthru
      _
    %p99 = scmp.lt.s32.totalorder %s8, 2
    // Predicated region
    $region17: #{tpu_custom_call.1} parent=5 // pred_check
      %p100 = pneg %p99
    $region18: #{tpu_custom_call.1} parent=5 // pred_check_branch
      %102 = sbr.rel (%p100) target = $region20
    $region19: #{tpu_custom_call.1} parent=5 // pred_region
      // Predicated region
      $region21: #{tpu_custom_call.1} parent=19 // pred_check
        %p103 = pneg %p28
      $region22: #{tpu_custom_call.1} parent=19 // pred_check_branch
        %105 = sbr.rel (%p103) target = $region24
      $region23: #{tpu_custom_call.1} parent=19 // pred_region
        %s106 = smul.u32 32, %s8
        %p107 = scmp.lt.s32.totalorder %s106, 63
        %s108 = scalar_select %p107, %s106, 63
        %s109 = smul.addr %s108, 8
        %s110 = scalar_lea.vmem %s0, %s109
        %s111 = smul.u32 32, %s8
      $region24: #{tpu_custom_call.1} parent=19 // pred_fallthru
        _
    $region20: #{tpu_custom_call.1} parent=5 // pred_fallthru
      _
    %p112 = scmp.le.s32.totalorder 1, %s8
    %p113 = scmp.lt.s32.totalorder %s8, 3
    %p114 = pnand %p112, %p113
    %p115 = pneg %p114
    // Predicated region
    $region25: #{tpu_custom_call.1} parent=5 // pred_check
      _
    $region26: #{tpu_custom_call.1} parent=5 // pred_check_branch
      %117 = sbr.rel (%p114) target = $region28
    $region27: #{tpu_custom_call.1} parent=5 // pred_region
      %s118 = ssub.s32 %s8, 1
      %s119 = smul.u32 32, %s13
      %p120 = scmp.lt.s32.totalorder %s119, 63
      %s121 = scalar_select %p120, %s119, 63
      %s122 = smul.addr %s121, 8
      %s123 = scalar_lea.vmem %s0, %s122
      %p124 = pneg %p34
      %p125 = pneg %p31
      %p126 = pneg %p55
      %p127 = pneg %p52
      %p128 = pneg %p81
      %p129 = pneg %p78
      %s130 = smul.u32 4, %s13
      %p131 = scmp.lt.s32.totalorder %s130, 7
      %s132 = scalar_select %p131, %s130, 7
      %s133 = smul.addr %s132, 8
      %s134 = scalar_lea.vmem %s2, %s133
      %s135 = smul.u32 32, %s13
      %p136 = scmp.lt.s32.totalorder %s135, 63
      %s137 = scalar_select %p136, %s135, 63
      %s138 = smul.addr %s137, 8
      %s139 = scalar_lea.vmem %s0, %s138
      %s140 = smul.u32 32, %s13
      %s141 = smul.u32 4, %s13
      %p142 = scmp.lt.s32.totalorder %s141, 7
      %s143 = scalar_select %p142, %s141, 7
      %s144 = smul.addr %s143, 8
      %s145 = scalar_lea.vmem %s2, %s144
      %s146 = smul.u32 4, %s13
      %v147 = vld [vmem:[%s139] sm:$0xff]
      %v148 = vld [vmem:[%s139 + $0x8] sm:$0xff]
      %v149 = vld [vmem:[%s139 + $0x10] sm:$0xff]
      %v150 = vld [vmem:[%s139 + $0x18] sm:$0xff]
      %v151 = vld [vmem:[%s139 + $0x20] sm:$0xff]
      %v152 = vld [vmem:[%s139 + $0x28] sm:$0xff]
      %v153 = vld [vmem:[%s139 + $0x30] sm:$0xff]
      %v154 = vld [vmem:[%s139 + $0x38] sm:$0xff]
      %v155 = vld [vmem:[%s139 + $0x40] sm:$0xff]
      %v156 = vld [vmem:[%s139 + $0x48] sm:$0xff]
      %v157 = vld [vmem:[%s139 + $0x50] sm:$0xff]
      %v158 = vld [vmem:[%s139 + $0x58] sm:$0xff]
      %v159 = vld [vmem:[%s139 + $0x60] sm:$0xff]
      %v160 = vld [vmem:[%s139 + $0x68] sm:$0xff]
      %v161 = vld [vmem:[%s139 + $0x70] sm:$0xff]
      %v162 = vld [vmem:[%s139 + $0x78] sm:$0xff]
      %v163 = vld [vmem:[%s139 + $0x80] sm:$0xff]
      %v164 = vld [vmem:[%s139 + $0x88] sm:$0xff]
      %v165 = vld [vmem:[%s139 + $0x90] sm:$0xff]
      %v166 = vld [vmem:[%s139 + $0x98] sm:$0xff]
      %v167 = vld [vmem:[%s139 + $0xa0] sm:$0xff]
      %v168 = vld [vmem:[%s139 + $0xa8] sm:$0xff]
      %v169 = vld [vmem:[%s139 + $0xb0] sm:$0xff]
      %v170 = vld [vmem:[%s139 + $0xb8] sm:$0xff]
      %v171 = vld [vmem:[%s139 + $0xc0] sm:$0xff]
      %v172 = vld [vmem:[%s139 + $0xc8] sm:$0xff]
      %v173 = vld [vmem:[%s139 + $0xd0] sm:$0xff]
      %v174 = vld [vmem:[%s139 + $0xd8] sm:$0xff]
      %v175 = vld [vmem:[%s139 + $0xe0] sm:$0xff]
      %v176 = vld [vmem:[%s139 + $0xe8] sm:$0xff]
      %v177 = vld [vmem:[%s139 + $0xf0] sm:$0xff]
      %v178 = vld [vmem:[%s139 + $0xf8] sm:$0xff]
      %v179 = vld [vmem:[%s1] sm:$0xff]
      %v180 = vld [vmem:[%s1 + $0x8] sm:$0xff]
      %v181 = vld [vmem:[%s1 + $0x10] sm:$0x1]
      %v182 = vlaneseq
      %v183 = vshrl.u32 %v182, 7
      %v184 = vsub.s32 0, %v183
      %v185 = vrot.slane %v181, %v184
      %vm186 = vcmask 130048
      %v188 = vsel %vm186, %v147, 0
      %v191 = vsel %vm186, %v148, 0
      %v194 = vsel %vm186, %v149, 0
      %v197 = vsel %vm186, %v150, 0
      %v200 = vsel %vm186, %v151, 0
      %v203 = vsel %vm186, %v152, 0
      %v206 = vsel %vm186, %v153, 0
      %v209 = vsel %vm186, %v154, 0
      %v212 = vsel %vm186, %v155, 0
      %v215 = vsel %vm186, %v156, 0
      %v218 = vsel %vm186, %v157, 0
      %v221 = vsel %vm186, %v158, 0
      %v224 = vsel %vm186, %v159, 0
      %v227 = vsel %vm186, %v160, 0
      %v230 = vsel %vm186, %v161, 0
      %v233 = vsel %vm186, %v162, 0
      %v236 = vsel %vm186, %v163, 0
      %v239 = vsel %vm186, %v164, 0
      %v242 = vsel %vm186, %v165, 0
      %v245 = vsel %vm186, %v166, 0
      %v248 = vsel %vm186, %v167, 0
      %v251 = vsel %vm186, %v168, 0
      %v254 = vsel %vm186, %v169, 0
      %v257 = vsel %vm186, %v170, 0
      %v260 = vsel %vm186, %v171, 0
      %v263 = vsel %vm186, %v172, 0
      %v266 = vsel %vm186, %v173, 0
      %v269 = vsel %vm186, %v174, 0
      %v272 = vsel %vm186, %v175, 0
      %v275 = vsel %vm186, %v176, 0
      %v278 = vsel %vm186, %v177, 0
      %v281 = vsel %vm186, %v178, 0
      %283 = vmatprep.subr.mxu0 0.0
      %284 = vmatpush1.msra.mxu0 0.0
      %285 = vmatprep.subr.mxu0 0.0
      %286 = vmatpush1.msra.mxu0 0.0
      %287 = vmatprep.subr.mxu0 0.0
      %288 = vmatpush1.msra.mxu0 0.0
      %289 = vmatprep.subr.mxu0 0.0
      %290 = vmatpush1.msra.mxu0 0.0
      %291 = vmatprep.subr.mxu0 0.0
      %292 = vmatpush1.msra.mxu0 0.0
      %293 = vmatprep.subr.mxu0 0.0
      %294 = vmatpush1.msra.mxu0 0.0
      %295 = vmatprep.subr.mxu0 0.0
      %296 = vmatpush1.msra.mxu0 0.0
      %297 = vmatprep.subr.mxu0 0.0
      %298 = vmatpush1.msra.mxu0 0.0
      %299 = vmatprep.subr.mxu0 0.0
      %300 = vmatpush1.msra.mxu0 0.0
      %301 = vmatprep.subr.mxu0 0.0
      %302 = vmatpush1.msra.mxu0 0.0
      %303 = vmatprep.subr.mxu0 0.0
      %304 = vmatpush1.msra.mxu0 0.0
      %305 = vmatprep.subr.mxu0 0.0
      %306 = vmatpush1.msra.mxu0 0.0
      %307 = vmatprep.subr.mxu0 0.0
      %308 = vmatpush1.msra.mxu0 0.0
      %309 = vmatprep.subr.mxu0 0.0
      %310 = vmatpush1.msra.mxu0 0.0
      %311 = vmatprep.subr.mxu0 0.0
      %312 = vmatpush1.msra.mxu0 %v180
      %313 = vmatprep.subr.mxu0 0.0
      %314 = vmatpush1.msra.mxu0 %v179
      %315 = vmatprep.subr.mxu0 0.0
      %316 = vmatpush2.msra.mxu0 0.0
      %317 = vmatprep.subr.mxu0 0.0
      %318 = vmatpush2.msra.mxu0 0.0
      %319 = vmatprep.subr.mxu0 0.0
      %320 = vmatpush2.msra.mxu0 0.0
      %321 = vmatprep.subr.mxu0 0.0
      %322 = vmatpush2.msra.mxu0 0.0
      %323 = vmatprep.subr.mxu0 0.0
      %324 = vmatpush2.msra.mxu0 0.0
      %325 = vmatprep.subr.mxu0 0.0
      %326 = vmatpush2.msra.mxu0 0.0
      %327 = vmatprep.subr.mxu0 0.0
      %328 = vmatpush2.msra.mxu0 0.0
      %329 = vmatprep.subr.mxu0 0.0
      %330 = vmatpush2.msra.mxu0 0.0
      %331 = vmatprep.subr.mxu0 0.0
      %332 = vmatpush2.msra.mxu0 0.0
      %333 = vmatprep.subr.mxu0 0.0
      %334 = vmatpush2.msra.mxu0 0.0
      %335 = vmatprep.subr.mxu0 0.0
      %336 = vmatpush2.msra.mxu0 0.0
      %337 = vmatprep.subr.mxu0 0.0
      %338 = vmatpush2.msra.mxu0 0.0
      %339 = vmatprep.subr.mxu0 0.0
      %340 = vmatpush2.msra.mxu0 0.0
      %341 = vmatprep.subr.mxu0 0.0
      %342 = vmatpush2.msra.mxu0 0.0
      %343 = vmatprep.subr.mxu0 0.0
      %344 = vmatpush2.msra.mxu0 0.0
      %345 = vmatprep.subr.mxu0 0.0
      %346 = vmatpush2.msra.mxu0 0.0
      %347 = vmatprep.mubr.f32.mxu0 0.0
      %348 = vmatmul.mubr.f32.gmra.mxu0 %v188
      %v349 = vpop.f32.mrf.mxu0
      %v350 = vadd.f32 %v185, %v349
      %v351 = vpop.f32.mrf.mxu0
      %352 = vmatprep.mubr.f32.mxu0 0.0
      %353 = vmatmul.mubr.f32.gmra.mxu0 %v191
      %v354 = vpop.f32.mrf.mxu0
      %v355 = vadd.f32 %v185, %v354
      %v356 = vpop.f32.mrf.mxu0
      %357 = vmatprep.mubr.f32.mxu0 0.0
      %358 = vmatmul.mubr.f32.gmra.mxu0 %v194
      %v359 = vpop.f32.mrf.mxu0
      %v360 = vadd.f32 %v185, %v359
      %v361 = vpop.f32.mrf.mxu0
      %362 = vmatprep.mubr.f32.mxu0 0.0
      %363 = vmatmul.mubr.f32.gmra.mxu0 %v197
      %v364 = vpop.f32.mrf.mxu0
      %v365 = vadd.f32 %v185, %v364
      %v366 = vpop.f32.mrf.mxu0
      %367 = vmatprep.mubr.f32.mxu0 0.0
      %368 = vmatmul.mubr.f32.gmra.mxu0 %v200
      %v369 = vpop.f32.mrf.mxu0
      %v370 = vadd.f32 %v185, %v369
      %v371 = vpop.f32.mrf.mxu0
      %372 = vmatprep.mubr.f32.mxu0 0.0
      %373 = vmatmul.mubr.f32.gmra.mxu0 %v203
      %v374 = vpop.f32.mrf.mxu0
      %v375 = vadd.f32 %v185, %v374
      %v376 = vpop.f32.mrf.mxu0
      %377 = vmatprep.mubr.f32.mxu0 0.0
      %378 = vmatmul.mubr.f32.gmra.mxu0 %v206
      %v379 = vpop.f32.mrf.mxu0
      %v380 = vadd.f32 %v185, %v379
      %v381 = vpop.f32.mrf.mxu0
      %382 = vmatprep.mubr.f32.mxu0 0.0
      %383 = vmatmul.mubr.f32.gmra.mxu0 %v209
      %v384 = vpop.f32.mrf.mxu0
      %v385 = vadd.f32 %v185, %v384
      %v386 = vpop.f32.mrf.mxu0
      %387 = vmatprep.mubr.f32.mxu0 0.0
      %388 = vmatmul.mubr.f32.gmra.mxu0 %v212
      %v389 = vpop.f32.mrf.mxu0
      %v390 = vadd.f32 %v185, %v389
      %v391 = vpop.f32.mrf.mxu0
      %392 = vmatprep.mubr.f32.mxu0 0.0
      %393 = vmatmul.mubr.f32.gmra.mxu0 %v215
      %v394 = vpop.f32.mrf.mxu0
      %v395 = vadd.f32 %v185, %v394
      %v396 = vpop.f32.mrf.mxu0
      %397 = vmatprep.mubr.f32.mxu0 0.0
      %398 = vmatmul.mubr.f32.gmra.mxu0 %v218
      %v399 = vpop.f32.mrf.mxu0
      %v400 = vadd.f32 %v185, %v399
      %v401 = vpop.f32.mrf.mxu0
      %402 = vmatprep.mubr.f32.mxu0 0.0
      %403 = vmatmul.mubr.f32.gmra.mxu0 %v221
      %v404 = vpop.f32.mrf.mxu0
      %v405 = vadd.f32 %v185, %v404
      %v406 = vpop.f32.mrf.mxu0
      %407 = vmatprep.mubr.f32.mxu0 0.0
      %408 = vmatmul.mubr.f32.gmra.mxu0 %v224
      %v409 = vpop.f32.mrf.mxu0
      %v410 = vadd.f32 %v185, %v409
      %v411 = vpop.f32.mrf.mxu0
      %412 = vmatprep.mubr.f32.mxu0 0.0
      %413 = vmatmul.mubr.f32.gmra.mxu0 %v227
      %v414 = vpop.f32.mrf.mxu0
      %v415 = vadd.f32 %v185, %v414
      %v416 = vpop.f32.mrf.mxu0
      %417 = vmatprep.mubr.f32.mxu0 0.0
      %418 = vmatmul.mubr.f32.gmra.mxu0 %v230
      %v419 = vpop.f32.mrf.mxu0
      %v420 = vadd.f32 %v185, %v419
      %v421 = vpop.f32.mrf.mxu0
      %422 = vmatprep.mubr.f32.mxu0 0.0
      %423 = vmatmul.mubr.f32.gmra.mxu0 %v233
      %v424 = vpop.f32.mrf.mxu0
      %v425 = vadd.f32 %v185, %v424
      %v426 = vpop.f32.mrf.mxu0
      %427 = vmatprep.mubr.f32.mxu0 0.0
      %428 = vmatmul.mubr.f32.gmra.mxu0 %v236
      %v429 = vpop.f32.mrf.mxu0
      %v430 = vadd.f32 %v185, %v429
      %v431 = vpop.f32.mrf.mxu0
      %432 = vmatprep.mubr.f32.mxu0 0.0
      %433 = vmatmul.mubr.f32.gmra.mxu0 %v239
      %v434 = vpop.f32.mrf.mxu0
      %v435 = vadd.f32 %v185, %v434
      %v436 = vpop.f32.mrf.mxu0
      %437 = vmatprep.mubr.f32.mxu0 0.0
      %438 = vmatmul.mubr.f32.gmra.mxu0 %v242
      %v439 = vpop.f32.mrf.mxu0
      %v440 = vadd.f32 %v185, %v439
      %v441 = vpop.f32.mrf.mxu0
      %442 = vmatprep.mubr.f32.mxu0 0.0
      %443 = vmatmul.mubr.f32.gmra.mxu0 %v245
      %v444 = vpop.f32.mrf.mxu0
      %v445 = vadd.f32 %v185, %v444
      %v446 = vpop.f32.mrf.mxu0
      %447 = vmatprep.mubr.f32.mxu0 0.0
      %448 = vmatmul.mubr.f32.gmra.mxu0 %v248
      %v449 = vpop.f32.mrf.mxu0
      %v450 = vadd.f32 %v185, %v449
      %v451 = vpop.f32.mrf.mxu0
      %452 = vmatprep.mubr.f32.mxu0 0.0
      %453 = vmatmul.mubr.f32.gmra.mxu0 %v251
      %v454 = vpop.f32.mrf.mxu0
      %v455 = vadd.f32 %v185, %v454
      %v456 = vpop.f32.mrf.mxu0
      %457 = vmatprep.mubr.f32.mxu0 0.0
      %458 = vmatmul.mubr.f32.gmra.mxu0 %v254
      %v459 = vpop.f32.mrf.mxu0
      %v460 = vadd.f32 %v185, %v459
      %v461 = vpop.f32.mrf.mxu0
      %462 = vmatprep.mubr.f32.mxu0 0.0
      %463 = vmatmul.mubr.f32.gmra.mxu0 %v257
      %v464 = vpop.f32.mrf.mxu0
      %v465 = vadd.f32 %v185, %v464
      %v466 = vpop.f32.mrf.mxu0
      %467 = vmatprep.mubr.f32.mxu0 0.0
      %468 = vmatmul.mubr.f32.gmra.mxu0 %v260
      %v469 = vpop.f32.mrf.mxu0
      %v470 = vadd.f32 %v185, %v469
      %v471 = vpop.f32.mrf.mxu0
      %472 = vmatprep.mubr.f32.mxu0 0.0
      %473 = vmatmul.mubr.f32.gmra.mxu0 %v263
      %v474 = vpop.f32.mrf.mxu0
      %v475 = vadd.f32 %v185, %v474
      %v476 = vpop.f32.mrf.mxu0
      %477 = vmatprep.mubr.f32.mxu0 0.0
      %478 = vmatmul.mubr.f32.gmra.mxu0 %v266
      %v479 = vpop.f32.mrf.mxu0
      %v480 = vadd.f32 %v185, %v479
      %v481 = vpop.f32.mrf.mxu0
      %482 = vmatprep.mubr.f32.mxu0 0.0
      %483 = vmatmul.mubr.f32.gmra.mxu0 %v269
      %v484 = vpop.f32.mrf.mxu0
      %v485 = vadd.f32 %v185, %v484
      %v486 = vpop.f32.mrf.mxu0
      %487 = vmatprep.mubr.f32.mxu0 0.0
      %488 = vmatmul.mubr.f32.gmra.mxu0 %v272
      %v489 = vpop.f32.mrf.mxu0
      %v490 = vadd.f32 %v185, %v489
      %v491 = vpop.f32.mrf.mxu0
      %492 = vmatprep.mubr.f32.mxu0 0.0
      %493 = vmatmul.mubr.f32.gmra.mxu0 %v275
      %v494 = vpop.f32.mrf.mxu0
      %v495 = vadd.f32 %v185, %v494
      %v496 = vpop.f32.mrf.mxu0
      %497 = vmatprep.mubr.f32.mxu0 0.0
      %498 = vmatmul.mubr.f32.gmra.mxu0 %v278
      %v499 = vpop.f32.mrf.mxu0
      %v500 = vadd.f32 %v185, %v499
      %v501 = vpop.f32.mrf.mxu0
      %502 = vmatprep.mubr.f32.mxu0 0.0
      %503 = vmatmul.mubr.f32.gmra.mxu0 %v281
      %v504 = vpop.f32.mrf.mxu0
      %v505 = vadd.f32 %v185, %v504
      %v506 = vpop.f32.mrf.mxu0
      %507 = vdwg.mxu0
      %v508 = vmax.f32 %v350, 0.0
      %v509 = vmax.f32 %v355, 0.0
      %v510 = vmax.f32 %v360, 0.0
      %v511 = vmax.f32 %v365, 0.0
      %v512 = vmax.f32 %v370, 0.0
      %v513 = vmax.f32 %v375, 0.0
      %v514 = vmax.f32 %v380, 0.0
      %v515 = vmax.f32 %v385, 0.0
      %v516 = vmax.f32 %v390, 0.0
      %v517 = vmax.f32 %v395, 0.0
      %v518 = vmax.f32 %v400, 0.0
      %v519 = vmax.f32 %v405, 0.0
      %v520 = vmax.f32 %v410, 0.0
      %v521 = vmax.f32 %v415, 0.0
      %v522 = vmax.f32 %v420, 0.0
      %v523 = vmax.f32 %v425, 0.0
      %v524 = vmax.f32 %v430, 0.0
      %v525 = vmax.f32 %v435, 0.0
      %v526 = vmax.f32 %v440, 0.0
      %v527 = vmax.f32 %v445, 0.0
      %v528 = vmax.f32 %v450, 0.0
      %v529 = vmax.f32 %v455, 0.0
      %v530 = vmax.f32 %v460, 0.0
      %v531 = vmax.f32 %v465, 0.0
      %v532 = vmax.f32 %v470, 0.0
      %v533 = vmax.f32 %v475, 0.0
      %v534 = vmax.f32 %v480, 0.0
      %v535 = vmax.f32 %v485, 0.0
      %v536 = vmax.f32 %v490, 0.0
      %v537 = vmax.f32 %v495, 0.0
      %v538 = vmax.f32 %v500, 0.0
      %v539 = vmax.f32 %v505, 0.0
      %v540 = vld [vmem:[%s1 + $0x18] sm:$0xff]
      %v541 = vld [vmem:[%s1 + $0x20] sm:$0xff]
      %v542 = vld [vmem:[%s1 + $0x28] sm:$0xff]
      %v543 = vld [vmem:[%s1 + $0x30] sm:$0xff]
      %v544 = vld [vmem:[%s1 + $0x38] sm:$0x1]
      %v545 = vlaneseq
      %v546 = vshrl.u32 %v545, 7
      %v547 = vsub.s32 0, %v546
      %v548 = vrot.slane %v544, %v547
      %vm549 = vcmask 261120
      %v551 = vsel %vm549, %v508, 0
      %v554 = vsel %vm549, %v509, 0
      %v557 = vsel %vm549, %v510, 0
      %v560 = vsel %vm549, %v511, 0
      %v563 = vsel %vm549, %v512, 0
      %v566 = vsel %vm549, %v513, 0
      %v569 = vsel %vm549, %v514, 0
      %v572 = vsel %vm549, %v515, 0
      %v575 = vsel %vm549, %v516, 0
      %v578 = vsel %vm549, %v517, 0
      %v581 = vsel %vm549, %v518, 0
      %v584 = vsel %vm549, %v519, 0
      %v587 = vsel %vm549, %v520, 0
      %v590 = vsel %vm549, %v521, 0
      %v593 = vsel %vm549, %v522, 0
      %v596 = vsel %vm549, %v523, 0
      %v599 = vsel %vm549, %v524, 0
      %v602 = vsel %vm549, %v525, 0
      %v605 = vsel %vm549, %v526, 0
      %v608 = vsel %vm549, %v527, 0
      %v611 = vsel %vm549, %v528, 0
      %v614 = vsel %vm549, %v529, 0
      %v617 = vsel %vm549, %v530, 0
      %v620 = vsel %vm549, %v531, 0
      %v623 = vsel %vm549, %v532, 0
      %v626 = vsel %vm549, %v533, 0
      %v629 = vsel %vm549, %v534, 0
      %v632 = vsel %vm549, %v535, 0
      %v635 = vsel %vm549, %v536, 0
      %v638 = vsel %vm549, %v537, 0
      %v641 = vsel %vm549, %v538, 0
      %v644 = vsel %vm549, %v539, 0
      %646 = vmatprep.subr.mxu0 0.0
      %647 = vmatpush1.msra.mxu0 0.0
      %648 = vmatprep.subr.mxu0 0.0
      %649 = vmatpush1.msra.mxu0 0.0
      %650 = vmatprep.subr.mxu0 0.0
      %651 = vmatpush1.msra.mxu0 0.0
      %652 = vmatprep.subr.mxu0 0.0
      %653 = vmatpush1.msra.mxu0 0.0
      %654 = vmatprep.subr.mxu0 0.0
      %655 = vmatpush1.msra.mxu0 0.0
      %656 = vmatprep.subr.mxu0 0.0
      %657 = vmatpush1.msra.mxu0 0.0
      %658 = vmatprep.subr.mxu0 0.0
      %659 = vmatpush1.msra.mxu0 0.0
      %660 = vmatprep.subr.mxu0 0.0
      %661 = vmatpush1.msra.mxu0 0.0
      %662 = vmatprep.subr.mxu0 0.0
      %663 = vmatpush1.msra.mxu0 0.0
      %664 = vmatprep.subr.mxu0 0.0
      %665 = vmatpush1.msra.mxu0 0.0
      %666 = vmatprep.subr.mxu0 0.0
      %667 = vmatpush1.msra.mxu0 0.0
      %668 = vmatprep.subr.mxu0 0.0
      %669 = vmatpush1.msra.mxu0 0.0
      %670 = vmatprep.subr.mxu0 0.0
      %671 = vmatpush1.msra.mxu0 %v543
      %672 = vmatprep.subr.mxu0 0.0
      %673 = vmatpush1.msra.mxu0 %v542
      %674 = vmatprep.subr.mxu0 0.0
      %675 = vmatpush1.msra.mxu0 %v541
      %676 = vmatprep.subr.mxu0 0.0
      %677 = vmatpush1.msra.mxu0 %v540
      %678 = vmatprep.subr.mxu0 0.0
      %679 = vmatpush2.msra.mxu0 0.0
      %680 = vmatprep.subr.mxu0 0.0
      %681 = vmatpush2.msra.mxu0 0.0
      %682 = vmatprep.subr.mxu0 0.0
      %683 = vmatpush2.msra.mxu0 0.0
      %684 = vmatprep.subr.mxu0 0.0
      %685 = vmatpush2.msra.mxu0 0.0
      %686 = vmatprep.subr.mxu0 0.0
      %687 = vmatpush2.msra.mxu0 0.0
      %688 = vmatprep.subr.mxu0 0.0
      %689 = vmatpush2.msra.mxu0 0.0
      %690 = vmatprep.subr.mxu0 0.0
      %691 = vmatpush2.msra.mxu0 0.0
      %692 = vmatprep.subr.mxu0 0.0
      %693 = vmatpush2.msra.mxu0 0.0
      %694 = vmatprep.subr.mxu0 0.0
      %695 = vmatpush2.msra.mxu0 0.0
      %696 = vmatprep.subr.mxu0 0.0
      %697 = vmatpush2.msra.mxu0 0.0
      %698 = vmatprep.subr.mxu0 0.0
      %699 = vmatpush2.msra.mxu0 0.0
      %700 = vmatprep.subr.mxu0 0.0
      %701 = vmatpush2.msra.mxu0 0.0
      %702 = vmatprep.subr.mxu0 0.0
      %703 = vmatpush2.msra.mxu0 0.0
      %704 = vmatprep.subr.mxu0 0.0
      %705 = vmatpush2.msra.mxu0 0.0
      %706 = vmatprep.subr.mxu0 0.0
      %707 = vmatpush2.msra.mxu0 0.0
      %708 = vmatprep.subr.mxu0 0.0
      %709 = vmatpush2.msra.mxu0 0.0
      %710 = vmatprep.mubr.f32.mxu0 0.0
      %711 = vmatmul.mubr.f32.gmra.mxu0 %v551
      %v712 = vpop.f32.mrf.mxu0
      %v713 = vadd.f32 %v548, %v712
      %v714 = vpop.f32.mrf.mxu0
      %715 = vmatprep.mubr.f32.mxu0 0.0
      %716 = vmatmul.mubr.f32.gmra.mxu0 %v554
      %v717 = vpop.f32.mrf.mxu0
      %v718 = vadd.f32 %v548, %v717
      %v719 = vpop.f32.mrf.mxu0
      %720 = vmatprep.mubr.f32.mxu0 0.0
      %721 = vmatmul.mubr.f32.gmra.mxu0 %v557
      %v722 = vpop.f32.mrf.mxu0
      %v723 = vadd.f32 %v548, %v722
      %v724 = vpop.f32.mrf.mxu0
      %725 = vmatprep.mubr.f32.mxu0 0.0
      %726 = vmatmul.mubr.f32.gmra.mxu0 %v560
      %v727 = vpop.f32.mrf.mxu0
      %v728 = vadd.f32 %v548, %v727
      %v729 = vpop.f32.mrf.mxu0
      %730 = vmatprep.mubr.f32.mxu0 0.0
      %731 = vmatmul.mubr.f32.gmra.mxu0 %v563
      %v732 = vpop.f32.mrf.mxu0
      %v733 = vadd.f32 %v548, %v732
      %v734 = vpop.f32.mrf.mxu0
      %735 = vmatprep.mubr.f32.mxu0 0.0
      %736 = vmatmul.mubr.f32.gmra.mxu0 %v566
      %v737 = vpop.f32.mrf.mxu0
      %v738 = vadd.f32 %v548, %v737
      %v739 = vpop.f32.mrf.mxu0
      %740 = vmatprep.mubr.f32.mxu0 0.0
      %741 = vmatmul.mubr.f32.gmra.mxu0 %v569
      %v742 = vpop.f32.mrf.mxu0
      %v743 = vadd.f32 %v548, %v742
      %v744 = vpop.f32.mrf.mxu0
      %745 = vmatprep.mubr.f32.mxu0 0.0
      %746 = vmatmul.mubr.f32.gmra.mxu0 %v572
      %v747 = vpop.f32.mrf.mxu0
      %v748 = vadd.f32 %v548, %v747
      %v749 = vpop.f32.mrf.mxu0
      %750 = vmatprep.mubr.f32.mxu0 0.0
      %751 = vmatmul.mubr.f32.gmra.mxu0 %v575
      %v752 = vpop.f32.mrf.mxu0
      %v753 = vadd.f32 %v548, %v752
      %v754 = vpop.f32.mrf.mxu0
      %755 = vmatprep.mubr.f32.mxu0 0.0
      %756 = vmatmul.mubr.f32.gmra.mxu0 %v578
      %v757 = vpop.f32.mrf.mxu0
      %v758 = vadd.f32 %v548, %v757
      %v759 = vpop.f32.mrf.mxu0
      %760 = vmatprep.mubr.f32.mxu0 0.0
      %761 = vmatmul.mubr.f32.gmra.mxu0 %v581
      %v762 = vpop.f32.mrf.mxu0
      %v763 = vadd.f32 %v548, %v762
      %v764 = vpop.f32.mrf.mxu0
      %765 = vmatprep.mubr.f32.mxu0 0.0
      %766 = vmatmul.mubr.f32.gmra.mxu0 %v584
      %v767 = vpop.f32.mrf.mxu0
      %v768 = vadd.f32 %v548, %v767
      %v769 = vpop.f32.mrf.mxu0
      %770 = vmatprep.mubr.f32.mxu0 0.0
      %771 = vmatmul.mubr.f32.gmra.mxu0 %v587
      %v772 = vpop.f32.mrf.mxu0
      %v773 = vadd.f32 %v548, %v772
      %v774 = vpop.f32.mrf.mxu0
      %775 = vmatprep.mubr.f32.mxu0 0.0
      %776 = vmatmul.mubr.f32.gmra.mxu0 %v590
      %v777 = vpop.f32.mrf.mxu0
      %v778 = vadd.f32 %v548, %v777
      %v779 = vpop.f32.mrf.mxu0
      %780 = vmatprep.mubr.f32.mxu0 0.0
      %781 = vmatmul.mubr.f32.gmra.mxu0 %v593
      %v782 = vpop.f32.mrf.mxu0
      %v783 = vadd.f32 %v548, %v782
      %v784 = vpop.f32.mrf.mxu0
      %785 = vmatprep.mubr.f32.mxu0 0.0
      %786 = vmatmul.mubr.f32.gmra.mxu0 %v596
      %v787 = vpop.f32.mrf.mxu0
      %v788 = vadd.f32 %v548, %v787
      %v789 = vpop.f32.mrf.mxu0
      %790 = vmatprep.mubr.f32.mxu0 0.0
      %791 = vmatmul.mubr.f32.gmra.mxu0 %v599
      %v792 = vpop.f32.mrf.mxu0
      %v793 = vadd.f32 %v548, %v792
      %v794 = vpop.f32.mrf.mxu0
      %795 = vmatprep.mubr.f32.mxu0 0.0
      %796 = vmatmul.mubr.f32.gmra.mxu0 %v602
      %v797 = vpop.f32.mrf.mxu0
      %v798 = vadd.f32 %v548, %v797
      %v799 = vpop.f32.mrf.mxu0
      %800 = vmatprep.mubr.f32.mxu0 0.0
      %801 = vmatmul.mubr.f32.gmra.mxu0 %v605
      %v802 = vpop.f32.mrf.mxu0
      %v803 = vadd.f32 %v548, %v802
      %v804 = vpop.f32.mrf.mxu0
      %805 = vmatprep.mubr.f32.mxu0 0.0
      %806 = vmatmul.mubr.f32.gmra.mxu0 %v608
      %v807 = vpop.f32.mrf.mxu0
      %v808 = vadd.f32 %v548, %v807
      %v809 = vpop.f32.mrf.mxu0
      %810 = vmatprep.mubr.f32.mxu0 0.0
      %811 = vmatmul.mubr.f32.gmra.mxu0 %v611
      %v812 = vpop.f32.mrf.mxu0
      %v813 = vadd.f32 %v548, %v812
      %v814 = vpop.f32.mrf.mxu0
      %815 = vmatprep.mubr.f32.mxu0 0.0
      %816 = vmatmul.mubr.f32.gmra.mxu0 %v614
      %v817 = vpop.f32.mrf.mxu0
      %v818 = vadd.f32 %v548, %v817
      %v819 = vpop.f32.mrf.mxu0
      %820 = vmatprep.mubr.f32.mxu0 0.0
      %821 = vmatmul.mubr.f32.gmra.mxu0 %v617
      %v822 = vpop.f32.mrf.mxu0
      %v823 = vadd.f32 %v548, %v822
      %v824 = vpop.f32.mrf.mxu0
      %825 = vmatprep.mubr.f32.mxu0 0.0
      %826 = vmatmul.mubr.f32.gmra.mxu0 %v620
      %v827 = vpop.f32.mrf.mxu0
      %v828 = vadd.f32 %v548, %v827
      %v829 = vpop.f32.mrf.mxu0
      %830 = vmatprep.mubr.f32.mxu0 0.0
      %831 = vmatmul.mubr.f32.gmra.mxu0 %v623
      %v832 = vpop.f32.mrf.mxu0
      %v833 = vadd.f32 %v548, %v832
      %v834 = vpop.f32.mrf.mxu0
      %835 = vmatprep.mubr.f32.mxu0 0.0
      %836 = vmatmul.mubr.f32.gmra.mxu0 %v626
      %v837 = vpop.f32.mrf.mxu0
      %v838 = vadd.f32 %v548, %v837
      %v839 = vpop.f32.mrf.mxu0
      %840 = vmatprep.mubr.f32.mxu0 0.0
      %841 = vmatmul.mubr.f32.gmra.mxu0 %v629
      %v842 = vpop.f32.mrf.mxu0
      %v843 = vadd.f32 %v548, %v842
      %v844 = vpop.f32.mrf.mxu0
      %845 = vmatprep.mubr.f32.mxu0 0.0
      %846 = vmatmul.mubr.f32.gmra.mxu0 %v632
      %v847 = vpop.f32.mrf.mxu0
      %v848 = vadd.f32 %v548, %v847
      %v849 = vpop.f32.mrf.mxu0
      %850 = vmatprep.mubr.f32.mxu0 0.0
      %851 = vmatmul.mubr.f32.gmra.mxu0 %v635
      %v852 = vpop.f32.mrf.mxu0
      %v853 = vadd.f32 %v548, %v852
      %v854 = vpop.f32.mrf.mxu0
      %855 = vmatprep.mubr.f32.mxu0 0.0
      %856 = vmatmul.mubr.f32.gmra.mxu0 %v638
      %v857 = vpop.f32.mrf.mxu0
      %v858 = vadd.f32 %v548, %v857
      %v859 = vpop.f32.mrf.mxu0
      %860 = vmatprep.mubr.f32.mxu0 0.0
      %861 = vmatmul.mubr.f32.gmra.mxu0 %v641
      %v862 = vpop.f32.mrf.mxu0
      %v863 = vadd.f32 %v548, %v862
      %v864 = vpop.f32.mrf.mxu0
      %865 = vmatprep.mubr.f32.mxu0 0.0
      %866 = vmatmul.mubr.f32.gmra.mxu0 %v644
      %v867 = vpop.f32.mrf.mxu0
      %v868 = vadd.f32 %v548, %v867
      %v869 = vpop.f32.mrf.mxu0
      %870 = vdwg.mxu0
      %v871 = vld [vmem:[%s1 + $0x40] sm:$0xff]
      %v872 = vld [vmem:[%s1 + $0x48] sm:$0xff]
      %v873 = vld [vmem:[%s1 + $0x50] sm:$0xff]
      %v874 = vld [vmem:[%s1 + $0x58] sm:$0xff]
      %v876 = vsel %vm186, %v713, 0
      %v879 = vsel %vm186, %v718, 0
      %v882 = vsel %vm186, %v723, 0
      %v885 = vsel %vm186, %v728, 0
      %v888 = vsel %vm186, %v733, 0
      %v891 = vsel %vm186, %v738, 0
      %v894 = vsel %vm186, %v743, 0
      %v897 = vsel %vm186, %v748, 0
      %v900 = vsel %vm186, %v753, 0
      %v903 = vsel %vm186, %v758, 0
      %v906 = vsel %vm186, %v763, 0
      %v909 = vsel %vm186, %v768, 0
      %v912 = vsel %vm186, %v773, 0
      %v915 = vsel %vm186, %v778, 0
      %v918 = vsel %vm186, %v783, 0
      %v921 = vsel %vm186, %v788, 0
      %v924 = vsel %vm186, %v793, 0
      %v927 = vsel %vm186, %v798, 0
      %v930 = vsel %vm186, %v803, 0
      %v933 = vsel %vm186, %v808, 0
      %v936 = vsel %vm186, %v813, 0
      %v939 = vsel %vm186, %v818, 0
      %v942 = vsel %vm186, %v823, 0
      %v945 = vsel %vm186, %v828, 0
      %v948 = vsel %vm186, %v833, 0
      %v951 = vsel %vm186, %v838, 0
      %v954 = vsel %vm186, %v843, 0
      %v957 = vsel %vm186, %v848, 0
      %v960 = vsel %vm186, %v853, 0
      %v963 = vsel %vm186, %v858, 0
      %v966 = vsel %vm186, %v863, 0
      %v969 = vsel %vm186, %v868, 0
      %971 = vmatprep.subr.mxu0 0.0
      %972 = vmatpush1.msra.mxu0 0.0
      %973 = vmatprep.subr.mxu0 0.0
      %974 = vmatpush1.msra.mxu0 0.0
      %975 = vmatprep.subr.mxu0 0.0
      %976 = vmatpush1.msra.mxu0 0.0
      %977 = vmatprep.subr.mxu0 0.0
      %978 = vmatpush1.msra.mxu0 0.0
      %979 = vmatprep.subr.mxu0 0.0
      %980 = vmatpush1.msra.mxu0 0.0
      %981 = vmatprep.subr.mxu0 0.0
      %982 = vmatpush1.msra.mxu0 0.0
      %983 = vmatprep.subr.mxu0 0.0
      %984 = vmatpush1.msra.mxu0 0.0
      %985 = vmatprep.subr.mxu0 0.0
      %986 = vmatpush1.msra.mxu0 0.0
      %987 = vmatprep.subr.mxu0 0.0
      %988 = vmatpush1.msra.mxu0 0.0
      %989 = vmatprep.subr.mxu0 0.0
      %990 = vmatpush1.msra.mxu0 0.0
      %991 = vmatprep.subr.mxu0 0.0
      %992 = vmatpush1.msra.mxu0 0.0
      %993 = vmatprep.subr.mxu0 0.0
      %994 = vmatpush1.msra.mxu0 0.0
      %995 = vmatprep.subr.mxu0 0.0
      %996 = vmatpush1.msra.mxu0 0.0
      %997 = vmatprep.subr.mxu0 0.0
      %998 = vmatpush1.msra.mxu0 0.0
      %999 = vmatprep.subr.mxu0 0.0
      %1000 = vmatpush1.msra.mxu0 %v874
      %1001 = vmatprep.subr.mxu0 0.0
      %1002 = vmatpush1.msra.mxu0 %v873
      %1003 = vmatprep.subr.mxu0 0.0
      %1004 = vmatpush2.msra.mxu0 0.0
      %1005 = vmatprep.subr.mxu0 0.0
      %1006 = vmatpush2.msra.mxu0 0.0
      %1007 = vmatprep.subr.mxu0 0.0
      %1008 = vmatpush2.msra.mxu0 0.0
      %1009 = vmatprep.subr.mxu0 0.0
      %1010 = vmatpush2.msra.mxu0 0.0
      %1011 = vmatprep.subr.mxu0 0.0
      %1012 = vmatpush2.msra.mxu0 0.0
      %1013 = vmatprep.subr.mxu0 0.0
      %1014 = vmatpush2.msra.mxu0 0.0
      %1015 = vmatprep.subr.mxu0 0.0
      %1016 = vmatpush2.msra.mxu0 0.0
      %1017 = vmatprep.subr.mxu0 0.0
      %1018 = vmatpush2.msra.mxu0 0.0
      %1019 = vmatprep.subr.mxu0 0.0
      %1020 = vmatpush2.msra.mxu0 0.0
      %1021 = vmatprep.subr.mxu0 0.0
      %1022 = vmatpush2.msra.mxu0 0.0
      %1023 = vmatprep.subr.mxu0 0.0
      %1024 = vmatpush2.msra.mxu0 0.0
      %1025 = vmatprep.subr.mxu0 0.0
      %1026 = vmatpush2.msra.mxu0 0.0
      %1027 = vmatprep.subr.mxu0 0.0
      %1028 = vmatpush2.msra.mxu0 0.0
      %1029 = vmatprep.subr.mxu0 0.0
      %1030 = vmatpush2.msra.mxu0 0.0
      %1031 = vmatprep.subr.mxu0 0.0
      %1032 = vmatpush2.msra.mxu0 0.0
      %1033 = vmatprep.subr.mxu0 0.0
      %1034 = vmatpush2.msra.mxu0 0.0
      %1035 = vmatprep.mubr.f32.mxu0 0.0
      %1036 = vmatmul.mubr.f32.gmra.mxu0 %v876
      %v1037 = vpop.f32.mrf.mxu0
      %v1038 = vadd.f32 0.0, %v1037
      %v1039 = vpop.f32.mrf.mxu0
      %1040 = vmatprep.mubr.f32.mxu0 0.0
      %1041 = vmatmul.mubr.f32.gmra.mxu0 %v879
      %v1042 = vpop.f32.mrf.mxu0
      %v1043 = vadd.f32 0.0, %v1042
      %v1044 = vpop.f32.mrf.mxu0
      %1045 = vmatprep.mubr.f32.mxu0 0.0
      %1046 = vmatmul.mubr.f32.gmra.mxu0 %v882
      %v1047 = vpop.f32.mrf.mxu0
      %v1048 = vadd.f32 0.0, %v1047
      %v1049 = vpop.f32.mrf.mxu0
      %1050 = vmatprep.mubr.f32.mxu0 0.0
      %1051 = vmatmul.mubr.f32.gmra.mxu0 %v885
      %v1052 = vpop.f32.mrf.mxu0
      %v1053 = vadd.f32 0.0, %v1052
      %v1054 = vpop.f32.mrf.mxu0
      %1055 = vmatprep.mubr.f32.mxu0 0.0
      %1056 = vmatmul.mubr.f32.gmra.mxu0 %v888
      %v1057 = vpop.f32.mrf.mxu0
      %v1058 = vadd.f32 0.0, %v1057
      %v1059 = vpop.f32.mrf.mxu0
      %1060 = vmatprep.mubr.f32.mxu0 0.0
      %1061 = vmatmul.mubr.f32.gmra.mxu0 %v891
      %v1062 = vpop.f32.mrf.mxu0
      %v1063 = vadd.f32 0.0, %v1062
      %v1064 = vpop.f32.mrf.mxu0
      %1065 = vmatprep.mubr.f32.mxu0 0.0
      %1066 = vmatmul.mubr.f32.gmra.mxu0 %v894
      %v1067 = vpop.f32.mrf.mxu0
      %v1068 = vadd.f32 0.0, %v1067
      %v1069 = vpop.f32.mrf.mxu0
      %1070 = vmatprep.mubr.f32.mxu0 0.0
      %1071 = vmatmul.mubr.f32.gmra.mxu0 %v897
      %v1072 = vpop.f32.mrf.mxu0
      %v1073 = vadd.f32 0.0, %v1072
      %v1074 = vpop.f32.mrf.mxu0
      %1075 = vmatprep.mubr.f32.mxu0 0.0
      %1076 = vmatmul.mubr.f32.gmra.mxu0 %v900
      %v1077 = vpop.f32.mrf.mxu0
      %v1078 = vadd.f32 0.0, %v1077
      %v1079 = vpop.f32.mrf.mxu0
      %1080 = vmatprep.mubr.f32.mxu0 0.0
      %1081 = vmatmul.mubr.f32.gmra.mxu0 %v903
      %v1082 = vpop.f32.mrf.mxu0
      %v1083 = vadd.f32 0.0, %v1082
      %v1084 = vpop.f32.mrf.mxu0
      %1085 = vmatprep.mubr.f32.mxu0 0.0
      %1086 = vmatmul.mubr.f32.gmra.mxu0 %v906
      %v1087 = vpop.f32.mrf.mxu0
      %v1088 = vadd.f32 0.0, %v1087
      %v1089 = vpop.f32.mrf.mxu0
      %1090 = vmatprep.mubr.f32.mxu0 0.0
      %1091 = vmatmul.mubr.f32.gmra.mxu0 %v909
      %v1092 = vpop.f32.mrf.mxu0
      %v1093 = vadd.f32 0.0, %v1092
      %v1094 = vpop.f32.mrf.mxu0
      %1095 = vmatprep.mubr.f32.mxu0 0.0
      %1096 = vmatmul.mubr.f32.gmra.mxu0 %v912
      %v1097 = vpop.f32.mrf.mxu0
      %v1098 = vadd.f32 0.0, %v1097
      %v1099 = vpop.f32.mrf.mxu0
      %1100 = vmatprep.mubr.f32.mxu0 0.0
      %1101 = vmatmul.mubr.f32.gmra.mxu0 %v915
      %v1102 = vpop.f32.mrf.mxu0
      %v1103 = vadd.f32 0.0, %v1102
      %v1104 = vpop.f32.mrf.mxu0
      %1105 = vmatprep.mubr.f32.mxu0 0.0
      %1106 = vmatmul.mubr.f32.gmra.mxu0 %v918
      %v1107 = vpop.f32.mrf.mxu0
      %v1108 = vadd.f32 0.0, %v1107
      %v1109 = vpop.f32.mrf.mxu0
      %1110 = vmatprep.mubr.f32.mxu0 0.0
      %1111 = vmatmul.mubr.f32.gmra.mxu0 %v921
      %v1112 = vpop.f32.mrf.mxu0
      %v1113 = vadd.f32 0.0, %v1112
      %v1114 = vpop.f32.mrf.mxu0
      %1115 = vmatprep.mubr.f32.mxu0 0.0
      %1116 = vmatmul.mubr.f32.gmra.mxu0 %v924
      %v1117 = vpop.f32.mrf.mxu0
      %v1118 = vadd.f32 0.0, %v1117
      %v1119 = vpop.f32.mrf.mxu0
      %1120 = vmatprep.mubr.f32.mxu0 0.0
      %1121 = vmatmul.mubr.f32.gmra.mxu0 %v927
      %v1122 = vpop.f32.mrf.mxu0
      %v1123 = vadd.f32 0.0, %v1122
      %v1124 = vpop.f32.mrf.mxu0
      %1125 = vmatprep.mubr.f32.mxu0 0.0
      %1126 = vmatmul.mubr.f32.gmra.mxu0 %v930
      %v1127 = vpop.f32.mrf.mxu0
      %v1128 = vadd.f32 0.0, %v1127
      %v1129 = vpop.f32.mrf.mxu0
      %1130 = vmatprep.mubr.f32.mxu0 0.0
      %1131 = vmatmul.mubr.f32.gmra.mxu0 %v933
      %v1132 = vpop.f32.mrf.mxu0
      %v1133 = vadd.f32 0.0, %v1132
      %v1134 = vpop.f32.mrf.mxu0
      %1135 = vmatprep.mubr.f32.mxu0 0.0
      %1136 = vmatmul.mubr.f32.gmra.mxu0 %v936
      %v1137 = vpop.f32.mrf.mxu0
      %v1138 = vadd.f32 0.0, %v1137
      %v1139 = vpop.f32.mrf.mxu0
      %1140 = vmatprep.mubr.f32.mxu0 0.0
      %1141 = vmatmul.mubr.f32.gmra.mxu0 %v939
      %v1142 = vpop.f32.mrf.mxu0
      %v1143 = vadd.f32 0.0, %v1142
      %v1144 = vpop.f32.mrf.mxu0
      %1145 = vmatprep.mubr.f32.mxu0 0.0
      %1146 = vmatmul.mubr.f32.gmra.mxu0 %v942
      %v1147 = vpop.f32.mrf.mxu0
      %v1148 = vadd.f32 0.0, %v1147
      %v1149 = vpop.f32.mrf.mxu0
      %1150 = vmatprep.mubr.f32.mxu0 0.0
      %1151 = vmatmul.mubr.f32.gmra.mxu0 %v945
      %v1152 = vpop.f32.mrf.mxu0
      %v1153 = vadd.f32 0.0, %v1152
      %v1154 = vpop.f32.mrf.mxu0
      %1155 = vmatprep.mubr.f32.mxu0 0.0
      %1156 = vmatmul.mubr.f32.gmra.mxu0 %v948
      %v1157 = vpop.f32.mrf.mxu0
      %v1158 = vadd.f32 0.0, %v1157
      %v1159 = vpop.f32.mrf.mxu0
      %1160 = vmatprep.mubr.f32.mxu0 0.0
      %1161 = vmatmul.mubr.f32.gmra.mxu0 %v951
      %v1162 = vpop.f32.mrf.mxu0
      %v1163 = vadd.f32 0.0, %v1162
      %v1164 = vpop.f32.mrf.mxu0
      %1165 = vmatprep.mubr.f32.mxu0 0.0
      %1166 = vmatmul.mubr.f32.gmra.mxu0 %v954
      %v1167 = vpop.f32.mrf.mxu0
      %v1168 = vadd.f32 0.0, %v1167
      %v1169 = vpop.f32.mrf.mxu0
      %1170 = vmatprep.mubr.f32.mxu0 0.0
      %1171 = vmatmul.mubr.f32.gmra.mxu0 %v957
      %v1172 = vpop.f32.mrf.mxu0
      %v1173 = vadd.f32 0.0, %v1172
      %v1174 = vpop.f32.mrf.mxu0
      %1175 = vmatprep.mubr.f32.mxu0 0.0
      %1176 = vmatmul.mubr.f32.gmra.mxu0 %v960
      %v1177 = vpop.f32.mrf.mxu0
      %v1178 = vadd.f32 0.0, %v1177
      %v1179 = vpop.f32.mrf.mxu0
      %1180 = vmatprep.mubr.f32.mxu0 0.0
      %1181 = vmatmul.mubr.f32.gmra.mxu0 %v963
      %v1182 = vpop.f32.mrf.mxu0
      %v1183 = vadd.f32 0.0, %v1182
      %v1184 = vpop.f32.mrf.mxu0
      %1185 = vmatprep.mubr.f32.mxu0 0.0
      %1186 = vmatmul.mubr.f32.gmra.mxu0 %v966
      %v1187 = vpop.f32.mrf.mxu0
      %v1188 = vadd.f32 0.0, %v1187
      %v1189 = vpop.f32.mrf.mxu0
      %1190 = vmatprep.mubr.f32.mxu0 0.0
      %1191 = vmatmul.mubr.f32.gmra.mxu0 %v969
      %v1192 = vpop.f32.mrf.mxu0
      %v1193 = vadd.f32 0.0, %v1192
      %v1194 = vpop.f32.mrf.mxu0
      %1195 = vdwg.mxu0
      %v1196 = vld [vmem:[%s1 + $0x60] sm:$0x1]
      %v1197 = vlaneseq
      %v1198 = vshrl.u32 %v1197, 7
      %v1199 = vsub.s32 0, %v1198
      %v1200 = vrot.slane %v1196, %v1199
      %1201 = vmatprep.subr.mxu0 0.0
      %1202 = vmatpush1.msra.mxu0 0.0
      %1203 = vmatprep.subr.mxu0 0.0
      %1204 = vmatpush1.msra.mxu0 0.0
      %1205 = vmatprep.subr.mxu0 0.0
      %1206 = vmatpush1.msra.mxu0 0.0
      %1207 = vmatprep.subr.mxu0 0.0
      %1208 = vmatpush1.msra.mxu0 0.0
      %1209 = vmatprep.subr.mxu0 0.0
      %1210 = vmatpush1.msra.mxu0 0.0
      %1211 = vmatprep.subr.mxu0 0.0
      %1212 = vmatpush1.msra.mxu0 0.0
      %1213 = vmatprep.subr.mxu0 0.0
      %1214 = vmatpush1.msra.mxu0 0.0
      %1215 = vmatprep.subr.mxu0 0.0
      %1216 = vmatpush1.msra.mxu0 0.0
      %1217 = vmatprep.subr.mxu0 0.0
      %1218 = vmatpush1.msra.mxu0 0.0
      %1219 = vmatprep.subr.mxu0 0.0
      %1220 = vmatpush1.msra.mxu0 0.0
      %1221 = vmatprep.subr.mxu0 0.0
      %1222 = vmatpush1.msra.mxu0 0.0
      %1223 = vmatprep.subr.mxu0 0.0
      %1224 = vmatpush1.msra.mxu0 0.0
      %1225 = vmatprep.subr.mxu0 0.0
      %1226 = vmatpush1.msra.mxu0 0.0
      %1227 = vmatprep.subr.mxu0 0.0
      %1228 = vmatpush1.msra.mxu0 0.0
      %1229 = vmatprep.subr.mxu0 0.0
      %1230 = vmatpush1.msra.mxu0 %v872
      %1231 = vmatprep.subr.mxu0 0.0
      %1232 = vmatpush1.msra.mxu0 %v871
      %1233 = vmatprep.subr.mxu0 0.0
      %1234 = vmatpush2.msra.mxu0 0.0
      %1235 = vmatprep.subr.mxu0 0.0
      %1236 = vmatpush2.msra.mxu0 0.0
      %1237 = vmatprep.subr.mxu0 0.0
      %1238 = vmatpush2.msra.mxu0 0.0
      %1239 = vmatprep.subr.mxu0 0.0
      %1240 = vmatpush2.msra.mxu0 0.0
      %1241 = vmatprep.subr.mxu0 0.0
      %1242 = vmatpush2.msra.mxu0 0.0
      %1243 = vmatprep.subr.mxu0 0.0
      %1244 = vmatpush2.msra.mxu0 0.0
      %1245 = vmatprep.subr.mxu0 0.0
      %1246 = vmatpush2.msra.mxu0 0.0
      %1247 = vmatprep.subr.mxu0 0.0
      %1248 = vmatpush2.msra.mxu0 0.0
      %1249 = vmatprep.subr.mxu0 0.0
      %1250 = vmatpush2.msra.mxu0 0.0
      %1251 = vmatprep.subr.mxu0 0.0
      %1252 = vmatpush2.msra.mxu0 0.0
      %1253 = vmatprep.subr.mxu0 0.0
      %1254 = vmatpush2.msra.mxu0 0.0
      %1255 = vmatprep.subr.mxu0 0.0
      %1256 = vmatpush2.msra.mxu0 0.0
      %1257 = vmatprep.subr.mxu0 0.0
      %1258 = vmatpush2.msra.mxu0 0.0
      %1259 = vmatprep.subr.mxu0 0.0
      %1260 = vmatpush2.msra.mxu0 0.0
      %1261 = vmatprep.subr.mxu0 0.0
      %1262 = vmatpush2.msra.mxu0 0.0
      %1263 = vmatprep.subr.mxu0 0.0
      %1264 = vmatpush2.msra.mxu0 0.0
      %1265 = vmatprep.mubr.f32.mxu0 0.0
      %1266 = vmatmul.mubr.f32.gmra.mxu0 %v876
      %v1267 = vpop.f32.mrf.mxu0
      %v1268 = vadd.f32 %v1200, %v1267
      %v1269 = vpop.f32.mrf.mxu0
      %1270 = vmatprep.mubr.f32.mxu0 0.0
      %1271 = vmatmul.mubr.f32.gmra.mxu0 %v879
      %v1272 = vpop.f32.mrf.mxu0
      %v1273 = vadd.f32 %v1200, %v1272
      %v1274 = vpop.f32.mrf.mxu0
      %1275 = vmatprep.mubr.f32.mxu0 0.0
      %1276 = vmatmul.mubr.f32.gmra.mxu0 %v882
      %v1277 = vpop.f32.mrf.mxu0
      %v1278 = vadd.f32 %v1200, %v1277
      %v1279 = vpop.f32.mrf.mxu0
      %1280 = vmatprep.mubr.f32.mxu0 0.0
      %1281 = vmatmul.mubr.f32.gmra.mxu0 %v885
      %v1282 = vpop.f32.mrf.mxu0
      %v1283 = vadd.f32 %v1200, %v1282
      %v1284 = vpop.f32.mrf.mxu0
      %1285 = vmatprep.mubr.f32.mxu0 0.0
      %1286 = vmatmul.mubr.f32.gmra.mxu0 %v888
      %v1287 = vpop.f32.mrf.mxu0
      %v1288 = vadd.f32 %v1200, %v1287
      %v1289 = vpop.f32.mrf.mxu0
      %1290 = vmatprep.mubr.f32.mxu0 0.0
      %1291 = vmatmul.mubr.f32.gmra.mxu0 %v891
      %v1292 = vpop.f32.mrf.mxu0
      %v1293 = vadd.f32 %v1200, %v1292
      %v1294 = vpop.f32.mrf.mxu0
      %1295 = vmatprep.mubr.f32.mxu0 0.0
      %1296 = vmatmul.mubr.f32.gmra.mxu0 %v894
      %v1297 = vpop.f32.mrf.mxu0
      %v1298 = vadd.f32 %v1200, %v1297
      %v1299 = vpop.f32.mrf.mxu0
      %1300 = vmatprep.mubr.f32.mxu0 0.0
      %1301 = vmatmul.mubr.f32.gmra.mxu0 %v897
      %v1302 = vpop.f32.mrf.mxu0
      %v1303 = vadd.f32 %v1200, %v1302
      %v1304 = vpop.f32.mrf.mxu0
      %1305 = vmatprep.mubr.f32.mxu0 0.0
      %1306 = vmatmul.mubr.f32.gmra.mxu0 %v900
      %v1307 = vpop.f32.mrf.mxu0
      %v1308 = vadd.f32 %v1200, %v1307
      %v1309 = vpop.f32.mrf.mxu0
      %1310 = vmatprep.mubr.f32.mxu0 0.0
      %1311 = vmatmul.mubr.f32.gmra.mxu0 %v903
      %v1312 = vpop.f32.mrf.mxu0
      %v1313 = vadd.f32 %v1200, %v1312
      %v1314 = vpop.f32.mrf.mxu0
      %1315 = vmatprep.mubr.f32.mxu0 0.0
      %1316 = vmatmul.mubr.f32.gmra.mxu0 %v906
      %v1317 = vpop.f32.mrf.mxu0
      %v1318 = vadd.f32 %v1200, %v1317
      %v1319 = vpop.f32.mrf.mxu0
      %1320 = vmatprep.mubr.f32.mxu0 0.0
      %1321 = vmatmul.mubr.f32.gmra.mxu0 %v909
      %v1322 = vpop.f32.mrf.mxu0
      %v1323 = vadd.f32 %v1200, %v1322
      %v1324 = vpop.f32.mrf.mxu0
      %1325 = vmatprep.mubr.f32.mxu0 0.0
      %1326 = vmatmul.mubr.f32.gmra.mxu0 %v912
      %v1327 = vpop.f32.mrf.mxu0
      %v1328 = vadd.f32 %v1200, %v1327
      %v1329 = vpop.f32.mrf.mxu0
      %1330 = vmatprep.mubr.f32.mxu0 0.0
      %1331 = vmatmul.mubr.f32.gmra.mxu0 %v915
      %v1332 = vpop.f32.mrf.mxu0
      %v1333 = vadd.f32 %v1200, %v1332
      %v1334 = vpop.f32.mrf.mxu0
      %1335 = vmatprep.mubr.f32.mxu0 0.0
      %1336 = vmatmul.mubr.f32.gmra.mxu0 %v918
      %v1337 = vpop.f32.mrf.mxu0
      %v1338 = vadd.f32 %v1200, %v1337
      %v1339 = vpop.f32.mrf.mxu0
      %1340 = vmatprep.mubr.f32.mxu0 0.0
      %1341 = vmatmul.mubr.f32.gmra.mxu0 %v921
      %v1342 = vpop.f32.mrf.mxu0
      %v1343 = vadd.f32 %v1200, %v1342
      %v1344 = vpop.f32.mrf.mxu0
      %1345 = vmatprep.mubr.f32.mxu0 0.0
      %1346 = vmatmul.mubr.f32.gmra.mxu0 %v924
      %v1347 = vpop.f32.mrf.mxu0
      %v1348 = vadd.f32 %v1200, %v1347
      %v1349 = vpop.f32.mrf.mxu0
      %1350 = vmatprep.mubr.f32.mxu0 0.0
      %1351 = vmatmul.mubr.f32.gmra.mxu0 %v927
      %v1352 = vpop.f32.mrf.mxu0
      %v1353 = vadd.f32 %v1200, %v1352
      %v1354 = vpop.f32.mrf.mxu0
      %1355 = vmatprep.mubr.f32.mxu0 0.0
      %1356 = vmatmul.mubr.f32.gmra.mxu0 %v930
      %v1357 = vpop.f32.mrf.mxu0
      %v1358 = vadd.f32 %v1200, %v1357
      %v1359 = vpop.f32.mrf.mxu0
      %1360 = vmatprep.mubr.f32.mxu0 0.0
      %1361 = vmatmul.mubr.f32.gmra.mxu0 %v933
      %v1362 = vpop.f32.mrf.mxu0
      %v1363 = vadd.f32 %v1200, %v1362
      %v1364 = vpop.f32.mrf.mxu0
      %1365 = vmatprep.mubr.f32.mxu0 0.0
      %1366 = vmatmul.mubr.f32.gmra.mxu0 %v936
      %v1367 = vpop.f32.mrf.mxu0
      %v1368 = vadd.f32 %v1200, %v1367
      %v1369 = vpop.f32.mrf.mxu0
      %1370 = vmatprep.mubr.f32.mxu0 0.0
      %1371 = vmatmul.mubr.f32.gmra.mxu0 %v939
      %v1372 = vpop.f32.mrf.mxu0
      %v1373 = vadd.f32 %v1200, %v1372
      %v1374 = vpop.f32.mrf.mxu0
      %1375 = vmatprep.mubr.f32.mxu0 0.0
      %1376 = vmatmul.mubr.f32.gmra.mxu0 %v942
      %v1377 = vpop.f32.mrf.mxu0
      %v1378 = vadd.f32 %v1200, %v1377
      %v1379 = vpop.f32.mrf.mxu0
      %1380 = vmatprep.mubr.f32.mxu0 0.0
      %1381 = vmatmul.mubr.f32.gmra.mxu0 %v945
      %v1382 = vpop.f32.mrf.mxu0
      %v1383 = vadd.f32 %v1200, %v1382
      %v1384 = vpop.f32.mrf.mxu0
      %1385 = vmatprep.mubr.f32.mxu0 0.0
      %1386 = vmatmul.mubr.f32.gmra.mxu0 %v948
      %v1387 = vpop.f32.mrf.mxu0
      %v1388 = vadd.f32 %v1200, %v1387
      %v1389 = vpop.f32.mrf.mxu0
      %1390 = vmatprep.mubr.f32.mxu0 0.0
      %1391 = vmatmul.mubr.f32.gmra.mxu0 %v951
      %v1392 = vpop.f32.mrf.mxu0
      %v1393 = vadd.f32 %v1200, %v1392
      %v1394 = vpop.f32.mrf.mxu0
      %1395 = vmatprep.mubr.f32.mxu0 0.0
      %1396 = vmatmul.mubr.f32.gmra.mxu0 %v954
      %v1397 = vpop.f32.mrf.mxu0
      %v1398 = vadd.f32 %v1200, %v1397
      %v1399 = vpop.f32.mrf.mxu0
      %1400 = vmatprep.mubr.f32.mxu0 0.0
      %1401 = vmatmul.mubr.f32.gmra.mxu0 %v957
      %v1402 = vpop.f32.mrf.mxu0
      %v1403 = vadd.f32 %v1200, %v1402
      %v1404 = vpop.f32.mrf.mxu0
      %1405 = vmatprep.mubr.f32.mxu0 0.0
      %1406 = vmatmul.mubr.f32.gmra.mxu0 %v960
      %v1407 = vpop.f32.mrf.mxu0
      %v1408 = vadd.f32 %v1200, %v1407
      %v1409 = vpop.f32.mrf.mxu0
      %1410 = vmatprep.mubr.f32.mxu0 0.0
      %1411 = vmatmul.mubr.f32.gmra.mxu0 %v963
      %v1412 = vpop.f32.mrf.mxu0
      %v1413 = vadd.f32 %v1200, %v1412
      %v1414 = vpop.f32.mrf.mxu0
      %1415 = vmatprep.mubr.f32.mxu0 0.0
      %1416 = vmatmul.mubr.f32.gmra.mxu0 %v966
      %v1417 = vpop.f32.mrf.mxu0
      %v1418 = vadd.f32 %v1200, %v1417
      %v1419 = vpop.f32.mrf.mxu0
      %1420 = vmatprep.mubr.f32.mxu0 0.0
      %1421 = vmatmul.mubr.f32.gmra.mxu0 %v969
      %v1422 = vpop.f32.mrf.mxu0
      %v1423 = vadd.f32 %v1200, %v1422
      %v1424 = vpop.f32.mrf.mxu0
      %1425 = vdwg.mxu0
      %v1426 = vlaneseq
      %v1427 = vshrl.u32 %v1426, 7
      %v1428 = vsub.s32 0, %v1427
      %v1429 = vrot.slane %v1038, %v1428
      %v1430 = vlaneseq
      %v1431 = vshrl.u32 %v1430, 7
      %v1432 = vsub.s32 0, %v1431
      %v1433 = vrot.slane %v1043, %v1432
      %v1434 = vlaneseq
      %v1435 = vshrl.u32 %v1434, 7
      %v1436 = vsub.s32 0, %v1435
      %v1437 = vrot.slane %v1048, %v1436
      %v1438 = vlaneseq
      %v1439 = vshrl.u32 %v1438, 7
      %v1440 = vsub.s32 0, %v1439
      %v1441 = vrot.slane %v1053, %v1440
      %v1442 = vlaneseq
      %v1443 = vshrl.u32 %v1442, 7
      %v1444 = vsub.s32 0, %v1443
      %v1445 = vrot.slane %v1058, %v1444
      %v1446 = vlaneseq
      %v1447 = vshrl.u32 %v1446, 7
      %v1448 = vsub.s32 0, %v1447
      %v1449 = vrot.slane %v1063, %v1448
      %v1450 = vlaneseq
      %v1451 = vshrl.u32 %v1450, 7
      %v1452 = vsub.s32 0, %v1451
      %v1453 = vrot.slane %v1068, %v1452
      %v1454 = vlaneseq
      %v1455 = vshrl.u32 %v1454, 7
      %v1456 = vsub.s32 0, %v1455
      %v1457 = vrot.slane %v1073, %v1456
      %v1458 = vlaneseq
      %v1459 = vshrl.u32 %v1458, 7
      %v1460 = vsub.s32 0, %v1459
      %v1461 = vrot.slane %v1078, %v1460
      %v1462 = vlaneseq
      %v1463 = vshrl.u32 %v1462, 7
      %v1464 = vsub.s32 0, %v1463
      %v1465 = vrot.slane %v1083, %v1464
      %v1466 = vlaneseq
      %v1467 = vshrl.u32 %v1466, 7
      %v1468 = vsub.s32 0, %v1467
      %v1469 = vrot.slane %v1088, %v1468
      %v1470 = vlaneseq
      %v1471 = vshrl.u32 %v1470, 7
      %v1472 = vsub.s32 0, %v1471
      %v1473 = vrot.slane %v1093, %v1472
      %v1474 = vlaneseq
      %v1475 = vshrl.u32 %v1474, 7
      %v1476 = vsub.s32 0, %v1475
      %v1477 = vrot.slane %v1098, %v1476
      %v1478 = vlaneseq
      %v1479 = vshrl.u32 %v1478, 7
      %v1480 = vsub.s32 0, %v1479
      %v1481 = vrot.slane %v1103, %v1480
      %v1482 = vlaneseq
      %v1483 = vshrl.u32 %v1482, 7
      %v1484 = vsub.s32 0, %v1483
      %v1485 = vrot.slane %v1108, %v1484
      %v1486 = vlaneseq
      %v1487 = vshrl.u32 %v1486, 7
      %v1488 = vsub.s32 0, %v1487
      %v1489 = vrot.slane %v1113, %v1488
      %v1490 = vlaneseq
      %v1491 = vshrl.u32 %v1490, 7
      %v1492 = vsub.s32 0, %v1491
      %v1493 = vrot.slane %v1118, %v1492
      %v1494 = vlaneseq
      %v1495 = vshrl.u32 %v1494, 7
      %v1496 = vsub.s32 0, %v1495
      %v1497 = vrot.slane %v1123, %v1496
      %v1498 = vlaneseq
      %v1499 = vshrl.u32 %v1498, 7
      %v1500 = vsub.s32 0, %v1499
      %v1501 = vrot.slane %v1128, %v1500
      %v1502 = vlaneseq
      %v1503 = vshrl.u32 %v1502, 7
      %v1504 = vsub.s32 0, %v1503
      %v1505 = vrot.slane %v1133, %v1504
      %v1506 = vlaneseq
      %v1507 = vshrl.u32 %v1506, 7
      %v1508 = vsub.s32 0, %v1507
      %v1509 = vrot.slane %v1138, %v1508
      %v1510 = vlaneseq
      %v1511 = vshrl.u32 %v1510, 7
      %v1512 = vsub.s32 0, %v1511
      %v1513 = vrot.slane %v1143, %v1512
      %v1514 = vlaneseq
      %v1515 = vshrl.u32 %v1514, 7
      %v1516 = vsub.s32 0, %v1515
      %v1517 = vrot.slane %v1148, %v1516
      %v1518 = vlaneseq
      %v1519 = vshrl.u32 %v1518, 7
      %v1520 = vsub.s32 0, %v1519
      %v1521 = vrot.slane %v1153, %v1520
      %v1522 = vlaneseq
      %v1523 = vshrl.u32 %v1522, 7
      %v1524 = vsub.s32 0, %v1523
      %v1525 = vrot.slane %v1158, %v1524
      %v1526 = vlaneseq
      %v1527 = vshrl.u32 %v1526, 7
      %v1528 = vsub.s32 0, %v1527
      %v1529 = vrot.slane %v1163, %v1528
      %v1530 = vlaneseq
      %v1531 = vshrl.u32 %v1530, 7
      %v1532 = vsub.s32 0, %v1531
      %v1533 = vrot.slane %v1168, %v1532
      %v1534 = vlaneseq
      %v1535 = vshrl.u32 %v1534, 7
      %v1536 = vsub.s32 0, %v1535
      %v1537 = vrot.slane %v1173, %v1536
      %v1538 = vlaneseq
      %v1539 = vshrl.u32 %v1538, 7
      %v1540 = vsub.s32 0, %v1539
      %v1541 = vrot.slane %v1178, %v1540
      %v1542 = vlaneseq
      %v1543 = vshrl.u32 %v1542, 7
      %v1544 = vsub.s32 0, %v1543
      %v1545 = vrot.slane %v1183, %v1544
      %v1546 = vlaneseq
      %v1547 = vshrl.u32 %v1546, 7
      %v1548 = vsub.s32 0, %v1547
      %v1549 = vrot.slane %v1188, %v1548
      %v1550 = vlaneseq
      %v1551 = vshrl.u32 %v1550, 7
      %v1552 = vsub.s32 0, %v1551
      %v1553 = vrot.slane %v1193, %v1552
      %v1554 = vadd.f32 %v1268, %v1429
      %v1555 = vadd.f32 %v1273, %v1433
      %v1556 = vadd.f32 %v1278, %v1437
      %v1557 = vadd.f32 %v1283, %v1441
      %v1558 = vadd.f32 %v1288, %v1445
      %v1559 = vadd.f32 %v1293, %v1449
      %v1560 = vadd.f32 %v1298, %v1453
      %v1561 = vadd.f32 %v1303, %v1457
      %v1562 = vadd.f32 %v1308, %v1461
      %v1563 = vadd.f32 %v1313, %v1465
      %v1564 = vadd.f32 %v1318, %v1469
      %v1565 = vadd.f32 %v1323, %v1473
      %v1566 = vadd.f32 %v1328, %v1477
      %v1567 = vadd.f32 %v1333, %v1481
      %v1568 = vadd.f32 %v1338, %v1485
      %v1569 = vadd.f32 %v1343, %v1489
      %v1570 = vadd.f32 %v1348, %v1493
      %v1571 = vadd.f32 %v1353, %v1497
      %v1572 = vadd.f32 %v1358, %v1501
      %v1573 = vadd.f32 %v1363, %v1505
      %v1574 = vadd.f32 %v1368, %v1509
      %v1575 = vadd.f32 %v1373, %v1513
      %v1576 = vadd.f32 %v1378, %v1517
      %v1577 = vadd.f32 %v1383, %v1521
      %v1578 = vadd.f32 %v1388, %v1525
      %v1579 = vadd.f32 %v1393, %v1529
      %v1580 = vadd.f32 %v1398, %v1533
      %v1581 = vadd.f32 %v1403, %v1537
      %v1582 = vadd.f32 %v1408, %v1541
      %v1583 = vadd.f32 %v1413, %v1545
      %v1584 = vadd.f32 %v1418, %v1549
      %v1585 = vadd.f32 %v1423, %v1553
      %v1586 = vmax.f32 %v1554, 0.0
      %v1587 = vmax.f32 %v1555, 0.0
      %v1588 = vmax.f32 %v1556, 0.0
      %v1589 = vmax.f32 %v1557, 0.0
      %v1590 = vmax.f32 %v1558, 0.0
      %v1591 = vmax.f32 %v1559, 0.0
      %v1592 = vmax.f32 %v1560, 0.0
      %v1593 = vmax.f32 %v1561, 0.0
      %v1594 = vmax.f32 %v1562, 0.0
      %v1595 = vmax.f32 %v1563, 0.0
      %v1596 = vmax.f32 %v1564, 0.0
      %v1597 = vmax.f32 %v1565, 0.0
      %v1598 = vmax.f32 %v1566, 0.0
      %v1599 = vmax.f32 %v1567, 0.0
      %v1600 = vmax.f32 %v1568, 0.0
      %v1601 = vmax.f32 %v1569, 0.0
      %v1602 = vmax.f32 %v1570, 0.0
      %v1603 = vmax.f32 %v1571, 0.0
      %v1604 = vmax.f32 %v1572, 0.0
      %v1605 = vmax.f32 %v1573, 0.0
      %v1606 = vmax.f32 %v1574, 0.0
      %v1607 = vmax.f32 %v1575, 0.0
      %v1608 = vmax.f32 %v1576, 0.0
      %v1609 = vmax.f32 %v1577, 0.0
      %v1610 = vmax.f32 %v1578, 0.0
      %v1611 = vmax.f32 %v1579, 0.0
      %v1612 = vmax.f32 %v1580, 0.0
      %v1613 = vmax.f32 %v1581, 0.0
      %v1614 = vmax.f32 %v1582, 0.0
      %v1615 = vmax.f32 %v1583, 0.0
      %v1616 = vmax.f32 %v1584, 0.0
      %v1617 = vmax.f32 %v1585, 0.0
      %v1618 = vadd.f32 %v1586, 0.0
      %v1619 = vadd.f32 %v1587, 0.0
      %v1620 = vadd.f32 %v1588, 0.0
      %v1621 = vadd.f32 %v1589, 0.0
      %v1622 = vadd.f32 %v1590, 0.0
      %v1623 = vadd.f32 %v1591, 0.0
      %v1624 = vadd.f32 %v1592, 0.0
      %v1625 = vadd.f32 %v1593, 0.0
      %v1626 = vadd.f32 %v1594, 0.0
      %v1627 = vadd.f32 %v1595, 0.0
      %v1628 = vadd.f32 %v1596, 0.0
      %v1629 = vadd.f32 %v1597, 0.0
      %v1630 = vadd.f32 %v1598, 0.0
      %v1631 = vadd.f32 %v1599, 0.0
      %v1632 = vadd.f32 %v1600, 0.0
      %v1633 = vadd.f32 %v1601, 0.0
      %v1634 = vadd.f32 %v1602, 0.0
      %v1635 = vadd.f32 %v1603, 0.0
      %v1636 = vadd.f32 %v1604, 0.0
      %v1637 = vadd.f32 %v1605, 0.0
      %v1638 = vadd.f32 %v1606, 0.0
      %v1639 = vadd.f32 %v1607, 0.0
      %v1640 = vadd.f32 %v1608, 0.0
      %v1641 = vadd.f32 %v1609, 0.0
      %v1642 = vadd.f32 %v1610, 0.0
      %v1643 = vadd.f32 %v1611, 0.0
      %v1644 = vadd.f32 %v1612, 0.0
      %v1645 = vadd.f32 %v1613, 0.0
      %v1646 = vadd.f32 %v1614, 0.0
      %v1647 = vadd.f32 %v1615, 0.0
      %v1648 = vadd.f32 %v1616, 0.0
      %v1649 = vadd.f32 %v1617, 0.0
      %v1650 = vlaneseq
      %v1651 = vshrl.u32 %v1650, 7
      %v1652 = vsub.s32 1, %v1651
      %v1653 = vrot.slane %v1038, %v1652
      %v1654 = vlaneseq
      %v1655 = vshrl.u32 %v1654, 7
      %v1656 = vsub.s32 1, %v1655
      %v1657 = vrot.slane %v1043, %v1656
      %v1658 = vlaneseq
      %v1659 = vshrl.u32 %v1658, 7
      %v1660 = vsub.s32 1, %v1659
      %v1661 = vrot.slane %v1048, %v1660
      %v1662 = vlaneseq
      %v1663 = vshrl.u32 %v1662, 7
      %v1664 = vsub.s32 1, %v1663
      %v1665 = vrot.slane %v1053, %v1664
      %v1666 = vlaneseq
      %v1667 = vshrl.u32 %v1666, 7
      %v1668 = vsub.s32 1, %v1667
      %v1669 = vrot.slane %v1058, %v1668
      %v1670 = vlaneseq
      %v1671 = vshrl.u32 %v1670, 7
      %v1672 = vsub.s32 1, %v1671
      %v1673 = vrot.slane %v1063, %v1672
      %v1674 = vlaneseq
      %v1675 = vshrl.u32 %v1674, 7
      %v1676 = vsub.s32 1, %v1675
      %v1677 = vrot.slane %v1068, %v1676
      %v1678 = vlaneseq
      %v1679 = vshrl.u32 %v1678, 7
      %v1680 = vsub.s32 1, %v1679
      %v1681 = vrot.slane %v1073, %v1680
      %v1682 = vlaneseq
      %v1683 = vshrl.u32 %v1682, 7
      %v1684 = vsub.s32 1, %v1683
      %v1685 = vrot.slane %v1078, %v1684
      %v1686 = vlaneseq
      %v1687 = vshrl.u32 %v1686, 7
      %v1688 = vsub.s32 1, %v1687
      %v1689 = vrot.slane %v1083, %v1688
      %v1690 = vlaneseq
      %v1691 = vshrl.u32 %v1690, 7
      %v1692 = vsub.s32 1, %v1691
      %v1693 = vrot.slane %v1088, %v1692
      %v1694 = vlaneseq
      %v1695 = vshrl.u32 %v1694, 7
      %v1696 = vsub.s32 1, %v1695
      %v1697 = vrot.slane %v1093, %v1696
      %v1698 = vlaneseq
      %v1699 = vshrl.u32 %v1698, 7
      %v1700 = vsub.s32 1, %v1699
      %v1701 = vrot.slane %v1098, %v1700
      %v1702 = vlaneseq
      %v1703 = vshrl.u32 %v1702, 7
      %v1704 = vsub.s32 1, %v1703
      %v1705 = vrot.slane %v1103, %v1704
      %v1706 = vlaneseq
      %v1707 = vshrl.u32 %v1706, 7
      %v1708 = vsub.s32 1, %v1707
      %v1709 = vrot.slane %v1108, %v1708
      %v1710 = vlaneseq
      %v1711 = vshrl.u32 %v1710, 7
      %v1712 = vsub.s32 1, %v1711
      %v1713 = vrot.slane %v1113, %v1712
      %v1714 = vlaneseq
      %v1715 = vshrl.u32 %v1714, 7
      %v1716 = vsub.s32 1, %v1715
      %v1717 = vrot.slane %v1118, %v1716
      %v1718 = vlaneseq
      %v1719 = vshrl.u32 %v1718, 7
      %v1720 = vsub.s32 1, %v1719
      %v1721 = vrot.slane %v1123, %v1720
      %v1722 = vlaneseq
      %v1723 = vshrl.u32 %v1722, 7
      %v1724 = vsub.s32 1, %v1723
      %v1725 = vrot.slane %v1128, %v1724
      %v1726 = vlaneseq
      %v1727 = vshrl.u32 %v1726, 7
      %v1728 = vsub.s32 1, %v1727
      %v1729 = vrot.slane %v1133, %v1728
      %v1730 = vlaneseq
      %v1731 = vshrl.u32 %v1730, 7
      %v1732 = vsub.s32 1, %v1731
      %v1733 = vrot.slane %v1138, %v1732
      %v1734 = vlaneseq
      %v1735 = vshrl.u32 %v1734, 7
      %v1736 = vsub.s32 1, %v1735
      %v1737 = vrot.slane %v1143, %v1736
      %v1738 = vlaneseq
      %v1739 = vshrl.u32 %v1738, 7
      %v1740 = vsub.s32 1, %v1739
      %v1741 = vrot.slane %v1148, %v1740
      %v1742 = vlaneseq
      %v1743 = vshrl.u32 %v1742, 7
      %v1744 = vsub.s32 1, %v1743
      %v1745 = vrot.slane %v1153, %v1744
      %v1746 = vlaneseq
      %v1747 = vshrl.u32 %v1746, 7
      %v1748 = vsub.s32 1, %v1747
      %v1749 = vrot.slane %v1158, %v1748
      %v1750 = vlaneseq
      %v1751 = vshrl.u32 %v1750, 7
      %v1752 = vsub.s32 1, %v1751
      %v1753 = vrot.slane %v1163, %v1752
      %v1754 = vlaneseq
      %v1755 = vshrl.u32 %v1754, 7
      %v1756 = vsub.s32 1, %v1755
      %v1757 = vrot.slane %v1168, %v1756
      %v1758 = vlaneseq
      %v1759 = vshrl.u32 %v1758, 7
      %v1760 = vsub.s32 1, %v1759
      %v1761 = vrot.slane %v1173, %v1760
      %v1762 = vlaneseq
      %v1763 = vshrl.u32 %v1762, 7
      %v1764 = vsub.s32 1, %v1763
      %v1765 = vrot.slane %v1178, %v1764
      %v1766 = vlaneseq
      %v1767 = vshrl.u32 %v1766, 7
      %v1768 = vsub.s32 1, %v1767
      %v1769 = vrot.slane %v1183, %v1768
      %v1770 = vlaneseq
      %v1771 = vshrl.u32 %v1770, 7
      %v1772 = vsub.s32 1, %v1771
      %v1773 = vrot.slane %v1188, %v1772
      %v1774 = vlaneseq
      %v1775 = vshrl.u32 %v1774, 7
      %v1776 = vsub.s32 1, %v1775
      %v1777 = vrot.slane %v1193, %v1776
      %v1778 = vadd.f32 %v1268, %v1653
      %v1779 = vadd.f32 %v1273, %v1657
      %v1780 = vadd.f32 %v1278, %v1661
      %v1781 = vadd.f32 %v1283, %v1665
      %v1782 = vadd.f32 %v1288, %v1669
      %v1783 = vadd.f32 %v1293, %v1673
      %v1784 = vadd.f32 %v1298, %v1677
      %v1785 = vadd.f32 %v1303, %v1681
      %v1786 = vadd.f32 %v1308, %v1685
      %v1787 = vadd.f32 %v1313, %v1689
      %v1788 = vadd.f32 %v1318, %v1693
      %v1789 = vadd.f32 %v1323, %v1697
      %v1790 = vadd.f32 %v1328, %v1701
      %v1791 = vadd.f32 %v1333, %v1705
      %v1792 = vadd.f32 %v1338, %v1709
      %v1793 = vadd.f32 %v1343, %v1713
      %v1794 = vadd.f32 %v1348, %v1717
      %v1795 = vadd.f32 %v1353, %v1721
      %v1796 = vadd.f32 %v1358, %v1725
      %v1797 = vadd.f32 %v1363, %v1729
      %v1798 = vadd.f32 %v1368, %v1733
      %v1799 = vadd.f32 %v1373, %v1737
      %v1800 = vadd.f32 %v1378, %v1741
      %v1801 = vadd.f32 %v1383, %v1745
      %v1802 = vadd.f32 %v1388, %v1749
      %v1803 = vadd.f32 %v1393, %v1753
      %v1804 = vadd.f32 %v1398, %v1757
      %v1805 = vadd.f32 %v1403, %v1761
      %v1806 = vadd.f32 %v1408, %v1765
      %v1807 = vadd.f32 %v1413, %v1769
      %v1808 = vadd.f32 %v1418, %v1773
      %v1809 = vadd.f32 %v1423, %v1777
      %v1810 = vmax.f32 %v1778, 0.0
      %v1811 = vmax.f32 %v1779, 0.0
      %v1812 = vmax.f32 %v1780, 0.0
      %v1813 = vmax.f32 %v1781, 0.0
      %v1814 = vmax.f32 %v1782, 0.0
      %v1815 = vmax.f32 %v1783, 0.0
      %v1816 = vmax.f32 %v1784, 0.0
      %v1817 = vmax.f32 %v1785, 0.0
      %v1818 = vmax.f32 %v1786, 0.0
      %v1819 = vmax.f32 %v1787, 0.0
      %v1820 = vmax.f32 %v1788, 0.0
      %v1821 = vmax.f32 %v1789, 0.0
      %v1822 = vmax.f32 %v1790, 0.0
      %v1823 = vmax.f32 %v1791, 0.0
      %v1824 = vmax.f32 %v1792, 0.0
      %v1825 = vmax.f32 %v1793, 0.0
      %v1826 = vmax.f32 %v1794, 0.0
      %v1827 = vmax.f32 %v1795, 0.0
      %v1828 = vmax.f32 %v1796, 0.0
      %v1829 = vmax.f32 %v1797, 0.0
      %v1830 = vmax.f32 %v1798, 0.0
      %v1831 = vmax.f32 %v1799, 0.0
      %v1832 = vmax.f32 %v1800, 0.0
      %v1833 = vmax.f32 %v1801, 0.0
      %v1834 = vmax.f32 %v1802, 0.0
      %v1835 = vmax.f32 %v1803, 0.0
      %v1836 = vmax.f32 %v1804, 0.0
      %v1837 = vmax.f32 %v1805, 0.0
      %v1838 = vmax.f32 %v1806, 0.0
      %v1839 = vmax.f32 %v1807, 0.0
      %v1840 = vmax.f32 %v1808, 0.0
      %v1841 = vmax.f32 %v1809, 0.0
      %v1842 = vadd.f32 %v1618, %v1810
      %v1843 = vadd.f32 %v1619, %v1811
      %v1844 = vadd.f32 %v1620, %v1812
      %v1845 = vadd.f32 %v1621, %v1813
      %v1846 = vadd.f32 %v1622, %v1814
      %v1847 = vadd.f32 %v1623, %v1815
      %v1848 = vadd.f32 %v1624, %v1816
      %v1849 = vadd.f32 %v1625, %v1817
      %v1850 = vadd.f32 %v1626, %v1818
      %v1851 = vadd.f32 %v1627, %v1819
      %v1852 = vadd.f32 %v1628, %v1820
      %v1853 = vadd.f32 %v1629, %v1821
      %v1854 = vadd.f32 %v1630, %v1822
      %v1855 = vadd.f32 %v1631, %v1823
      %v1856 = vadd.f32 %v1632, %v1824
      %v1857 = vadd.f32 %v1633, %v1825
      %v1858 = vadd.f32 %v1634, %v1826
      %v1859 = vadd.f32 %v1635, %v1827
      %v1860 = vadd.f32 %v1636, %v1828
      %v1861 = vadd.f32 %v1637, %v1829
      %v1862 = vadd.f32 %v1638, %v1830
      %v1863 = vadd.f32 %v1639, %v1831
      %v1864 = vadd.f32 %v1640, %v1832
      %v1865 = vadd.f32 %v1641, %v1833
      %v1866 = vadd.f32 %v1642, %v1834
      %v1867 = vadd.f32 %v1643, %v1835
      %v1868 = vadd.f32 %v1644, %v1836
      %v1869 = vadd.f32 %v1645, %v1837
      %v1870 = vadd.f32 %v1646, %v1838
      %v1871 = vadd.f32 %v1647, %v1839
      %v1872 = vadd.f32 %v1648, %v1840
      %v1873 = vadd.f32 %v1649, %v1841
      %v1874 = vlaneseq
      %v1875 = vshrl.u32 %v1874, 7
      %v1876 = vsub.s32 2, %v1875
      %v1877 = vrot.slane %v1038, %v1876
      %v1878 = vlaneseq
      %v1879 = vshrl.u32 %v1878, 7
      %v1880 = vsub.s32 2, %v1879
      %v1881 = vrot.slane %v1043, %v1880
      %v1882 = vlaneseq
      %v1883 = vshrl.u32 %v1882, 7
      %v1884 = vsub.s32 2, %v1883
      %v1885 = vrot.slane %v1048, %v1884
      %v1886 = vlaneseq
      %v1887 = vshrl.u32 %v1886, 7
      %v1888 = vsub.s32 2, %v1887
      %v1889 = vrot.slane %v1053, %v1888
      %v1890 = vlaneseq
      %v1891 = vshrl.u32 %v1890, 7
      %v1892 = vsub.s32 2, %v1891
      %v1893 = vrot.slane %v1058, %v1892
      %v1894 = vlaneseq
      %v1895 = vshrl.u32 %v1894, 7
      %v1896 = vsub.s32 2, %v1895
      %v1897 = vrot.slane %v1063, %v1896
      %v1898 = vlaneseq
      %v1899 = vshrl.u32 %v1898, 7
      %v1900 = vsub.s32 2, %v1899
      %v1901 = vrot.slane %v1068, %v1900
      %v1902 = vlaneseq
      %v1903 = vshrl.u32 %v1902, 7
      %v1904 = vsub.s32 2, %v1903
      %v1905 = vrot.slane %v1073, %v1904
      %v1906 = vlaneseq
      %v1907 = vshrl.u32 %v1906, 7
      %v1908 = vsub.s32 2, %v1907
      %v1909 = vrot.slane %v1078, %v1908
      %v1910 = vlaneseq
      %v1911 = vshrl.u32 %v1910, 7
      %v1912 = vsub.s32 2, %v1911
      %v1913 = vrot.slane %v1083, %v1912
      %v1914 = vlaneseq
      %v1915 = vshrl.u32 %v1914, 7
      %v1916 = vsub.s32 2, %v1915
      %v1917 = vrot.slane %v1088, %v1916
      %v1918 = vlaneseq
      %v1919 = vshrl.u32 %v1918, 7
      %v1920 = vsub.s32 2, %v1919
      %v1921 = vrot.slane %v1093, %v1920
      %v1922 = vlaneseq
      %v1923 = vshrl.u32 %v1922, 7
      %v1924 = vsub.s32 2, %v1923
      %v1925 = vrot.slane %v1098, %v1924
      %v1926 = vlaneseq
      %v1927 = vshrl.u32 %v1926, 7
      %v1928 = vsub.s32 2, %v1927
      %v1929 = vrot.slane %v1103, %v1928
      %v1930 = vlaneseq
      %v1931 = vshrl.u32 %v1930, 7
      %v1932 = vsub.s32 2, %v1931
      %v1933 = vrot.slane %v1108, %v1932
      %v1934 = vlaneseq
      %v1935 = vshrl.u32 %v1934, 7
      %v1936 = vsub.s32 2, %v1935
      %v1937 = vrot.slane %v1113, %v1936
      %v1938 = vlaneseq
      %v1939 = vshrl.u32 %v1938, 7
      %v1940 = vsub.s32 2, %v1939
      %v1941 = vrot.slane %v1118, %v1940
      %v1942 = vlaneseq
      %v1943 = vshrl.u32 %v1942, 7
      %v1944 = vsub.s32 2, %v1943
      %v1945 = vrot.slane %v1123, %v1944
      %v1946 = vlaneseq
      %v1947 = vshrl.u32 %v1946, 7
      %v1948 = vsub.s32 2, %v1947
      %v1949 = vrot.slane %v1128, %v1948
      %v1950 = vlaneseq
      %v1951 = vshrl.u32 %v1950, 7
      %v1952 = vsub.s32 2, %v1951
      %v1953 = vrot.slane %v1133, %v1952
      %v1954 = vlaneseq
      %v1955 = vshrl.u32 %v1954, 7
      %v1956 = vsub.s32 2, %v1955
      %v1957 = vrot.slane %v1138, %v1956
      %v1958 = vlaneseq
      %v1959 = vshrl.u32 %v1958, 7
      %v1960 = vsub.s32 2, %v1959
      %v1961 = vrot.slane %v1143, %v1960
      %v1962 = vlaneseq
      %v1963 = vshrl.u32 %v1962, 7
      %v1964 = vsub.s32 2, %v1963
      %v1965 = vrot.slane %v1148, %v1964
      %v1966 = vlaneseq
      %v1967 = vshrl.u32 %v1966, 7
      %v1968 = vsub.s32 2, %v1967
      %v1969 = vrot.slane %v1153, %v1968
      %v1970 = vlaneseq
      %v1971 = vshrl.u32 %v1970, 7
      %v1972 = vsub.s32 2, %v1971
      %v1973 = vrot.slane %v1158, %v1972
      %v1974 = vlaneseq
      %v1975 = vshrl.u32 %v1974, 7
      %v1976 = vsub.s32 2, %v1975
      %v1977 = vrot.slane %v1163, %v1976
      %v1978 = vlaneseq
      %v1979 = vshrl.u32 %v1978, 7
      %v1980 = vsub.s32 2, %v1979
      %v1981 = vrot.slane %v1168, %v1980
      %v1982 = vlaneseq
      %v1983 = vshrl.u32 %v1982, 7
      %v1984 = vsub.s32 2, %v1983
      %v1985 = vrot.slane %v1173, %v1984
      %v1986 = vlaneseq
      %v1987 = vshrl.u32 %v1986, 7
      %v1988 = vsub.s32 2, %v1987
      %v1989 = vrot.slane %v1178, %v1988
      %v1990 = vlaneseq
      %v1991 = vshrl.u32 %v1990, 7
      %v1992 = vsub.s32 2, %v1991
      %v1993 = vrot.slane %v1183, %v1992
      %v1994 = vlaneseq
      %v1995 = vshrl.u32 %v1994, 7
      %v1996 = vsub.s32 2, %v1995
      %v1997 = vrot.slane %v1188, %v1996
      %v1998 = vlaneseq
      %v1999 = vshrl.u32 %v1998, 7
      %v2000 = vsub.s32 2, %v1999
      %v2001 = vrot.slane %v1193, %v2000
      %v2002 = vadd.f32 %v1268, %v1877
      %v2003 = vadd.f32 %v1273, %v1881
      %v2004 = vadd.f32 %v1278, %v1885
      %v2005 = vadd.f32 %v1283, %v1889
      %v2006 = vadd.f32 %v1288, %v1893
      %v2007 = vadd.f32 %v1293, %v1897
      %v2008 = vadd.f32 %v1298, %v1901
      %v2009 = vadd.f32 %v1303, %v1905
      %v2010 = vadd.f32 %v1308, %v1909
      %v2011 = vadd.f32 %v1313, %v1913
      %v2012 = vadd.f32 %v1318, %v1917
      %v2013 = vadd.f32 %v1323, %v1921
      %v2014 = vadd.f32 %v1328, %v1925
      %v2015 = vadd.f32 %v1333, %v1929
      %v2016 = vadd.f32 %v1338, %v1933
      %v2017 = vadd.f32 %v1343, %v1937
      %v2018 = vadd.f32 %v1348, %v1941
      %v2019 = vadd.f32 %v1353, %v1945
      %v2020 = vadd.f32 %v1358, %v1949
      %v2021 = vadd.f32 %v1363, %v1953
      %v2022 = vadd.f32 %v1368, %v1957
      %v2023 = vadd.f32 %v1373, %v1961
      %v2024 = vadd.f32 %v1378, %v1965
      %v2025 = vadd.f32 %v1383, %v1969
      %v2026 = vadd.f32 %v1388, %v1973
      %v2027 = vadd.f32 %v1393, %v1977
      %v2028 = vadd.f32 %v1398, %v1981
      %v2029 = vadd.f32 %v1403, %v1985
      %v2030 = vadd.f32 %v1408, %v1989
      %v2031 = vadd.f32 %v1413, %v1993
      %v2032 = vadd.f32 %v1418, %v1997
      %v2033 = vadd.f32 %v1423, %v2001
      %v2034 = vmax.f32 %v2002, 0.0
      %v2035 = vmax.f32 %v2003, 0.0
      %v2036 = vmax.f32 %v2004, 0.0
      %v2037 = vmax.f32 %v2005, 0.0
      %v2038 = vmax.f32 %v2006, 0.0
      %v2039 = vmax.f32 %v2007, 0.0
      %v2040 = vmax.f32 %v2008, 0.0
      %v2041 = vmax.f32 %v2009, 0.0
      %v2042 = vmax.f32 %v2010, 0.0
      %v2043 = vmax.f32 %v2011, 0.0
      %v2044 = vmax.f32 %v2012, 0.0
      %v2045 = vmax.f32 %v2013, 0.0
      %v2046 = vmax.f32 %v2014, 0.0
      %v2047 = vmax.f32 %v2015, 0.0
      %v2048 = vmax.f32 %v2016, 0.0
      %v2049 = vmax.f32 %v2017, 0.0
      %v2050 = vmax.f32 %v2018, 0.0
      %v2051 = vmax.f32 %v2019, 0.0
      %v2052 = vmax.f32 %v2020, 0.0
      %v2053 = vmax.f32 %v2021, 0.0
      %v2054 = vmax.f32 %v2022, 0.0
      %v2055 = vmax.f32 %v2023, 0.0
      %v2056 = vmax.f32 %v2024, 0.0
      %v2057 = vmax.f32 %v2025, 0.0
      %v2058 = vmax.f32 %v2026, 0.0
      %v2059 = vmax.f32 %v2027, 0.0
      %v2060 = vmax.f32 %v2028, 0.0
      %v2061 = vmax.f32 %v2029, 0.0
      %v2062 = vmax.f32 %v2030, 0.0
      %v2063 = vmax.f32 %v2031, 0.0
      %v2064 = vmax.f32 %v2032, 0.0
      %v2065 = vmax.f32 %v2033, 0.0
      %v2066 = vadd.f32 %v1842, %v2034
      %v2067 = vadd.f32 %v1843, %v2035
      %v2068 = vadd.f32 %v1844, %v2036
      %v2069 = vadd.f32 %v1845, %v2037
      %v2070 = vadd.f32 %v1846, %v2038
      %v2071 = vadd.f32 %v1847, %v2039
      %v2072 = vadd.f32 %v1848, %v2040
      %v2073 = vadd.f32 %v1849, %v2041
      %v2074 = vadd.f32 %v1850, %v2042
      %v2075 = vadd.f32 %v1851, %v2043
      %v2076 = vadd.f32 %v1852, %v2044
      %v2077 = vadd.f32 %v1853, %v2045
      %v2078 = vadd.f32 %v1854, %v2046
      %v2079 = vadd.f32 %v1855, %v2047
      %v2080 = vadd.f32 %v1856, %v2048
      %v2081 = vadd.f32 %v1857, %v2049
      %v2082 = vadd.f32 %v1858, %v2050
      %v2083 = vadd.f32 %v1859, %v2051
      %v2084 = vadd.f32 %v1860, %v2052
      %v2085 = vadd.f32 %v1861, %v2053
      %v2086 = vadd.f32 %v1862, %v2054
      %v2087 = vadd.f32 %v1863, %v2055
      %v2088 = vadd.f32 %v1864, %v2056
      %v2089 = vadd.f32 %v1865, %v2057
      %v2090 = vadd.f32 %v1866, %v2058
      %v2091 = vadd.f32 %v1867, %v2059
      %v2092 = vadd.f32 %v1868, %v2060
      %v2093 = vadd.f32 %v1869, %v2061
      %v2094 = vadd.f32 %v1870, %v2062
      %v2095 = vadd.f32 %v1871, %v2063
      %v2096 = vadd.f32 %v1872, %v2064
      %v2097 = vadd.f32 %v1873, %v2065
      %v2098 = vlaneseq
      %v2099 = vshrl.u32 %v2098, 7
      %v2100 = vsub.s32 3, %v2099
      %v2101 = vrot.slane %v1038, %v2100
      %v2102 = vlaneseq
      %v2103 = vshrl.u32 %v2102, 7
      %v2104 = vsub.s32 3, %v2103
      %v2105 = vrot.slane %v1043, %v2104
      %v2106 = vlaneseq
      %v2107 = vshrl.u32 %v2106, 7
      %v2108 = vsub.s32 3, %v2107
      %v2109 = vrot.slane %v1048, %v2108
      %v2110 = vlaneseq
      %v2111 = vshrl.u32 %v2110, 7
      %v2112 = vsub.s32 3, %v2111
      %v2113 = vrot.slane %v1053, %v2112
      %v2114 = vlaneseq
      %v2115 = vshrl.u32 %v2114, 7
      %v2116 = vsub.s32 3, %v2115
      %v2117 = vrot.slane %v1058, %v2116
      %v2118 = vlaneseq
      %v2119 = vshrl.u32 %v2118, 7
      %v2120 = vsub.s32 3, %v2119
      %v2121 = vrot.slane %v1063, %v2120
      %v2122 = vlaneseq
      %v2123 = vshrl.u32 %v2122, 7
      %v2124 = vsub.s32 3, %v2123
      %v2125 = vrot.slane %v1068, %v2124
      %v2126 = vlaneseq
      %v2127 = vshrl.u32 %v2126, 7
      %v2128 = vsub.s32 3, %v2127
      %v2129 = vrot.slane %v1073, %v2128
      %v2130 = vlaneseq
      %v2131 = vshrl.u32 %v2130, 7
      %v2132 = vsub.s32 3, %v2131
      %v2133 = vrot.slane %v1078, %v2132
      %v2134 = vlaneseq
      %v2135 = vshrl.u32 %v2134, 7
      %v2136 = vsub.s32 3, %v2135
      %v2137 = vrot.slane %v1083, %v2136
      %v2138 = vlaneseq
      %v2139 = vshrl.u32 %v2138, 7
      %v2140 = vsub.s32 3, %v2139
      %v2141 = vrot.slane %v1088, %v2140
      %v2142 = vlaneseq
      %v2143 = vshrl.u32 %v2142, 7
      %v2144 = vsub.s32 3, %v2143
      %v2145 = vrot.slane %v1093, %v2144
      %v2146 = vlaneseq
      %v2147 = vshrl.u32 %v2146, 7
      %v2148 = vsub.s32 3, %v2147
      %v2149 = vrot.slane %v1098, %v2148
      %v2150 = vlaneseq
      %v2151 = vshrl.u32 %v2150, 7
      %v2152 = vsub.s32 3, %v2151
      %v2153 = vrot.slane %v1103, %v2152
      %v2154 = vlaneseq
      %v2155 = vshrl.u32 %v2154, 7
      %v2156 = vsub.s32 3, %v2155
      %v2157 = vrot.slane %v1108, %v2156
      %v2158 = vlaneseq
      %v2159 = vshrl.u32 %v2158, 7
      %v2160 = vsub.s32 3, %v2159
      %v2161 = vrot.slane %v1113, %v2160
      %v2162 = vlaneseq
      %v2163 = vshrl.u32 %v2162, 7
      %v2164 = vsub.s32 3, %v2163
      %v2165 = vrot.slane %v1118, %v2164
      %v2166 = vlaneseq
      %v2167 = vshrl.u32 %v2166, 7
      %v2168 = vsub.s32 3, %v2167
      %v2169 = vrot.slane %v1123, %v2168
      %v2170 = vlaneseq
      %v2171 = vshrl.u32 %v2170, 7
      %v2172 = vsub.s32 3, %v2171
      %v2173 = vrot.slane %v1128, %v2172
      %v2174 = vlaneseq
      %v2175 = vshrl.u32 %v2174, 7
      %v2176 = vsub.s32 3, %v2175
      %v2177 = vrot.slane %v1133, %v2176
      %v2178 = vlaneseq
      %v2179 = vshrl.u32 %v2178, 7
      %v2180 = vsub.s32 3, %v2179
      %v2181 = vrot.slane %v1138, %v2180
      %v2182 = vlaneseq
      %v2183 = vshrl.u32 %v2182, 7
      %v2184 = vsub.s32 3, %v2183
      %v2185 = vrot.slane %v1143, %v2184
      %v2186 = vlaneseq
      %v2187 = vshrl.u32 %v2186, 7
      %v2188 = vsub.s32 3, %v2187
      %v2189 = vrot.slane %v1148, %v2188
      %v2190 = vlaneseq
      %v2191 = vshrl.u32 %v2190, 7
      %v2192 = vsub.s32 3, %v2191
      %v2193 = vrot.slane %v1153, %v2192
      %v2194 = vlaneseq
      %v2195 = vshrl.u32 %v2194, 7
      %v2196 = vsub.s32 3, %v2195
      %v2197 = vrot.slane %v1158, %v2196
      %v2198 = vlaneseq
      %v2199 = vshrl.u32 %v2198, 7
      %v2200 = vsub.s32 3, %v2199
      %v2201 = vrot.slane %v1163, %v2200
      %v2202 = vlaneseq
      %v2203 = vshrl.u32 %v2202, 7
      %v2204 = vsub.s32 3, %v2203
      %v2205 = vrot.slane %v1168, %v2204
      %v2206 = vlaneseq
      %v2207 = vshrl.u32 %v2206, 7
      %v2208 = vsub.s32 3, %v2207
      %v2209 = vrot.slane %v1173, %v2208
      %v2210 = vlaneseq
      %v2211 = vshrl.u32 %v2210, 7
      %v2212 = vsub.s32 3, %v2211
      %v2213 = vrot.slane %v1178, %v2212
      %v2214 = vlaneseq
      %v2215 = vshrl.u32 %v2214, 7
      %v2216 = vsub.s32 3, %v2215
      %v2217 = vrot.slane %v1183, %v2216
      %v2218 = vlaneseq
      %v2219 = vshrl.u32 %v2218, 7
      %v2220 = vsub.s32 3, %v2219
      %v2221 = vrot.slane %v1188, %v2220
      %v2222 = vlaneseq
      %v2223 = vshrl.u32 %v2222, 7
      %v2224 = vsub.s32 3, %v2223
      %v2225 = vrot.slane %v1193, %v2224
      %v2226 = vadd.f32 %v1268, %v2101
      %v2227 = vadd.f32 %v1273, %v2105
      %v2228 = vadd.f32 %v1278, %v2109
      %v2229 = vadd.f32 %v1283, %v2113
      %v2230 = vadd.f32 %v1288, %v2117
      %v2231 = vadd.f32 %v1293, %v2121
      %v2232 = vadd.f32 %v1298, %v2125
      %v2233 = vadd.f32 %v1303, %v2129
      %v2234 = vadd.f32 %v1308, %v2133
      %v2235 = vadd.f32 %v1313, %v2137
      %v2236 = vadd.f32 %v1318, %v2141
      %v2237 = vadd.f32 %v1323, %v2145
      %v2238 = vadd.f32 %v1328, %v2149
      %v2239 = vadd.f32 %v1333, %v2153
      %v2240 = vadd.f32 %v1338, %v2157
      %v2241 = vadd.f32 %v1343, %v2161
      %v2242 = vadd.f32 %v1348, %v2165
      %v2243 = vadd.f32 %v1353, %v2169
      %v2244 = vadd.f32 %v1358, %v2173
      %v2245 = vadd.f32 %v1363, %v2177
      %v2246 = vadd.f32 %v1368, %v2181
      %v2247 = vadd.f32 %v1373, %v2185
      %v2248 = vadd.f32 %v1378, %v2189
      %v2249 = vadd.f32 %v1383, %v2193
      %v2250 = vadd.f32 %v1388, %v2197
      %v2251 = vadd.f32 %v1393, %v2201
      %v2252 = vadd.f32 %v1398, %v2205
      %v2253 = vadd.f32 %v1403, %v2209
      %v2254 = vadd.f32 %v1408, %v2213
      %v2255 = vadd.f32 %v1413, %v2217
      %v2256 = vadd.f32 %v1418, %v2221
      %v2257 = vadd.f32 %v1423, %v2225
      %v2258 = vmax.f32 %v2226, 0.0
      %v2259 = vmax.f32 %v2227, 0.0
      %v2260 = vmax.f32 %v2228, 0.0
      %v2261 = vmax.f32 %v2229, 0.0
      %v2262 = vmax.f32 %v2230, 0.0
      %v2263 = vmax.f32 %v2231, 0.0
      %v2264 = vmax.f32 %v2232, 0.0
      %v2265 = vmax.f32 %v2233, 0.0
      %v2266 = vmax.f32 %v2234, 0.0
      %v2267 = vmax.f32 %v2235, 0.0
      %v2268 = vmax.f32 %v2236, 0.0
      %v2269 = vmax.f32 %v2237, 0.0
      %v2270 = vmax.f32 %v2238, 0.0
      %v2271 = vmax.f32 %v2239, 0.0
      %v2272 = vmax.f32 %v2240, 0.0
      %v2273 = vmax.f32 %v2241, 0.0
      %v2274 = vmax.f32 %v2242, 0.0
      %v2275 = vmax.f32 %v2243, 0.0
      %v2276 = vmax.f32 %v2244, 0.0
      %v2277 = vmax.f32 %v2245, 0.0
      %v2278 = vmax.f32 %v2246, 0.0
      %v2279 = vmax.f32 %v2247, 0.0
      %v2280 = vmax.f32 %v2248, 0.0
      %v2281 = vmax.f32 %v2249, 0.0
      %v2282 = vmax.f32 %v2250, 0.0
      %v2283 = vmax.f32 %v2251, 0.0
      %v2284 = vmax.f32 %v2252, 0.0
      %v2285 = vmax.f32 %v2253, 0.0
      %v2286 = vmax.f32 %v2254, 0.0
      %v2287 = vmax.f32 %v2255, 0.0
      %v2288 = vmax.f32 %v2256, 0.0
      %v2289 = vmax.f32 %v2257, 0.0
      %v2290 = vadd.f32 %v2066, %v2258
      %v2291 = vadd.f32 %v2067, %v2259
      %v2292 = vadd.f32 %v2068, %v2260
      %v2293 = vadd.f32 %v2069, %v2261
      %v2294 = vadd.f32 %v2070, %v2262
      %v2295 = vadd.f32 %v2071, %v2263
      %v2296 = vadd.f32 %v2072, %v2264
      %v2297 = vadd.f32 %v2073, %v2265
      %v2298 = vadd.f32 %v2074, %v2266
      %v2299 = vadd.f32 %v2075, %v2267
      %v2300 = vadd.f32 %v2076, %v2268
      %v2301 = vadd.f32 %v2077, %v2269
      %v2302 = vadd.f32 %v2078, %v2270
      %v2303 = vadd.f32 %v2079, %v2271
      %v2304 = vadd.f32 %v2080, %v2272
      %v2305 = vadd.f32 %v2081, %v2273
      %v2306 = vadd.f32 %v2082, %v2274
      %v2307 = vadd.f32 %v2083, %v2275
      %v2308 = vadd.f32 %v2084, %v2276
      %v2309 = vadd.f32 %v2085, %v2277
      %v2310 = vadd.f32 %v2086, %v2278
      %v2311 = vadd.f32 %v2087, %v2279
      %v2312 = vadd.f32 %v2088, %v2280
      %v2313 = vadd.f32 %v2089, %v2281
      %v2314 = vadd.f32 %v2090, %v2282
      %v2315 = vadd.f32 %v2091, %v2283
      %v2316 = vadd.f32 %v2092, %v2284
      %v2317 = vadd.f32 %v2093, %v2285
      %v2318 = vadd.f32 %v2094, %v2286
      %v2319 = vadd.f32 %v2095, %v2287
      %v2320 = vadd.f32 %v2096, %v2288
      %v2321 = vadd.f32 %v2097, %v2289
      %v2322 = vlaneseq
      %v2323 = vshrl.u32 %v2322, 7
      %v2324 = vsub.s32 4, %v2323
      %v2325 = vrot.slane %v1038, %v2324
      %v2326 = vlaneseq
      %v2327 = vshrl.u32 %v2326, 7
      %v2328 = vsub.s32 4, %v2327
      %v2329 = vrot.slane %v1043, %v2328
      %v2330 = vlaneseq
      %v2331 = vshrl.u32 %v2330, 7
      %v2332 = vsub.s32 4, %v2331
      %v2333 = vrot.slane %v1048, %v2332
      %v2334 = vlaneseq
      %v2335 = vshrl.u32 %v2334, 7
      %v2336 = vsub.s32 4, %v2335
      %v2337 = vrot.slane %v1053, %v2336
      %v2338 = vlaneseq
      %v2339 = vshrl.u32 %v2338, 7
      %v2340 = vsub.s32 4, %v2339
      %v2341 = vrot.slane %v1058, %v2340
      %v2342 = vlaneseq
      %v2343 = vshrl.u32 %v2342, 7
      %v2344 = vsub.s32 4, %v2343
      %v2345 = vrot.slane %v1063, %v2344
      %v2346 = vlaneseq
      %v2347 = vshrl.u32 %v2346, 7
      %v2348 = vsub.s32 4, %v2347
      %v2349 = vrot.slane %v1068, %v2348
      %v2350 = vlaneseq
      %v2351 = vshrl.u32 %v2350, 7
      %v2352 = vsub.s32 4, %v2351
      %v2353 = vrot.slane %v1073, %v2352
      %v2354 = vlaneseq
      %v2355 = vshrl.u32 %v2354, 7
      %v2356 = vsub.s32 4, %v2355
      %v2357 = vrot.slane %v1078, %v2356
      %v2358 = vlaneseq
      %v2359 = vshrl.u32 %v2358, 7
      %v2360 = vsub.s32 4, %v2359
      %v2361 = vrot.slane %v1083, %v2360
      %v2362 = vlaneseq
      %v2363 = vshrl.u32 %v2362, 7
      %v2364 = vsub.s32 4, %v2363
      %v2365 = vrot.slane %v1088, %v2364
      %v2366 = vlaneseq
      %v2367 = vshrl.u32 %v2366, 7
      %v2368 = vsub.s32 4, %v2367
      %v2369 = vrot.slane %v1093, %v2368
      %v2370 = vlaneseq
      %v2371 = vshrl.u32 %v2370, 7
      %v2372 = vsub.s32 4, %v2371
      %v2373 = vrot.slane %v1098, %v2372
      %v2374 = vlaneseq
      %v2375 = vshrl.u32 %v2374, 7
      %v2376 = vsub.s32 4, %v2375
      %v2377 = vrot.slane %v1103, %v2376
      %v2378 = vlaneseq
      %v2379 = vshrl.u32 %v2378, 7
      %v2380 = vsub.s32 4, %v2379
      %v2381 = vrot.slane %v1108, %v2380
      %v2382 = vlaneseq
      %v2383 = vshrl.u32 %v2382, 7
      %v2384 = vsub.s32 4, %v2383
      %v2385 = vrot.slane %v1113, %v2384
      %v2386 = vlaneseq
      %v2387 = vshrl.u32 %v2386, 7
      %v2388 = vsub.s32 4, %v2387
      %v2389 = vrot.slane %v1118, %v2388
      %v2390 = vlaneseq
      %v2391 = vshrl.u32 %v2390, 7
      %v2392 = vsub.s32 4, %v2391
      %v2393 = vrot.slane %v1123, %v2392
      %v2394 = vlaneseq
      %v2395 = vshrl.u32 %v2394, 7
      %v2396 = vsub.s32 4, %v2395
      %v2397 = vrot.slane %v1128, %v2396
      %v2398 = vlaneseq
      %v2399 = vshrl.u32 %v2398, 7
      %v2400 = vsub.s32 4, %v2399
      %v2401 = vrot.slane %v1133, %v2400
      %v2402 = vlaneseq
      %v2403 = vshrl.u32 %v2402, 7
      %v2404 = vsub.s32 4, %v2403
      %v2405 = vrot.slane %v1138, %v2404
      %v2406 = vlaneseq
      %v2407 = vshrl.u32 %v2406, 7
      %v2408 = vsub.s32 4, %v2407
      %v2409 = vrot.slane %v1143, %v2408
      %v2410 = vlaneseq
      %v2411 = vshrl.u32 %v2410, 7
      %v2412 = vsub.s32 4, %v2411
      %v2413 = vrot.slane %v1148, %v2412
      %v2414 = vlaneseq
      %v2415 = vshrl.u32 %v2414, 7
      %v2416 = vsub.s32 4, %v2415
      %v2417 = vrot.slane %v1153, %v2416
      %v2418 = vlaneseq
      %v2419 = vshrl.u32 %v2418, 7
      %v2420 = vsub.s32 4, %v2419
      %v2421 = vrot.slane %v1158, %v2420
      %v2422 = vlaneseq
      %v2423 = vshrl.u32 %v2422, 7
      %v2424 = vsub.s32 4, %v2423
      %v2425 = vrot.slane %v1163, %v2424
      %v2426 = vlaneseq
      %v2427 = vshrl.u32 %v2426, 7
      %v2428 = vsub.s32 4, %v2427
      %v2429 = vrot.slane %v1168, %v2428
      %v2430 = vlaneseq
      %v2431 = vshrl.u32 %v2430, 7
      %v2432 = vsub.s32 4, %v2431
      %v2433 = vrot.slane %v1173, %v2432
      %v2434 = vlaneseq
      %v2435 = vshrl.u32 %v2434, 7
      %v2436 = vsub.s32 4, %v2435
      %v2437 = vrot.slane %v1178, %v2436
      %v2438 = vlaneseq
      %v2439 = vshrl.u32 %v2438, 7
      %v2440 = vsub.s32 4, %v2439
      %v2441 = vrot.slane %v1183, %v2440
      %v2442 = vlaneseq
      %v2443 = vshrl.u32 %v2442, 7
      %v2444 = vsub.s32 4, %v2443
      %v2445 = vrot.slane %v1188, %v2444
      %v2446 = vlaneseq
      %v2447 = vshrl.u32 %v2446, 7
      %v2448 = vsub.s32 4, %v2447
      %v2449 = vrot.slane %v1193, %v2448
      %v2450 = vadd.f32 %v1268, %v2325
      %v2451 = vadd.f32 %v1273, %v2329
      %v2452 = vadd.f32 %v1278, %v2333
      %v2453 = vadd.f32 %v1283, %v2337
      %v2454 = vadd.f32 %v1288, %v2341
      %v2455 = vadd.f32 %v1293, %v2345
      %v2456 = vadd.f32 %v1298, %v2349
      %v2457 = vadd.f32 %v1303, %v2353
      %v2458 = vadd.f32 %v1308, %v2357
      %v2459 = vadd.f32 %v1313, %v2361
      %v2460 = vadd.f32 %v1318, %v2365
      %v2461 = vadd.f32 %v1323, %v2369
      %v2462 = vadd.f32 %v1328, %v2373
      %v2463 = vadd.f32 %v1333, %v2377
      %v2464 = vadd.f32 %v1338, %v2381
      %v2465 = vadd.f32 %v1343, %v2385
      %v2466 = vadd.f32 %v1348, %v2389
      %v2467 = vadd.f32 %v1353, %v2393
      %v2468 = vadd.f32 %v1358, %v2397
      %v2469 = vadd.f32 %v1363, %v2401
      %v2470 = vadd.f32 %v1368, %v2405
      %v2471 = vadd.f32 %v1373, %v2409
      %v2472 = vadd.f32 %v1378, %v2413
      %v2473 = vadd.f32 %v1383, %v2417
      %v2474 = vadd.f32 %v1388, %v2421
      %v2475 = vadd.f32 %v1393, %v2425
      %v2476 = vadd.f32 %v1398, %v2429
      %v2477 = vadd.f32 %v1403, %v2433
      %v2478 = vadd.f32 %v1408, %v2437
      %v2479 = vadd.f32 %v1413, %v2441
      %v2480 = vadd.f32 %v1418, %v2445
      %v2481 = vadd.f32 %v1423, %v2449
      %v2482 = vmax.f32 %v2450, 0.0
      %v2483 = vmax.f32 %v2451, 0.0
      %v2484 = vmax.f32 %v2452, 0.0
      %v2485 = vmax.f32 %v2453, 0.0
      %v2486 = vmax.f32 %v2454, 0.0
      %v2487 = vmax.f32 %v2455, 0.0
      %v2488 = vmax.f32 %v2456, 0.0
      %v2489 = vmax.f32 %v2457, 0.0
      %v2490 = vmax.f32 %v2458, 0.0
      %v2491 = vmax.f32 %v2459, 0.0
      %v2492 = vmax.f32 %v2460, 0.0
      %v2493 = vmax.f32 %v2461, 0.0
      %v2494 = vmax.f32 %v2462, 0.0
      %v2495 = vmax.f32 %v2463, 0.0
      %v2496 = vmax.f32 %v2464, 0.0
      %v2497 = vmax.f32 %v2465, 0.0
      %v2498 = vmax.f32 %v2466, 0.0
      %v2499 = vmax.f32 %v2467, 0.0
      %v2500 = vmax.f32 %v2468, 0.0
      %v2501 = vmax.f32 %v2469, 0.0
      %v2502 = vmax.f32 %v2470, 0.0
      %v2503 = vmax.f32 %v2471, 0.0
      %v2504 = vmax.f32 %v2472, 0.0
      %v2505 = vmax.f32 %v2473, 0.0
      %v2506 = vmax.f32 %v2474, 0.0
      %v2507 = vmax.f32 %v2475, 0.0
      %v2508 = vmax.f32 %v2476, 0.0
      %v2509 = vmax.f32 %v2477, 0.0
      %v2510 = vmax.f32 %v2478, 0.0
      %v2511 = vmax.f32 %v2479, 0.0
      %v2512 = vmax.f32 %v2480, 0.0
      %v2513 = vmax.f32 %v2481, 0.0
      %v2514 = vadd.f32 %v2290, %v2482
      %v2515 = vadd.f32 %v2291, %v2483
      %v2516 = vadd.f32 %v2292, %v2484
      %v2517 = vadd.f32 %v2293, %v2485
      %v2518 = vadd.f32 %v2294, %v2486
      %v2519 = vadd.f32 %v2295, %v2487
      %v2520 = vadd.f32 %v2296, %v2488
      %v2521 = vadd.f32 %v2297, %v2489
      %v2522 = vadd.f32 %v2298, %v2490
      %v2523 = vadd.f32 %v2299, %v2491
      %v2524 = vadd.f32 %v2300, %v2492
      %v2525 = vadd.f32 %v2301, %v2493
      %v2526 = vadd.f32 %v2302, %v2494
      %v2527 = vadd.f32 %v2303, %v2495
      %v2528 = vadd.f32 %v2304, %v2496
      %v2529 = vadd.f32 %v2305, %v2497
      %v2530 = vadd.f32 %v2306, %v2498
      %v2531 = vadd.f32 %v2307, %v2499
      %v2532 = vadd.f32 %v2308, %v2500
      %v2533 = vadd.f32 %v2309, %v2501
      %v2534 = vadd.f32 %v2310, %v2502
      %v2535 = vadd.f32 %v2311, %v2503
      %v2536 = vadd.f32 %v2312, %v2504
      %v2537 = vadd.f32 %v2313, %v2505
      %v2538 = vadd.f32 %v2314, %v2506
      %v2539 = vadd.f32 %v2315, %v2507
      %v2540 = vadd.f32 %v2316, %v2508
      %v2541 = vadd.f32 %v2317, %v2509
      %v2542 = vadd.f32 %v2318, %v2510
      %v2543 = vadd.f32 %v2319, %v2511
      %v2544 = vadd.f32 %v2320, %v2512
      %v2545 = vadd.f32 %v2321, %v2513
      %v2546 = vlaneseq
      %v2547 = vshrl.u32 %v2546, 7
      %v2548 = vsub.s32 5, %v2547
      %v2549 = vrot.slane %v1038, %v2548
      %v2550 = vlaneseq
      %v2551 = vshrl.u32 %v2550, 7
      %v2552 = vsub.s32 5, %v2551
      %v2553 = vrot.slane %v1043, %v2552
      %v2554 = vlaneseq
      %v2555 = vshrl.u32 %v2554, 7
      %v2556 = vsub.s32 5, %v2555
      %v2557 = vrot.slane %v1048, %v2556
      %v2558 = vlaneseq
      %v2559 = vshrl.u32 %v2558, 7
      %v2560 = vsub.s32 5, %v2559
      %v2561 = vrot.slane %v1053, %v2560
      %v2562 = vlaneseq
      %v2563 = vshrl.u32 %v2562, 7
      %v2564 = vsub.s32 5, %v2563
      %v2565 = vrot.slane %v1058, %v2564
      %v2566 = vlaneseq
      %v2567 = vshrl.u32 %v2566, 7
      %v2568 = vsub.s32 5, %v2567
      %v2569 = vrot.slane %v1063, %v2568
      %v2570 = vlaneseq
      %v2571 = vshrl.u32 %v2570, 7
      %v2572 = vsub.s32 5, %v2571
      %v2573 = vrot.slane %v1068, %v2572
      %v2574 = vlaneseq
      %v2575 = vshrl.u32 %v2574, 7
      %v2576 = vsub.s32 5, %v2575
      %v2577 = vrot.slane %v1073, %v2576
      %v2578 = vlaneseq
      %v2579 = vshrl.u32 %v2578, 7
      %v2580 = vsub.s32 5, %v2579
      %v2581 = vrot.slane %v1078, %v2580
      %v2582 = vlaneseq
      %v2583 = vshrl.u32 %v2582, 7
      %v2584 = vsub.s32 5, %v2583
      %v2585 = vrot.slane %v1083, %v2584
      %v2586 = vlaneseq
      %v2587 = vshrl.u32 %v2586, 7
      %v2588 = vsub.s32 5, %v2587
      %v2589 = vrot.slane %v1088, %v2588
      %v2590 = vlaneseq
      %v2591 = vshrl.u32 %v2590, 7
      %v2592 = vsub.s32 5, %v2591
      %v2593 = vrot.slane %v1093, %v2592
      %v2594 = vlaneseq
      %v2595 = vshrl.u32 %v2594, 7
      %v2596 = vsub.s32 5, %v2595
      %v2597 = vrot.slane %v1098, %v2596
      %v2598 = vlaneseq
      %v2599 = vshrl.u32 %v2598, 7
      %v2600 = vsub.s32 5, %v2599
      %v2601 = vrot.slane %v1103, %v2600
      %v2602 = vlaneseq
      %v2603 = vshrl.u32 %v2602, 7
      %v2604 = vsub.s32 5, %v2603
      %v2605 = vrot.slane %v1108, %v2604
      %v2606 = vlaneseq
      %v2607 = vshrl.u32 %v2606, 7
      %v2608 = vsub.s32 5, %v2607
      %v2609 = vrot.slane %v1113, %v2608
      %v2610 = vlaneseq
      %v2611 = vshrl.u32 %v2610, 7
      %v2612 = vsub.s32 5, %v2611
      %v2613 = vrot.slane %v1118, %v2612
      %v2614 = vlaneseq
      %v2615 = vshrl.u32 %v2614, 7
      %v2616 = vsub.s32 5, %v2615
      %v2617 = vrot.slane %v1123, %v2616
      %v2618 = vlaneseq
      %v2619 = vshrl.u32 %v2618, 7
      %v2620 = vsub.s32 5, %v2619
      %v2621 = vrot.slane %v1128, %v2620
      %v2622 = vlaneseq
      %v2623 = vshrl.u32 %v2622, 7
      %v2624 = vsub.s32 5, %v2623
      %v2625 = vrot.slane %v1133, %v2624
      %v2626 = vlaneseq
      %v2627 = vshrl.u32 %v2626, 7
      %v2628 = vsub.s32 5, %v2627
      %v2629 = vrot.slane %v1138, %v2628
      %v2630 = vlaneseq
      %v2631 = vshrl.u32 %v2630, 7
      %v2632 = vsub.s32 5, %v2631
      %v2633 = vrot.slane %v1143, %v2632
      %v2634 = vlaneseq
      %v2635 = vshrl.u32 %v2634, 7
      %v2636 = vsub.s32 5, %v2635
      %v2637 = vrot.slane %v1148, %v2636
      %v2638 = vlaneseq
      %v2639 = vshrl.u32 %v2638, 7
      %v2640 = vsub.s32 5, %v2639
      %v2641 = vrot.slane %v1153, %v2640
      %v2642 = vlaneseq
      %v2643 = vshrl.u32 %v2642, 7
      %v2644 = vsub.s32 5, %v2643
      %v2645 = vrot.slane %v1158, %v2644
      %v2646 = vlaneseq
      %v2647 = vshrl.u32 %v2646, 7
      %v2648 = vsub.s32 5, %v2647
      %v2649 = vrot.slane %v1163, %v2648
      %v2650 = vlaneseq
      %v2651 = vshrl.u32 %v2650, 7
      %v2652 = vsub.s32 5, %v2651
      %v2653 = vrot.slane %v1168, %v2652
      %v2654 = vlaneseq
      %v2655 = vshrl.u32 %v2654, 7
      %v2656 = vsub.s32 5, %v2655
      %v2657 = vrot.slane %v1173, %v2656
      %v2658 = vlaneseq
      %v2659 = vshrl.u32 %v2658, 7
      %v2660 = vsub.s32 5, %v2659
      %v2661 = vrot.slane %v1178, %v2660
      %v2662 = vlaneseq
      %v2663 = vshrl.u32 %v2662, 7
      %v2664 = vsub.s32 5, %v2663
      %v2665 = vrot.slane %v1183, %v2664
      %v2666 = vlaneseq
      %v2667 = vshrl.u32 %v2666, 7
      %v2668 = vsub.s32 5, %v2667
      %v2669 = vrot.slane %v1188, %v2668
      %v2670 = vlaneseq
      %v2671 = vshrl.u32 %v2670, 7
      %v2672 = vsub.s32 5, %v2671
      %v2673 = vrot.slane %v1193, %v2672
      %v2674 = vadd.f32 %v1268, %v2549
      %v2675 = vadd.f32 %v1273, %v2553
      %v2676 = vadd.f32 %v1278, %v2557
      %v2677 = vadd.f32 %v1283, %v2561
      %v2678 = vadd.f32 %v1288, %v2565
      %v2679 = vadd.f32 %v1293, %v2569
      %v2680 = vadd.f32 %v1298, %v2573
      %v2681 = vadd.f32 %v1303, %v2577
      %v2682 = vadd.f32 %v1308, %v2581
      %v2683 = vadd.f32 %v1313, %v2585
      %v2684 = vadd.f32 %v1318, %v2589
      %v2685 = vadd.f32 %v1323, %v2593
      %v2686 = vadd.f32 %v1328, %v2597
      %v2687 = vadd.f32 %v1333, %v2601
      %v2688 = vadd.f32 %v1338, %v2605
      %v2689 = vadd.f32 %v1343, %v2609
      %v2690 = vadd.f32 %v1348, %v2613
      %v2691 = vadd.f32 %v1353, %v2617
      %v2692 = vadd.f32 %v1358, %v2621
      %v2693 = vadd.f32 %v1363, %v2625
      %v2694 = vadd.f32 %v1368, %v2629
      %v2695 = vadd.f32 %v1373, %v2633
      %v2696 = vadd.f32 %v1378, %v2637
      %v2697 = vadd.f32 %v1383, %v2641
      %v2698 = vadd.f32 %v1388, %v2645
      %v2699 = vadd.f32 %v1393, %v2649
      %v2700 = vadd.f32 %v1398, %v2653
      %v2701 = vadd.f32 %v1403, %v2657
      %v2702 = vadd.f32 %v1408, %v2661
      %v2703 = vadd.f32 %v1413, %v2665
      %v2704 = vadd.f32 %v1418, %v2669
      %v2705 = vadd.f32 %v1423, %v2673
      %v2706 = vmax.f32 %v2674, 0.0
      %v2707 = vmax.f32 %v2675, 0.0
      %v2708 = vmax.f32 %v2676, 0.0
      %v2709 = vmax.f32 %v2677, 0.0
      %v2710 = vmax.f32 %v2678, 0.0
      %v2711 = vmax.f32 %v2679, 0.0
      %v2712 = vmax.f32 %v2680, 0.0
      %v2713 = vmax.f32 %v2681, 0.0
      %v2714 = vmax.f32 %v2682, 0.0
      %v2715 = vmax.f32 %v2683, 0.0
      %v2716 = vmax.f32 %v2684, 0.0
      %v2717 = vmax.f32 %v2685, 0.0
      %v2718 = vmax.f32 %v2686, 0.0
      %v2719 = vmax.f32 %v2687, 0.0
      %v2720 = vmax.f32 %v2688, 0.0
      %v2721 = vmax.f32 %v2689, 0.0
      %v2722 = vmax.f32 %v2690, 0.0
      %v2723 = vmax.f32 %v2691, 0.0
      %v2724 = vmax.f32 %v2692, 0.0
      %v2725 = vmax.f32 %v2693, 0.0
      %v2726 = vmax.f32 %v2694, 0.0
      %v2727 = vmax.f32 %v2695, 0.0
      %v2728 = vmax.f32 %v2696, 0.0
      %v2729 = vmax.f32 %v2697, 0.0
      %v2730 = vmax.f32 %v2698, 0.0
      %v2731 = vmax.f32 %v2699, 0.0
      %v2732 = vmax.f32 %v2700, 0.0
      %v2733 = vmax.f32 %v2701, 0.0
      %v2734 = vmax.f32 %v2702, 0.0
      %v2735 = vmax.f32 %v2703, 0.0
      %v2736 = vmax.f32 %v2704, 0.0
      %v2737 = vmax.f32 %v2705, 0.0
      %v2738 = vadd.f32 %v2514, %v2706
      %v2739 = vadd.f32 %v2515, %v2707
      %v2740 = vadd.f32 %v2516, %v2708
      %v2741 = vadd.f32 %v2517, %v2709
      %v2742 = vadd.f32 %v2518, %v2710
      %v2743 = vadd.f32 %v2519, %v2711
      %v2744 = vadd.f32 %v2520, %v2712
      %v2745 = vadd.f32 %v2521, %v2713
      %v2746 = vadd.f32 %v2522, %v2714
      %v2747 = vadd.f32 %v2523, %v2715
      %v2748 = vadd.f32 %v2524, %v2716
      %v2749 = vadd.f32 %v2525, %v2717
      %v2750 = vadd.f32 %v2526, %v2718
      %v2751 = vadd.f32 %v2527, %v2719
      %v2752 = vadd.f32 %v2528, %v2720
      %v2753 = vadd.f32 %v2529, %v2721
      %v2754 = vadd.f32 %v2530, %v2722
      %v2755 = vadd.f32 %v2531, %v2723
      %v2756 = vadd.f32 %v2532, %v2724
      %v2757 = vadd.f32 %v2533, %v2725
      %v2758 = vadd.f32 %v2534, %v2726
      %v2759 = vadd.f32 %v2535, %v2727
      %v2760 = vadd.f32 %v2536, %v2728
      %v2761 = vadd.f32 %v2537, %v2729
      %v2762 = vadd.f32 %v2538, %v2730
      %v2763 = vadd.f32 %v2539, %v2731
      %v2764 = vadd.f32 %v2540, %v2732
      %v2765 = vadd.f32 %v2541, %v2733
      %v2766 = vadd.f32 %v2542, %v2734
      %v2767 = vadd.f32 %v2543, %v2735
      %v2768 = vadd.f32 %v2544, %v2736
      %v2769 = vadd.f32 %v2545, %v2737
      %v2770 = vlaneseq
      %v2771 = vshrl.u32 %v2770, 7
      %v2772 = vsub.s32 6, %v2771
      %v2773 = vrot.slane %v1038, %v2772
      %v2774 = vlaneseq
      %v2775 = vshrl.u32 %v2774, 7
      %v2776 = vsub.s32 6, %v2775
      %v2777 = vrot.slane %v1043, %v2776
      %v2778 = vlaneseq
      %v2779 = vshrl.u32 %v2778, 7
      %v2780 = vsub.s32 6, %v2779
      %v2781 = vrot.slane %v1048, %v2780
      %v2782 = vlaneseq
      %v2783 = vshrl.u32 %v2782, 7
      %v2784 = vsub.s32 6, %v2783
      %v2785 = vrot.slane %v1053, %v2784
      %v2786 = vlaneseq
      %v2787 = vshrl.u32 %v2786, 7
      %v2788 = vsub.s32 6, %v2787
      %v2789 = vrot.slane %v1058, %v2788
      %v2790 = vlaneseq
      %v2791 = vshrl.u32 %v2790, 7
      %v2792 = vsub.s32 6, %v2791
      %v2793 = vrot.slane %v1063, %v2792
      %v2794 = vlaneseq
      %v2795 = vshrl.u32 %v2794, 7
      %v2796 = vsub.s32 6, %v2795
      %v2797 = vrot.slane %v1068, %v2796
      %v2798 = vlaneseq
      %v2799 = vshrl.u32 %v2798, 7
      %v2800 = vsub.s32 6, %v2799
      %v2801 = vrot.slane %v1073, %v2800
      %v2802 = vlaneseq
      %v2803 = vshrl.u32 %v2802, 7
      %v2804 = vsub.s32 6, %v2803
      %v2805 = vrot.slane %v1078, %v2804
      %v2806 = vlaneseq
      %v2807 = vshrl.u32 %v2806, 7
      %v2808 = vsub.s32 6, %v2807
      %v2809 = vrot.slane %v1083, %v2808
      %v2810 = vlaneseq
      %v2811 = vshrl.u32 %v2810, 7
      %v2812 = vsub.s32 6, %v2811
      %v2813 = vrot.slane %v1088, %v2812
      %v2814 = vlaneseq
      %v2815 = vshrl.u32 %v2814, 7
      %v2816 = vsub.s32 6, %v2815
      %v2817 = vrot.slane %v1093, %v2816
      %v2818 = vlaneseq
      %v2819 = vshrl.u32 %v2818, 7
      %v2820 = vsub.s32 6, %v2819
      %v2821 = vrot.slane %v1098, %v2820
      %v2822 = vlaneseq
      %v2823 = vshrl.u32 %v2822, 7
      %v2824 = vsub.s32 6, %v2823
      %v2825 = vrot.slane %v1103, %v2824
      %v2826 = vlaneseq
      %v2827 = vshrl.u32 %v2826, 7
      %v2828 = vsub.s32 6, %v2827
      %v2829 = vrot.slane %v1108, %v2828
      %v2830 = vlaneseq
      %v2831 = vshrl.u32 %v2830, 7
      %v2832 = vsub.s32 6, %v2831
      %v2833 = vrot.slane %v1113, %v2832
      %v2834 = vlaneseq
      %v2835 = vshrl.u32 %v2834, 7
      %v2836 = vsub.s32 6, %v2835
      %v2837 = vrot.slane %v1118, %v2836
      %v2838 = vlaneseq
      %v2839 = vshrl.u32 %v2838, 7
      %v2840 = vsub.s32 6, %v2839
      %v2841 = vrot.slane %v1123, %v2840
      %v2842 = vlaneseq
      %v2843 = vshrl.u32 %v2842, 7
      %v2844 = vsub.s32 6, %v2843
      %v2845 = vrot.slane %v1128, %v2844
      %v2846 = vlaneseq
      %v2847 = vshrl.u32 %v2846, 7
      %v2848 = vsub.s32 6, %v2847
      %v2849 = vrot.slane %v1133, %v2848
      %v2850 = vlaneseq
      %v2851 = vshrl.u32 %v2850, 7
      %v2852 = vsub.s32 6, %v2851
      %v2853 = vrot.slane %v1138, %v2852
      %v2854 = vlaneseq
      %v2855 = vshrl.u32 %v2854, 7
      %v2856 = vsub.s32 6, %v2855
      %v2857 = vrot.slane %v1143, %v2856
      %v2858 = vlaneseq
      %v2859 = vshrl.u32 %v2858, 7
      %v2860 = vsub.s32 6, %v2859
      %v2861 = vrot.slane %v1148, %v2860
      %v2862 = vlaneseq
      %v2863 = vshrl.u32 %v2862, 7
      %v2864 = vsub.s32 6, %v2863
      %v2865 = vrot.slane %v1153, %v2864
      %v2866 = vlaneseq
      %v2867 = vshrl.u32 %v2866, 7
      %v2868 = vsub.s32 6, %v2867
      %v2869 = vrot.slane %v1158, %v2868
      %v2870 = vlaneseq
      %v2871 = vshrl.u32 %v2870, 7
      %v2872 = vsub.s32 6, %v2871
      %v2873 = vrot.slane %v1163, %v2872
      %v2874 = vlaneseq
      %v2875 = vshrl.u32 %v2874, 7
      %v2876 = vsub.s32 6, %v2875
      %v2877 = vrot.slane %v1168, %v2876
      %v2878 = vlaneseq
      %v2879 = vshrl.u32 %v2878, 7
      %v2880 = vsub.s32 6, %v2879
      %v2881 = vrot.slane %v1173, %v2880
      %v2882 = vlaneseq
      %v2883 = vshrl.u32 %v2882, 7
      %v2884 = vsub.s32 6, %v2883
      %v2885 = vrot.slane %v1178, %v2884
      %v2886 = vlaneseq
      %v2887 = vshrl.u32 %v2886, 7
      %v2888 = vsub.s32 6, %v2887
      %v2889 = vrot.slane %v1183, %v2888
      %v2890 = vlaneseq
      %v2891 = vshrl.u32 %v2890, 7
      %v2892 = vsub.s32 6, %v2891
      %v2893 = vrot.slane %v1188, %v2892
      %v2894 = vlaneseq
      %v2895 = vshrl.u32 %v2894, 7
      %v2896 = vsub.s32 6, %v2895
      %v2897 = vrot.slane %v1193, %v2896
      %v2898 = vadd.f32 %v1268, %v2773
      %v2899 = vadd.f32 %v1273, %v2777
      %v2900 = vadd.f32 %v1278, %v2781
      %v2901 = vadd.f32 %v1283, %v2785
      %v2902 = vadd.f32 %v1288, %v2789
      %v2903 = vadd.f32 %v1293, %v2793
      %v2904 = vadd.f32 %v1298, %v2797
      %v2905 = vadd.f32 %v1303, %v2801
      %v2906 = vadd.f32 %v1308, %v2805
      %v2907 = vadd.f32 %v1313, %v2809
      %v2908 = vadd.f32 %v1318, %v2813
      %v2909 = vadd.f32 %v1323, %v2817
      %v2910 = vadd.f32 %v1328, %v2821
      %v2911 = vadd.f32 %v1333, %v2825
      %v2912 = vadd.f32 %v1338, %v2829
      %v2913 = vadd.f32 %v1343, %v2833
      %v2914 = vadd.f32 %v1348, %v2837
      %v2915 = vadd.f32 %v1353, %v2841
      %v2916 = vadd.f32 %v1358, %v2845
      %v2917 = vadd.f32 %v1363, %v2849
      %v2918 = vadd.f32 %v1368, %v2853
      %v2919 = vadd.f32 %v1373, %v2857
      %v2920 = vadd.f32 %v1378, %v2861
      %v2921 = vadd.f32 %v1383, %v2865
      %v2922 = vadd.f32 %v1388, %v2869
      %v2923 = vadd.f32 %v1393, %v2873
      %v2924 = vadd.f32 %v1398, %v2877
      %v2925 = vadd.f32 %v1403, %v2881
      %v2926 = vadd.f32 %v1408, %v2885
      %v2927 = vadd.f32 %v1413, %v2889
      %v2928 = vadd.f32 %v1418, %v2893
      %v2929 = vadd.f32 %v1423, %v2897
      %v2930 = vmax.f32 %v2898, 0.0
      %v2931 = vmax.f32 %v2899, 0.0
      %v2932 = vmax.f32 %v2900, 0.0
      %v2933 = vmax.f32 %v2901, 0.0
      %v2934 = vmax.f32 %v2902, 0.0
      %v2935 = vmax.f32 %v2903, 0.0
      %v2936 = vmax.f32 %v2904, 0.0
      %v2937 = vmax.f32 %v2905, 0.0
      %v2938 = vmax.f32 %v2906, 0.0
      %v2939 = vmax.f32 %v2907, 0.0
      %v2940 = vmax.f32 %v2908, 0.0
      %v2941 = vmax.f32 %v2909, 0.0
      %v2942 = vmax.f32 %v2910, 0.0
      %v2943 = vmax.f32 %v2911, 0.0
      %v2944 = vmax.f32 %v2912, 0.0
      %v2945 = vmax.f32 %v2913, 0.0
      %v2946 = vmax.f32 %v2914, 0.0
      %v2947 = vmax.f32 %v2915, 0.0
      %v2948 = vmax.f32 %v2916, 0.0
      %v2949 = vmax.f32 %v2917, 0.0
      %v2950 = vmax.f32 %v2918, 0.0
      %v2951 = vmax.f32 %v2919, 0.0
      %v2952 = vmax.f32 %v2920, 0.0
      %v2953 = vmax.f32 %v2921, 0.0
      %v2954 = vmax.f32 %v2922, 0.0
      %v2955 = vmax.f32 %v2923, 0.0
      %v2956 = vmax.f32 %v2924, 0.0
      %v2957 = vmax.f32 %v2925, 0.0
      %v2958 = vmax.f32 %v2926, 0.0
      %v2959 = vmax.f32 %v2927, 0.0
      %v2960 = vmax.f32 %v2928, 0.0
      %v2961 = vmax.f32 %v2929, 0.0
      %v2962 = vadd.f32 %v2738, %v2930
      %v2963 = vadd.f32 %v2739, %v2931
      %v2964 = vadd.f32 %v2740, %v2932
      %v2965 = vadd.f32 %v2741, %v2933
      %v2966 = vadd.f32 %v2742, %v2934
      %v2967 = vadd.f32 %v2743, %v2935
      %v2968 = vadd.f32 %v2744, %v2936
      %v2969 = vadd.f32 %v2745, %v2937
      %v2970 = vadd.f32 %v2746, %v2938
      %v2971 = vadd.f32 %v2747, %v2939
      %v2972 = vadd.f32 %v2748, %v2940
      %v2973 = vadd.f32 %v2749, %v2941
      %v2974 = vadd.f32 %v2750, %v2942
      %v2975 = vadd.f32 %v2751, %v2943
      %v2976 = vadd.f32 %v2752, %v2944
      %v2977 = vadd.f32 %v2753, %v2945
      %v2978 = vadd.f32 %v2754, %v2946
      %v2979 = vadd.f32 %v2755, %v2947
      %v2980 = vadd.f32 %v2756, %v2948
      %v2981 = vadd.f32 %v2757, %v2949
      %v2982 = vadd.f32 %v2758, %v2950
      %v2983 = vadd.f32 %v2759, %v2951
      %v2984 = vadd.f32 %v2760, %v2952
      %v2985 = vadd.f32 %v2761, %v2953
      %v2986 = vadd.f32 %v2762, %v2954
      %v2987 = vadd.f32 %v2763, %v2955
      %v2988 = vadd.f32 %v2764, %v2956
      %v2989 = vadd.f32 %v2765, %v2957
      %v2990 = vadd.f32 %v2766, %v2958
      %v2991 = vadd.f32 %v2767, %v2959
      %v2992 = vadd.f32 %v2768, %v2960
      %v2993 = vadd.f32 %v2769, %v2961
      %v2994 = vlaneseq
      %v2995 = vshrl.u32 %v2994, 7
      %v2996 = vsub.s32 7, %v2995
      %v2997 = vrot.slane %v1038, %v2996
      %v2998 = vlaneseq
      %v2999 = vshrl.u32 %v2998, 7
      %v3000 = vsub.s32 7, %v2999
      %v3001 = vrot.slane %v1043, %v3000
      %v3002 = vlaneseq
      %v3003 = vshrl.u32 %v3002, 7
      %v3004 = vsub.s32 7, %v3003
      %v3005 = vrot.slane %v1048, %v3004
      %v3006 = vlaneseq
      %v3007 = vshrl.u32 %v3006, 7
      %v3008 = vsub.s32 7, %v3007
      %v3009 = vrot.slane %v1053, %v3008
      %v3010 = vlaneseq
      %v3011 = vshrl.u32 %v3010, 7
      %v3012 = vsub.s32 7, %v3011
      %v3013 = vrot.slane %v1058, %v3012
      %v3014 = vlaneseq
      %v3015 = vshrl.u32 %v3014, 7
      %v3016 = vsub.s32 7, %v3015
      %v3017 = vrot.slane %v1063, %v3016
      %v3018 = vlaneseq
      %v3019 = vshrl.u32 %v3018, 7
      %v3020 = vsub.s32 7, %v3019
      %v3021 = vrot.slane %v1068, %v3020
      %v3022 = vlaneseq
      %v3023 = vshrl.u32 %v3022, 7
      %v3024 = vsub.s32 7, %v3023
      %v3025 = vrot.slane %v1073, %v3024
      %v3026 = vlaneseq
      %v3027 = vshrl.u32 %v3026, 7
      %v3028 = vsub.s32 7, %v3027
      %v3029 = vrot.slane %v1078, %v3028
      %v3030 = vlaneseq
      %v3031 = vshrl.u32 %v3030, 7
      %v3032 = vsub.s32 7, %v3031
      %v3033 = vrot.slane %v1083, %v3032
      %v3034 = vlaneseq
      %v3035 = vshrl.u32 %v3034, 7
      %v3036 = vsub.s32 7, %v3035
      %v3037 = vrot.slane %v1088, %v3036
      %v3038 = vlaneseq
      %v3039 = vshrl.u32 %v3038, 7
      %v3040 = vsub.s32 7, %v3039
      %v3041 = vrot.slane %v1093, %v3040
      %v3042 = vlaneseq
      %v3043 = vshrl.u32 %v3042, 7
      %v3044 = vsub.s32 7, %v3043
      %v3045 = vrot.slane %v1098, %v3044
      %v3046 = vlaneseq
      %v3047 = vshrl.u32 %v3046, 7
      %v3048 = vsub.s32 7, %v3047
      %v3049 = vrot.slane %v1103, %v3048
      %v3050 = vlaneseq
      %v3051 = vshrl.u32 %v3050, 7
      %v3052 = vsub.s32 7, %v3051
      %v3053 = vrot.slane %v1108, %v3052
      %v3054 = vlaneseq
      %v3055 = vshrl.u32 %v3054, 7
      %v3056 = vsub.s32 7, %v3055
      %v3057 = vrot.slane %v1113, %v3056
      %v3058 = vlaneseq
      %v3059 = vshrl.u32 %v3058, 7
      %v3060 = vsub.s32 7, %v3059
      %v3061 = vrot.slane %v1118, %v3060
      %v3062 = vlaneseq
      %v3063 = vshrl.u32 %v3062, 7
      %v3064 = vsub.s32 7, %v3063
      %v3065 = vrot.slane %v1123, %v3064
      %v3066 = vlaneseq
      %v3067 = vshrl.u32 %v3066, 7
      %v3068 = vsub.s32 7, %v3067
      %v3069 = vrot.slane %v1128, %v3068
      %v3070 = vlaneseq
      %v3071 = vshrl.u32 %v3070, 7
      %v3072 = vsub.s32 7, %v3071
      %v3073 = vrot.slane %v1133, %v3072
      %v3074 = vlaneseq
      %v3075 = vshrl.u32 %v3074, 7
      %v3076 = vsub.s32 7, %v3075
      %v3077 = vrot.slane %v1138, %v3076
      %v3078 = vlaneseq
      %v3079 = vshrl.u32 %v3078, 7
      %v3080 = vsub.s32 7, %v3079
      %v3081 = vrot.slane %v1143, %v3080
      %v3082 = vlaneseq
      %v3083 = vshrl.u32 %v3082, 7
      %v3084 = vsub.s32 7, %v3083
      %v3085 = vrot.slane %v1148, %v3084
      %v3086 = vlaneseq
      %v3087 = vshrl.u32 %v3086, 7
      %v3088 = vsub.s32 7, %v3087
      %v3089 = vrot.slane %v1153, %v3088
      %v3090 = vlaneseq
      %v3091 = vshrl.u32 %v3090, 7
      %v3092 = vsub.s32 7, %v3091
      %v3093 = vrot.slane %v1158, %v3092
      %v3094 = vlaneseq
      %v3095 = vshrl.u32 %v3094, 7
      %v3096 = vsub.s32 7, %v3095
      %v3097 = vrot.slane %v1163, %v3096
      %v3098 = vlaneseq
      %v3099 = vshrl.u32 %v3098, 7
      %v3100 = vsub.s32 7, %v3099
      %v3101 = vrot.slane %v1168, %v3100
      %v3102 = vlaneseq
      %v3103 = vshrl.u32 %v3102, 7
      %v3104 = vsub.s32 7, %v3103
      %v3105 = vrot.slane %v1173, %v3104
      %v3106 = vlaneseq
      %v3107 = vshrl.u32 %v3106, 7
      %v3108 = vsub.s32 7, %v3107
      %v3109 = vrot.slane %v1178, %v3108
      %v3110 = vlaneseq
      %v3111 = vshrl.u32 %v3110, 7
      %v3112 = vsub.s32 7, %v3111
      %v3113 = vrot.slane %v1183, %v3112
      %v3114 = vlaneseq
      %v3115 = vshrl.u32 %v3114, 7
      %v3116 = vsub.s32 7, %v3115
      %v3117 = vrot.slane %v1188, %v3116
      %v3118 = vlaneseq
      %v3119 = vshrl.u32 %v3118, 7
      %v3120 = vsub.s32 7, %v3119
      %v3121 = vrot.slane %v1193, %v3120
      %v3122 = vadd.f32 %v1268, %v2997
      %v3123 = vadd.f32 %v1273, %v3001
      %v3124 = vadd.f32 %v1278, %v3005
      %v3125 = vadd.f32 %v1283, %v3009
      %v3126 = vadd.f32 %v1288, %v3013
      %v3127 = vadd.f32 %v1293, %v3017
      %v3128 = vadd.f32 %v1298, %v3021
      %v3129 = vadd.f32 %v1303, %v3025
      %v3130 = vadd.f32 %v1308, %v3029
      %v3131 = vadd.f32 %v1313, %v3033
      %v3132 = vadd.f32 %v1318, %v3037
      %v3133 = vadd.f32 %v1323, %v3041
      %v3134 = vadd.f32 %v1328, %v3045
      %v3135 = vadd.f32 %v1333, %v3049
      %v3136 = vadd.f32 %v1338, %v3053
      %v3137 = vadd.f32 %v1343, %v3057
      %v3138 = vadd.f32 %v1348, %v3061
      %v3139 = vadd.f32 %v1353, %v3065
      %v3140 = vadd.f32 %v1358, %v3069
      %v3141 = vadd.f32 %v1363, %v3073
      %v3142 = vadd.f32 %v1368, %v3077
      %v3143 = vadd.f32 %v1373, %v3081
      %v3144 = vadd.f32 %v1378, %v3085
      %v3145 = vadd.f32 %v1383, %v3089
      %v3146 = vadd.f32 %v1388, %v3093
      %v3147 = vadd.f32 %v1393, %v3097
      %v3148 = vadd.f32 %v1398, %v3101
      %v3149 = vadd.f32 %v1403, %v3105
      %v3150 = vadd.f32 %v1408, %v3109
      %v3151 = vadd.f32 %v1413, %v3113
      %v3152 = vadd.f32 %v1418, %v3117
      %v3153 = vadd.f32 %v1423, %v3121
      %v3154 = vmax.f32 %v3122, 0.0
      %v3155 = vmax.f32 %v3123, 0.0
      %v3156 = vmax.f32 %v3124, 0.0
      %v3157 = vmax.f32 %v3125, 0.0
      %v3158 = vmax.f32 %v3126, 0.0
      %v3159 = vmax.f32 %v3127, 0.0
      %v3160 = vmax.f32 %v3128, 0.0
      %v3161 = vmax.f32 %v3129, 0.0
      %v3162 = vmax.f32 %v3130, 0.0
      %v3163 = vmax.f32 %v3131, 0.0
      %v3164 = vmax.f32 %v3132, 0.0
      %v3165 = vmax.f32 %v3133, 0.0
      %v3166 = vmax.f32 %v3134, 0.0
      %v3167 = vmax.f32 %v3135, 0.0
      %v3168 = vmax.f32 %v3136, 0.0
      %v3169 = vmax.f32 %v3137, 0.0
      %v3170 = vmax.f32 %v3138, 0.0
      %v3171 = vmax.f32 %v3139, 0.0
      %v3172 = vmax.f32 %v3140, 0.0
      %v3173 = vmax.f32 %v3141, 0.0
      %v3174 = vmax.f32 %v3142, 0.0
      %v3175 = vmax.f32 %v3143, 0.0
      %v3176 = vmax.f32 %v3144, 0.0
      %v3177 = vmax.f32 %v3145, 0.0
      %v3178 = vmax.f32 %v3146, 0.0
      %v3179 = vmax.f32 %v3147, 0.0
      %v3180 = vmax.f32 %v3148, 0.0
      %v3181 = vmax.f32 %v3149, 0.0
      %v3182 = vmax.f32 %v3150, 0.0
      %v3183 = vmax.f32 %v3151, 0.0
      %v3184 = vmax.f32 %v3152, 0.0
      %v3185 = vmax.f32 %v3153, 0.0
      %v3186 = vadd.f32 %v2962, %v3154
      %v3187 = vadd.f32 %v2963, %v3155
      %v3188 = vadd.f32 %v2964, %v3156
      %v3189 = vadd.f32 %v2965, %v3157
      %v3190 = vadd.f32 %v2966, %v3158
      %v3191 = vadd.f32 %v2967, %v3159
      %v3192 = vadd.f32 %v2968, %v3160
      %v3193 = vadd.f32 %v2969, %v3161
      %v3194 = vadd.f32 %v2970, %v3162
      %v3195 = vadd.f32 %v2971, %v3163
      %v3196 = vadd.f32 %v2972, %v3164
      %v3197 = vadd.f32 %v2973, %v3165
      %v3198 = vadd.f32 %v2974, %v3166
      %v3199 = vadd.f32 %v2975, %v3167
      %v3200 = vadd.f32 %v2976, %v3168
      %v3201 = vadd.f32 %v2977, %v3169
      %v3202 = vadd.f32 %v2978, %v3170
      %v3203 = vadd.f32 %v2979, %v3171
      %v3204 = vadd.f32 %v2980, %v3172
      %v3205 = vadd.f32 %v2981, %v3173
      %v3206 = vadd.f32 %v2982, %v3174
      %v3207 = vadd.f32 %v2983, %v3175
      %v3208 = vadd.f32 %v2984, %v3176
      %v3209 = vadd.f32 %v2985, %v3177
      %v3210 = vadd.f32 %v2986, %v3178
      %v3211 = vadd.f32 %v2987, %v3179
      %v3212 = vadd.f32 %v2988, %v3180
      %v3213 = vadd.f32 %v2989, %v3181
      %v3214 = vadd.f32 %v2990, %v3182
      %v3215 = vadd.f32 %v2991, %v3183
      %v3216 = vadd.f32 %v2992, %v3184
      %v3217 = vadd.f32 %v2993, %v3185
      %v3218 = vadd.f32 %v1268, %v1038
      %v3219 = vadd.f32 %v1273, %v1043
      %v3220 = vadd.f32 %v1278, %v1048
      %v3221 = vadd.f32 %v1283, %v1053
      %v3222 = vadd.f32 %v1288, %v1058
      %v3223 = vadd.f32 %v1293, %v1063
      %v3224 = vadd.f32 %v1298, %v1068
      %v3225 = vadd.f32 %v1303, %v1073
      %v3226 = vadd.f32 %v1308, %v1078
      %v3227 = vadd.f32 %v1313, %v1083
      %v3228 = vadd.f32 %v1318, %v1088
      %v3229 = vadd.f32 %v1323, %v1093
      %v3230 = vadd.f32 %v1328, %v1098
      %v3231 = vadd.f32 %v1333, %v1103
      %v3232 = vadd.f32 %v1338, %v1108
      %v3233 = vadd.f32 %v1343, %v1113
      %v3234 = vadd.f32 %v1348, %v1118
      %v3235 = vadd.f32 %v1353, %v1123
      %v3236 = vadd.f32 %v1358, %v1128
      %v3237 = vadd.f32 %v1363, %v1133
      %v3238 = vadd.f32 %v1368, %v1138
      %v3239 = vadd.f32 %v1373, %v1143
      %v3240 = vadd.f32 %v1378, %v1148
      %v3241 = vadd.f32 %v1383, %v1153
      %v3242 = vadd.f32 %v1388, %v1158
      %v3243 = vadd.f32 %v1393, %v1163
      %v3244 = vadd.f32 %v1398, %v1168
      %v3245 = vadd.f32 %v1403, %v1173
      %v3246 = vadd.f32 %v1408, %v1178
      %v3247 = vadd.f32 %v1413, %v1183
      %v3248 = vadd.f32 %v1418, %v1188
      %v3249 = vadd.f32 %v1423, %v1193
      %v3250 = vmax.f32 %v3218, 0.0
      %v3251 = vmax.f32 %v3219, 0.0
      %v3252 = vmax.f32 %v3220, 0.0
      %v3253 = vmax.f32 %v3221, 0.0
      %v3254 = vmax.f32 %v3222, 0.0
      %v3255 = vmax.f32 %v3223, 0.0
      %v3256 = vmax.f32 %v3224, 0.0
      %v3257 = vmax.f32 %v3225, 0.0
      %v3258 = vmax.f32 %v3226, 0.0
      %v3259 = vmax.f32 %v3227, 0.0
      %v3260 = vmax.f32 %v3228, 0.0
      %v3261 = vmax.f32 %v3229, 0.0
      %v3262 = vmax.f32 %v3230, 0.0
      %v3263 = vmax.f32 %v3231, 0.0
      %v3264 = vmax.f32 %v3232, 0.0
      %v3265 = vmax.f32 %v3233, 0.0
      %v3266 = vmax.f32 %v3234, 0.0
      %v3267 = vmax.f32 %v3235, 0.0
      %v3268 = vmax.f32 %v3236, 0.0
      %v3269 = vmax.f32 %v3237, 0.0
      %v3270 = vmax.f32 %v3238, 0.0
      %v3271 = vmax.f32 %v3239, 0.0
      %v3272 = vmax.f32 %v3240, 0.0
      %v3273 = vmax.f32 %v3241, 0.0
      %v3274 = vmax.f32 %v3242, 0.0
      %v3275 = vmax.f32 %v3243, 0.0
      %v3276 = vmax.f32 %v3244, 0.0
      %v3277 = vmax.f32 %v3245, 0.0
      %v3278 = vmax.f32 %v3246, 0.0
      %v3279 = vmax.f32 %v3247, 0.0
      %v3280 = vmax.f32 %v3248, 0.0
      %v3281 = vmax.f32 %v3249, 0.0
      %v3282 = vsub.f32 %v3186, %v3250
      %v3283 = vsub.f32 %v3187, %v3251
      %v3284 = vsub.f32 %v3188, %v3252
      %v3285 = vsub.f32 %v3189, %v3253
      %v3286 = vsub.f32 %v3190, %v3254
      %v3287 = vsub.f32 %v3191, %v3255
      %v3288 = vsub.f32 %v3192, %v3256
      %v3289 = vsub.f32 %v3193, %v3257
      %v3290 = vsub.f32 %v3194, %v3258
      %v3291 = vsub.f32 %v3195, %v3259
      %v3292 = vsub.f32 %v3196, %v3260
      %v3293 = vsub.f32 %v3197, %v3261
      %v3294 = vsub.f32 %v3198, %v3262
      %v3295 = vsub.f32 %v3199, %v3263
      %v3296 = vsub.f32 %v3200, %v3264
      %v3297 = vsub.f32 %v3201, %v3265
      %v3298 = vsub.f32 %v3202, %v3266
      %v3299 = vsub.f32 %v3203, %v3267
      %v3300 = vsub.f32 %v3204, %v3268
      %v3301 = vsub.f32 %v3205, %v3269
      %v3302 = vsub.f32 %v3206, %v3270
      %v3303 = vsub.f32 %v3207, %v3271
      %v3304 = vsub.f32 %v3208, %v3272
      %v3305 = vsub.f32 %v3209, %v3273
      %v3306 = vsub.f32 %v3210, %v3274
      %v3307 = vsub.f32 %v3211, %v3275
      %v3308 = vsub.f32 %v3212, %v3276
      %v3309 = vsub.f32 %v3213, %v3277
      %v3310 = vsub.f32 %v3214, %v3278
      %v3311 = vsub.f32 %v3215, %v3279
      %v3312 = vsub.f32 %v3216, %v3280
      %v3313 = vsub.f32 %v3217, %v3281
      %v3314 = vmul.f32 %v3282, 0.14285715
      %v3315 = vmul.f32 %v3283, 0.14285715
      %v3316 = vmul.f32 %v3284, 0.14285715
      %v3317 = vmul.f32 %v3285, 0.14285715
      %v3318 = vmul.f32 %v3286, 0.14285715
      %v3319 = vmul.f32 %v3287, 0.14285715
      %v3320 = vmul.f32 %v3288, 0.14285715
      %v3321 = vmul.f32 %v3289, 0.14285715
      %v3322 = vmul.f32 %v3290, 0.14285715
      %v3323 = vmul.f32 %v3291, 0.14285715
      %v3324 = vmul.f32 %v3292, 0.14285715
      %v3325 = vmul.f32 %v3293, 0.14285715
      %v3326 = vmul.f32 %v3294, 0.14285715
      %v3327 = vmul.f32 %v3295, 0.14285715
      %v3328 = vmul.f32 %v3296, 0.14285715
      %v3329 = vmul.f32 %v3297, 0.14285715
      %v3330 = vmul.f32 %v3298, 0.14285715
      %v3331 = vmul.f32 %v3299, 0.14285715
      %v3332 = vmul.f32 %v3300, 0.14285715
      %v3333 = vmul.f32 %v3301, 0.14285715
      %v3334 = vmul.f32 %v3302, 0.14285715
      %v3335 = vmul.f32 %v3303, 0.14285715
      %v3336 = vmul.f32 %v3304, 0.14285715
      %v3337 = vmul.f32 %v3305, 0.14285715
      %v3338 = vmul.f32 %v3306, 0.14285715
      %v3339 = vmul.f32 %v3307, 0.14285715
      %v3340 = vmul.f32 %v3308, 0.14285715
      %v3341 = vmul.f32 %v3309, 0.14285715
      %v3342 = vmul.f32 %v3310, 0.14285715
      %v3343 = vmul.f32 %v3311, 0.14285715
      %v3344 = vmul.f32 %v3312, 0.14285715
      %v3345 = vmul.f32 %v3313, 0.14285715
      %v3346 = vld [vmem:[%s1 + $0x68] sm:$0xff]
      %v3347 = vld [vmem:[%s1 + $0x70] sm:$0xff]
      %v3348 = vld [vmem:[%s1 + $0x78] sm:$0xff]
      %v3349 = vld [vmem:[%s1 + $0x80] sm:$0xff]
      %v3350 = vld [vmem:[%s1 + $0x88] sm:$0x1]
      %v3351 = vlaneseq
      %v3352 = vshrl.u32 %v3351, 7
      %v3353 = vsub.s32 0, %v3352
      %v3354 = vrot.slane %v3350, %v3353
      %v3356 = vsel %vm549, %v3314, 0
      %v3359 = vsel %vm549, %v3315, 0
      %v3362 = vsel %vm549, %v3316, 0
      %v3365 = vsel %vm549, %v3317, 0
      %v3368 = vsel %vm549, %v3318, 0
      %v3371 = vsel %vm549, %v3319, 0
      %v3374 = vsel %vm549, %v3320, 0
      %v3377 = vsel %vm549, %v3321, 0
      %v3380 = vsel %vm549, %v3322, 0
      %v3383 = vsel %vm549, %v3323, 0
      %v3386 = vsel %vm549, %v3324, 0
      %v3389 = vsel %vm549, %v3325, 0
      %v3392 = vsel %vm549, %v3326, 0
      %v3395 = vsel %vm549, %v3327, 0
      %v3398 = vsel %vm549, %v3328, 0
      %v3401 = vsel %vm549, %v3329, 0
      %v3404 = vsel %vm549, %v3330, 0
      %v3407 = vsel %vm549, %v3331, 0
      %v3410 = vsel %vm549, %v3332, 0
      %v3413 = vsel %vm549, %v3333, 0
      %v3416 = vsel %vm549, %v3334, 0
      %v3419 = vsel %vm549, %v3335, 0
      %v3422 = vsel %vm549, %v3336, 0
      %v3425 = vsel %vm549, %v3337, 0
      %v3428 = vsel %vm549, %v3338, 0
      %v3431 = vsel %vm549, %v3339, 0
      %v3434 = vsel %vm549, %v3340, 0
      %v3437 = vsel %vm549, %v3341, 0
      %v3440 = vsel %vm549, %v3342, 0
      %v3443 = vsel %vm549, %v3343, 0
      %v3446 = vsel %vm549, %v3344, 0
      %v3449 = vsel %vm549, %v3345, 0
      %3451 = vmatprep.subr.mxu0 0.0
      %3452 = vmatpush1.msra.mxu0 0.0
      %3453 = vmatprep.subr.mxu0 0.0
      %3454 = vmatpush1.msra.mxu0 0.0
      %3455 = vmatprep.subr.mxu0 0.0
      %3456 = vmatpush1.msra.mxu0 0.0
      %3457 = vmatprep.subr.mxu0 0.0
      %3458 = vmatpush1.msra.mxu0 0.0
      %3459 = vmatprep.subr.mxu0 0.0
      %3460 = vmatpush1.msra.mxu0 0.0
      %3461 = vmatprep.subr.mxu0 0.0
      %3462 = vmatpush1.msra.mxu0 0.0
      %3463 = vmatprep.subr.mxu0 0.0
      %3464 = vmatpush1.msra.mxu0 0.0
      %3465 = vmatprep.subr.mxu0 0.0
      %3466 = vmatpush1.msra.mxu0 0.0
      %3467 = vmatprep.subr.mxu0 0.0
      %3468 = vmatpush1.msra.mxu0 0.0
      %3469 = vmatprep.subr.mxu0 0.0
      %3470 = vmatpush1.msra.mxu0 0.0
      %3471 = vmatprep.subr.mxu0 0.0
      %3472 = vmatpush1.msra.mxu0 0.0
      %3473 = vmatprep.subr.mxu0 0.0
      %3474 = vmatpush1.msra.mxu0 0.0
      %3475 = vmatprep.subr.mxu0 0.0
      %3476 = vmatpush1.msra.mxu0 %v3349
      %3477 = vmatprep.subr.mxu0 0.0
      %3478 = vmatpush1.msra.mxu0 %v3348
      %3479 = vmatprep.subr.mxu0 0.0
      %3480 = vmatpush1.msra.mxu0 %v3347
      %3481 = vmatprep.subr.mxu0 0.0
      %3482 = vmatpush1.msra.mxu0 %v3346
      %3483 = vmatprep.subr.mxu0 0.0
      %3484 = vmatpush2.msra.mxu0 0.0
      %3485 = vmatprep.subr.mxu0 0.0
      %3486 = vmatpush2.msra.mxu0 0.0
      %3487 = vmatprep.subr.mxu0 0.0
      %3488 = vmatpush2.msra.mxu0 0.0
      %3489 = vmatprep.subr.mxu0 0.0
      %3490 = vmatpush2.msra.mxu0 0.0
      %3491 = vmatprep.subr.mxu0 0.0
      %3492 = vmatpush2.msra.mxu0 0.0
      %3493 = vmatprep.subr.mxu0 0.0
      %3494 = vmatpush2.msra.mxu0 0.0
      %3495 = vmatprep.subr.mxu0 0.0
      %3496 = vmatpush2.msra.mxu0 0.0
      %3497 = vmatprep.subr.mxu0 0.0
      %3498 = vmatpush2.msra.mxu0 0.0
      %3499 = vmatprep.subr.mxu0 0.0
      %3500 = vmatpush2.msra.mxu0 0.0
      %3501 = vmatprep.subr.mxu0 0.0
      %3502 = vmatpush2.msra.mxu0 0.0
      %3503 = vmatprep.subr.mxu0 0.0
      %3504 = vmatpush2.msra.mxu0 0.0
      %3505 = vmatprep.subr.mxu0 0.0
      %3506 = vmatpush2.msra.mxu0 0.0
      %3507 = vmatprep.subr.mxu0 0.0
      %3508 = vmatpush2.msra.mxu0 0.0
      %3509 = vmatprep.subr.mxu0 0.0
      %3510 = vmatpush2.msra.mxu0 0.0
      %3511 = vmatprep.subr.mxu0 0.0
      %3512 = vmatpush2.msra.mxu0 0.0
      %3513 = vmatprep.subr.mxu0 0.0
      %3514 = vmatpush2.msra.mxu0 0.0
      %3515 = vmatprep.mubr.f32.mxu0 0.0
      %3516 = vmatmul.mubr.f32.gmra.mxu0 %v3356
      %v3517 = vpop.f32.mrf.mxu0
      %v3518 = vadd.f32 %v3354, %v3517
      %v3519 = vpop.f32.mrf.mxu0
      %3520 = vmatprep.mubr.f32.mxu0 0.0
      %3521 = vmatmul.mubr.f32.gmra.mxu0 %v3359
      %v3522 = vpop.f32.mrf.mxu0
      %v3523 = vadd.f32 %v3354, %v3522
      %v3524 = vpop.f32.mrf.mxu0
      %3525 = vmatprep.mubr.f32.mxu0 0.0
      %3526 = vmatmul.mubr.f32.gmra.mxu0 %v3362
      %v3527 = vpop.f32.mrf.mxu0
      %v3528 = vadd.f32 %v3354, %v3527
      %v3529 = vpop.f32.mrf.mxu0
      %3530 = vmatprep.mubr.f32.mxu0 0.0
      %3531 = vmatmul.mubr.f32.gmra.mxu0 %v3365
      %v3532 = vpop.f32.mrf.mxu0
      %v3533 = vadd.f32 %v3354, %v3532
      %v3534 = vpop.f32.mrf.mxu0
      %3535 = vmatprep.mubr.f32.mxu0 0.0
      %3536 = vmatmul.mubr.f32.gmra.mxu0 %v3368
      %v3537 = vpop.f32.mrf.mxu0
      %v3538 = vadd.f32 %v3354, %v3537
      %v3539 = vpop.f32.mrf.mxu0
      %3540 = vmatprep.mubr.f32.mxu0 0.0
      %3541 = vmatmul.mubr.f32.gmra.mxu0 %v3371
      %v3542 = vpop.f32.mrf.mxu0
      %v3543 = vadd.f32 %v3354, %v3542
      %v3544 = vpop.f32.mrf.mxu0
      %3545 = vmatprep.mubr.f32.mxu0 0.0
      %3546 = vmatmul.mubr.f32.gmra.mxu0 %v3374
      %v3547 = vpop.f32.mrf.mxu0
      %v3548 = vadd.f32 %v3354, %v3547
      %v3549 = vpop.f32.mrf.mxu0
      %3550 = vmatprep.mubr.f32.mxu0 0.0
      %3551 = vmatmul.mubr.f32.gmra.mxu0 %v3377
      %v3552 = vpop.f32.mrf.mxu0
      %v3553 = vadd.f32 %v3354, %v3552
      %v3554 = vpop.f32.mrf.mxu0
      %3555 = vmatprep.mubr.f32.mxu0 0.0
      %3556 = vmatmul.mubr.f32.gmra.mxu0 %v3380
      %v3557 = vpop.f32.mrf.mxu0
      %v3558 = vadd.f32 %v3354, %v3557
      %v3559 = vpop.f32.mrf.mxu0
      %3560 = vmatprep.mubr.f32.mxu0 0.0
      %3561 = vmatmul.mubr.f32.gmra.mxu0 %v3383
      %v3562 = vpop.f32.mrf.mxu0
      %v3563 = vadd.f32 %v3354, %v3562
      %v3564 = vpop.f32.mrf.mxu0
      %3565 = vmatprep.mubr.f32.mxu0 0.0
      %3566 = vmatmul.mubr.f32.gmra.mxu0 %v3386
      %v3567 = vpop.f32.mrf.mxu0
      %v3568 = vadd.f32 %v3354, %v3567
      %v3569 = vpop.f32.mrf.mxu0
      %3570 = vmatprep.mubr.f32.mxu0 0.0
      %3571 = vmatmul.mubr.f32.gmra.mxu0 %v3389
      %v3572 = vpop.f32.mrf.mxu0
      %v3573 = vadd.f32 %v3354, %v3572
      %v3574 = vpop.f32.mrf.mxu0
      %3575 = vmatprep.mubr.f32.mxu0 0.0
      %3576 = vmatmul.mubr.f32.gmra.mxu0 %v3392
      %v3577 = vpop.f32.mrf.mxu0
      %v3578 = vadd.f32 %v3354, %v3577
      %v3579 = vpop.f32.mrf.mxu0
      %3580 = vmatprep.mubr.f32.mxu0 0.0
      %3581 = vmatmul.mubr.f32.gmra.mxu0 %v3395
      %v3582 = vpop.f32.mrf.mxu0
      %v3583 = vadd.f32 %v3354, %v3582
      %v3584 = vpop.f32.mrf.mxu0
      %3585 = vmatprep.mubr.f32.mxu0 0.0
      %3586 = vmatmul.mubr.f32.gmra.mxu0 %v3398
      %v3587 = vpop.f32.mrf.mxu0
      %v3588 = vadd.f32 %v3354, %v3587
      %v3589 = vpop.f32.mrf.mxu0
      %3590 = vmatprep.mubr.f32.mxu0 0.0
      %3591 = vmatmul.mubr.f32.gmra.mxu0 %v3401
      %v3592 = vpop.f32.mrf.mxu0
      %v3593 = vadd.f32 %v3354, %v3592
      %v3594 = vpop.f32.mrf.mxu0
      %3595 = vmatprep.mubr.f32.mxu0 0.0
      %3596 = vmatmul.mubr.f32.gmra.mxu0 %v3404
      %v3597 = vpop.f32.mrf.mxu0
      %v3598 = vadd.f32 %v3354, %v3597
      %v3599 = vpop.f32.mrf.mxu0
      %3600 = vmatprep.mubr.f32.mxu0 0.0
      %3601 = vmatmul.mubr.f32.gmra.mxu0 %v3407
      %v3602 = vpop.f32.mrf.mxu0
      %v3603 = vadd.f32 %v3354, %v3602
      %v3604 = vpop.f32.mrf.mxu0
      %3605 = vmatprep.mubr.f32.mxu0 0.0
      %3606 = vmatmul.mubr.f32.gmra.mxu0 %v3410
      %v3607 = vpop.f32.mrf.mxu0
      %v3608 = vadd.f32 %v3354, %v3607
      %v3609 = vpop.f32.mrf.mxu0
      %3610 = vmatprep.mubr.f32.mxu0 0.0
      %3611 = vmatmul.mubr.f32.gmra.mxu0 %v3413
      %v3612 = vpop.f32.mrf.mxu0
      %v3613 = vadd.f32 %v3354, %v3612
      %v3614 = vpop.f32.mrf.mxu0
      %3615 = vmatprep.mubr.f32.mxu0 0.0
      %3616 = vmatmul.mubr.f32.gmra.mxu0 %v3416
      %v3617 = vpop.f32.mrf.mxu0
      %v3618 = vadd.f32 %v3354, %v3617
      %v3619 = vpop.f32.mrf.mxu0
      %3620 = vmatprep.mubr.f32.mxu0 0.0
      %3621 = vmatmul.mubr.f32.gmra.mxu0 %v3419
      %v3622 = vpop.f32.mrf.mxu0
      %v3623 = vadd.f32 %v3354, %v3622
      %v3624 = vpop.f32.mrf.mxu0
      %3625 = vmatprep.mubr.f32.mxu0 0.0
      %3626 = vmatmul.mubr.f32.gmra.mxu0 %v3422
      %v3627 = vpop.f32.mrf.mxu0
      %v3628 = vadd.f32 %v3354, %v3627
      %v3629 = vpop.f32.mrf.mxu0
      %3630 = vmatprep.mubr.f32.mxu0 0.0
      %3631 = vmatmul.mubr.f32.gmra.mxu0 %v3425
      %v3632 = vpop.f32.mrf.mxu0
      %v3633 = vadd.f32 %v3354, %v3632
      %v3634 = vpop.f32.mrf.mxu0
      %3635 = vmatprep.mubr.f32.mxu0 0.0
      %3636 = vmatmul.mubr.f32.gmra.mxu0 %v3428
      %v3637 = vpop.f32.mrf.mxu0
      %v3638 = vadd.f32 %v3354, %v3637
      %v3639 = vpop.f32.mrf.mxu0
      %3640 = vmatprep.mubr.f32.mxu0 0.0
      %3641 = vmatmul.mubr.f32.gmra.mxu0 %v3431
      %v3642 = vpop.f32.mrf.mxu0
      %v3643 = vadd.f32 %v3354, %v3642
      %v3644 = vpop.f32.mrf.mxu0
      %3645 = vmatprep.mubr.f32.mxu0 0.0
      %3646 = vmatmul.mubr.f32.gmra.mxu0 %v3434
      %v3647 = vpop.f32.mrf.mxu0
      %v3648 = vadd.f32 %v3354, %v3647
      %v3649 = vpop.f32.mrf.mxu0
      %3650 = vmatprep.mubr.f32.mxu0 0.0
      %3651 = vmatmul.mubr.f32.gmra.mxu0 %v3437
      %v3652 = vpop.f32.mrf.mxu0
      %v3653 = vadd.f32 %v3354, %v3652
      %v3654 = vpop.f32.mrf.mxu0
      %3655 = vmatprep.mubr.f32.mxu0 0.0
      %3656 = vmatmul.mubr.f32.gmra.mxu0 %v3440
      %v3657 = vpop.f32.mrf.mxu0
      %v3658 = vadd.f32 %v3354, %v3657
      %v3659 = vpop.f32.mrf.mxu0
      %3660 = vmatprep.mubr.f32.mxu0 0.0
      %3661 = vmatmul.mubr.f32.gmra.mxu0 %v3443
      %v3662 = vpop.f32.mrf.mxu0
      %v3663 = vadd.f32 %v3354, %v3662
      %v3664 = vpop.f32.mrf.mxu0
      %3665 = vmatprep.mubr.f32.mxu0 0.0
      %3666 = vmatmul.mubr.f32.gmra.mxu0 %v3446
      %v3667 = vpop.f32.mrf.mxu0
      %v3668 = vadd.f32 %v3354, %v3667
      %v3669 = vpop.f32.mrf.mxu0
      %3670 = vmatprep.mubr.f32.mxu0 0.0
      %3671 = vmatmul.mubr.f32.gmra.mxu0 %v3449
      %v3672 = vpop.f32.mrf.mxu0
      %v3673 = vadd.f32 %v3354, %v3672
      %v3674 = vpop.f32.mrf.mxu0
      %3675 = vdwg.mxu0
      %v3676 = vld [vmem:[%s1 + $0x90] sm:$0xff]
      %v3677 = vld [vmem:[%s1 + $0x98] sm:$0xff]
      %v3678 = vld [vmem:[%s1 + $0xa0] sm:$0xff]
      %v3679 = vld [vmem:[%s1 + $0xa8] sm:$0xff]
      %3680 = vmatprep.subr.mxu0 0.0
      %3681 = vmatpush1.msra.mxu0 0.0
      %3682 = vmatprep.subr.mxu0 0.0
      %3683 = vmatpush1.msra.mxu0 0.0
      %3684 = vmatprep.subr.mxu0 0.0
      %3685 = vmatpush1.msra.mxu0 0.0
      %3686 = vmatprep.subr.mxu0 0.0
      %3687 = vmatpush1.msra.mxu0 0.0
      %3688 = vmatprep.subr.mxu0 0.0
      %3689 = vmatpush1.msra.mxu0 0.0
      %3690 = vmatprep.subr.mxu0 0.0
      %3691 = vmatpush1.msra.mxu0 0.0
      %3692 = vmatprep.subr.mxu0 0.0
      %3693 = vmatpush1.msra.mxu0 0.0
      %3694 = vmatprep.subr.mxu0 0.0
      %3695 = vmatpush1.msra.mxu0 0.0
      %3696 = vmatprep.subr.mxu0 0.0
      %3697 = vmatpush1.msra.mxu0 0.0
      %3698 = vmatprep.subr.mxu0 0.0
      %3699 = vmatpush1.msra.mxu0 0.0
      %3700 = vmatprep.subr.mxu0 0.0
      %3701 = vmatpush1.msra.mxu0 0.0
      %3702 = vmatprep.subr.mxu0 0.0
      %3703 = vmatpush1.msra.mxu0 0.0
      %3704 = vmatprep.subr.mxu0 0.0
      %3705 = vmatpush1.msra.mxu0 0.0
      %3706 = vmatprep.subr.mxu0 0.0
      %3707 = vmatpush1.msra.mxu0 0.0
      %3708 = vmatprep.subr.mxu0 0.0
      %3709 = vmatpush1.msra.mxu0 %v3679
      %3710 = vmatprep.subr.mxu0 0.0
      %3711 = vmatpush1.msra.mxu0 %v3678
      %3712 = vmatprep.subr.mxu0 0.0
      %3713 = vmatpush2.msra.mxu0 0.0
      %3714 = vmatprep.subr.mxu0 0.0
      %3715 = vmatpush2.msra.mxu0 0.0
      %3716 = vmatprep.subr.mxu0 0.0
      %3717 = vmatpush2.msra.mxu0 0.0
      %3718 = vmatprep.subr.mxu0 0.0
      %3719 = vmatpush2.msra.mxu0 0.0
      %3720 = vmatprep.subr.mxu0 0.0
      %3721 = vmatpush2.msra.mxu0 0.0
      %3722 = vmatprep.subr.mxu0 0.0
      %3723 = vmatpush2.msra.mxu0 0.0
      %3724 = vmatprep.subr.mxu0 0.0
      %3725 = vmatpush2.msra.mxu0 0.0
      %3726 = vmatprep.subr.mxu0 0.0
      %3727 = vmatpush2.msra.mxu0 0.0
      %3728 = vmatprep.subr.mxu0 0.0
      %3729 = vmatpush2.msra.mxu0 0.0
      %3730 = vmatprep.subr.mxu0 0.0
      %3731 = vmatpush2.msra.mxu0 0.0
      %3732 = vmatprep.subr.mxu0 0.0
      %3733 = vmatpush2.msra.mxu0 0.0
      %3734 = vmatprep.subr.mxu0 0.0
      %3735 = vmatpush2.msra.mxu0 0.0
      %3736 = vmatprep.subr.mxu0 0.0
      %3737 = vmatpush2.msra.mxu0 0.0
      %3738 = vmatprep.subr.mxu0 0.0
      %3739 = vmatpush2.msra.mxu0 0.0
      %3740 = vmatprep.subr.mxu0 0.0
      %3741 = vmatpush2.msra.mxu0 0.0
      %3742 = vmatprep.subr.mxu0 0.0
      %3743 = vmatpush2.msra.mxu0 0.0
      %3744 = vmatprep.mubr.f32.mxu0 0.0
      %3745 = vmatmul.mubr.f32.gmra.mxu0 %v876
      %v3746 = vpop.f32.mrf.mxu0
      %v3747 = vadd.f32 0.0, %v3746
      %v3748 = vpop.f32.mrf.mxu0
      %3749 = vmatprep.mubr.f32.mxu0 0.0
      %3750 = vmatmul.mubr.f32.gmra.mxu0 %v879
      %v3751 = vpop.f32.mrf.mxu0
      %v3752 = vadd.f32 0.0, %v3751
      %v3753 = vpop.f32.mrf.mxu0
      %3754 = vmatprep.mubr.f32.mxu0 0.0
      %3755 = vmatmul.mubr.f32.gmra.mxu0 %v882
      %v3756 = vpop.f32.mrf.mxu0
      %v3757 = vadd.f32 0.0, %v3756
      %v3758 = vpop.f32.mrf.mxu0
      %3759 = vmatprep.mubr.f32.mxu0 0.0
      %3760 = vmatmul.mubr.f32.gmra.mxu0 %v885
      %v3761 = vpop.f32.mrf.mxu0
      %v3762 = vadd.f32 0.0, %v3761
      %v3763 = vpop.f32.mrf.mxu0
      %3764 = vmatprep.mubr.f32.mxu0 0.0
      %3765 = vmatmul.mubr.f32.gmra.mxu0 %v888
      %v3766 = vpop.f32.mrf.mxu0
      %v3767 = vadd.f32 0.0, %v3766
      %v3768 = vpop.f32.mrf.mxu0
      %3769 = vmatprep.mubr.f32.mxu0 0.0
      %3770 = vmatmul.mubr.f32.gmra.mxu0 %v891
      %v3771 = vpop.f32.mrf.mxu0
      %v3772 = vadd.f32 0.0, %v3771
      %v3773 = vpop.f32.mrf.mxu0
      %3774 = vmatprep.mubr.f32.mxu0 0.0
      %3775 = vmatmul.mubr.f32.gmra.mxu0 %v894
      %v3776 = vpop.f32.mrf.mxu0
      %v3777 = vadd.f32 0.0, %v3776
      %v3778 = vpop.f32.mrf.mxu0
      %3779 = vmatprep.mubr.f32.mxu0 0.0
      %3780 = vmatmul.mubr.f32.gmra.mxu0 %v897
      %v3781 = vpop.f32.mrf.mxu0
      %v3782 = vadd.f32 0.0, %v3781
      %v3783 = vpop.f32.mrf.mxu0
      %3784 = vmatprep.mubr.f32.mxu0 0.0
      %3785 = vmatmul.mubr.f32.gmra.mxu0 %v900
      %v3786 = vpop.f32.mrf.mxu0
      %v3787 = vadd.f32 0.0, %v3786
      %v3788 = vpop.f32.mrf.mxu0
      %3789 = vmatprep.mubr.f32.mxu0 0.0
      %3790 = vmatmul.mubr.f32.gmra.mxu0 %v903
      %v3791 = vpop.f32.mrf.mxu0
      %v3792 = vadd.f32 0.0, %v3791
      %v3793 = vpop.f32.mrf.mxu0
      %3794 = vmatprep.mubr.f32.mxu0 0.0
      %3795 = vmatmul.mubr.f32.gmra.mxu0 %v906
      %v3796 = vpop.f32.mrf.mxu0
      %v3797 = vadd.f32 0.0, %v3796
      %v3798 = vpop.f32.mrf.mxu0
      %3799 = vmatprep.mubr.f32.mxu0 0.0
      %3800 = vmatmul.mubr.f32.gmra.mxu0 %v909
      %v3801 = vpop.f32.mrf.mxu0
      %v3802 = vadd.f32 0.0, %v3801
      %v3803 = vpop.f32.mrf.mxu0
      %3804 = vmatprep.mubr.f32.mxu0 0.0
      %3805 = vmatmul.mubr.f32.gmra.mxu0 %v912
      %v3806 = vpop.f32.mrf.mxu0
      %v3807 = vadd.f32 0.0, %v3806
      %v3808 = vpop.f32.mrf.mxu0
      %3809 = vmatprep.mubr.f32.mxu0 0.0
      %3810 = vmatmul.mubr.f32.gmra.mxu0 %v915
      %v3811 = vpop.f32.mrf.mxu0
      %v3812 = vadd.f32 0.0, %v3811
      %v3813 = vpop.f32.mrf.mxu0
      %3814 = vmatprep.mubr.f32.mxu0 0.0
      %3815 = vmatmul.mubr.f32.gmra.mxu0 %v918
      %v3816 = vpop.f32.mrf.mxu0
      %v3817 = vadd.f32 0.0, %v3816
      %v3818 = vpop.f32.mrf.mxu0
      %3819 = vmatprep.mubr.f32.mxu0 0.0
      %3820 = vmatmul.mubr.f32.gmra.mxu0 %v921
      %v3821 = vpop.f32.mrf.mxu0
      %v3822 = vadd.f32 0.0, %v3821
      %v3823 = vpop.f32.mrf.mxu0
      %3824 = vmatprep.mubr.f32.mxu0 0.0
      %3825 = vmatmul.mubr.f32.gmra.mxu0 %v924
      %v3826 = vpop.f32.mrf.mxu0
      %v3827 = vadd.f32 0.0, %v3826
      %v3828 = vpop.f32.mrf.mxu0
      %3829 = vmatprep.mubr.f32.mxu0 0.0
      %3830 = vmatmul.mubr.f32.gmra.mxu0 %v927
      %v3831 = vpop.f32.mrf.mxu0
      %v3832 = vadd.f32 0.0, %v3831
      %v3833 = vpop.f32.mrf.mxu0
      %3834 = vmatprep.mubr.f32.mxu0 0.0
      %3835 = vmatmul.mubr.f32.gmra.mxu0 %v930
      %v3836 = vpop.f32.mrf.mxu0
      %v3837 = vadd.f32 0.0, %v3836
      %v3838 = vpop.f32.mrf.mxu0
      %3839 = vmatprep.mubr.f32.mxu0 0.0
      %3840 = vmatmul.mubr.f32.gmra.mxu0 %v933
      %v3841 = vpop.f32.mrf.mxu0
      %v3842 = vadd.f32 0.0, %v3841
      %v3843 = vpop.f32.mrf.mxu0
      %3844 = vmatprep.mubr.f32.mxu0 0.0
      %3845 = vmatmul.mubr.f32.gmra.mxu0 %v936
      %v3846 = vpop.f32.mrf.mxu0
      %v3847 = vadd.f32 0.0, %v3846
      %v3848 = vpop.f32.mrf.mxu0
      %3849 = vmatprep.mubr.f32.mxu0 0.0
      %3850 = vmatmul.mubr.f32.gmra.mxu0 %v939
      %v3851 = vpop.f32.mrf.mxu0
      %v3852 = vadd.f32 0.0, %v3851
      %v3853 = vpop.f32.mrf.mxu0
      %3854 = vmatprep.mubr.f32.mxu0 0.0
      %3855 = vmatmul.mubr.f32.gmra.mxu0 %v942
      %v3856 = vpop.f32.mrf.mxu0
      %v3857 = vadd.f32 0.0, %v3856
      %v3858 = vpop.f32.mrf.mxu0
      %3859 = vmatprep.mubr.f32.mxu0 0.0
      %3860 = vmatmul.mubr.f32.gmra.mxu0 %v945
      %v3861 = vpop.f32.mrf.mxu0
      %v3862 = vadd.f32 0.0, %v3861
      %v3863 = vpop.f32.mrf.mxu0
      %3864 = vmatprep.mubr.f32.mxu0 0.0
      %3865 = vmatmul.mubr.f32.gmra.mxu0 %v948
      %v3866 = vpop.f32.mrf.mxu0
      %v3867 = vadd.f32 0.0, %v3866
      %v3868 = vpop.f32.mrf.mxu0
      %3869 = vmatprep.mubr.f32.mxu0 0.0
      %3870 = vmatmul.mubr.f32.gmra.mxu0 %v951
      %v3871 = vpop.f32.mrf.mxu0
      %v3872 = vadd.f32 0.0, %v3871
      %v3873 = vpop.f32.mrf.mxu0
      %3874 = vmatprep.mubr.f32.mxu0 0.0
      %3875 = vmatmul.mubr.f32.gmra.mxu0 %v954
      %v3876 = vpop.f32.mrf.mxu0
      %v3877 = vadd.f32 0.0, %v3876
      %v3878 = vpop.f32.mrf.mxu0
      %3879 = vmatprep.mubr.f32.mxu0 0.0
      %3880 = vmatmul.mubr.f32.gmra.mxu0 %v957
      %v3881 = vpop.f32.mrf.mxu0
      %v3882 = vadd.f32 0.0, %v3881
      %v3883 = vpop.f32.mrf.mxu0
      %3884 = vmatprep.mubr.f32.mxu0 0.0
      %3885 = vmatmul.mubr.f32.gmra.mxu0 %v960
      %v3886 = vpop.f32.mrf.mxu0
      %v3887 = vadd.f32 0.0, %v3886
      %v3888 = vpop.f32.mrf.mxu0
      %3889 = vmatprep.mubr.f32.mxu0 0.0
      %3890 = vmatmul.mubr.f32.gmra.mxu0 %v963
      %v3891 = vpop.f32.mrf.mxu0
      %v3892 = vadd.f32 0.0, %v3891
      %v3893 = vpop.f32.mrf.mxu0
      %3894 = vmatprep.mubr.f32.mxu0 0.0
      %3895 = vmatmul.mubr.f32.gmra.mxu0 %v966
      %v3896 = vpop.f32.mrf.mxu0
      %v3897 = vadd.f32 0.0, %v3896
      %v3898 = vpop.f32.mrf.mxu0
      %3899 = vmatprep.mubr.f32.mxu0 0.0
      %3900 = vmatmul.mubr.f32.gmra.mxu0 %v969
      %v3901 = vpop.f32.mrf.mxu0
      %v3902 = vadd.f32 0.0, %v3901
      %v3903 = vpop.f32.mrf.mxu0
      %3904 = vdwg.mxu0
      %v3906 = vsel %vm186, %v3518, 0
      %v3909 = vsel %vm186, %v3523, 0
      %v3912 = vsel %vm186, %v3528, 0
      %v3915 = vsel %vm186, %v3533, 0
      %v3918 = vsel %vm186, %v3538, 0
      %v3921 = vsel %vm186, %v3543, 0
      %v3924 = vsel %vm186, %v3548, 0
      %v3927 = vsel %vm186, %v3553, 0
      %v3930 = vsel %vm186, %v3558, 0
      %v3933 = vsel %vm186, %v3563, 0
      %v3936 = vsel %vm186, %v3568, 0
      %v3939 = vsel %vm186, %v3573, 0
      %v3942 = vsel %vm186, %v3578, 0
      %v3945 = vsel %vm186, %v3583, 0
      %v3948 = vsel %vm186, %v3588, 0
      %v3951 = vsel %vm186, %v3593, 0
      %v3954 = vsel %vm186, %v3598, 0
      %v3957 = vsel %vm186, %v3603, 0
      %v3960 = vsel %vm186, %v3608, 0
      %v3963 = vsel %vm186, %v3613, 0
      %v3966 = vsel %vm186, %v3618, 0
      %v3969 = vsel %vm186, %v3623, 0
      %v3972 = vsel %vm186, %v3628, 0
      %v3975 = vsel %vm186, %v3633, 0
      %v3978 = vsel %vm186, %v3638, 0
      %v3981 = vsel %vm186, %v3643, 0
      %v3984 = vsel %vm186, %v3648, 0
      %v3987 = vsel %vm186, %v3653, 0
      %v3990 = vsel %vm186, %v3658, 0
      %v3993 = vsel %vm186, %v3663, 0
      %v3996 = vsel %vm186, %v3668, 0
      %v3999 = vsel %vm186, %v3673, 0
      %4001 = vmatprep.subr.mxu0 0.0
      %4002 = vmatpush1.msra.mxu0 0.0
      %4003 = vmatprep.subr.mxu0 0.0
      %4004 = vmatpush1.msra.mxu0 0.0
      %4005 = vmatprep.subr.mxu0 0.0
      %4006 = vmatpush1.msra.mxu0 0.0
      %4007 = vmatprep.subr.mxu0 0.0
      %4008 = vmatpush1.msra.mxu0 0.0
      %4009 = vmatprep.subr.mxu0 0.0
      %4010 = vmatpush1.msra.mxu0 0.0
      %4011 = vmatprep.subr.mxu0 0.0
      %4012 = vmatpush1.msra.mxu0 0.0
      %4013 = vmatprep.subr.mxu0 0.0
      %4014 = vmatpush1.msra.mxu0 0.0
      %4015 = vmatprep.subr.mxu0 0.0
      %4016 = vmatpush1.msra.mxu0 0.0
      %4017 = vmatprep.subr.mxu0 0.0
      %4018 = vmatpush1.msra.mxu0 0.0
      %4019 = vmatprep.subr.mxu0 0.0
      %4020 = vmatpush1.msra.mxu0 0.0
      %4021 = vmatprep.subr.mxu0 0.0
      %4022 = vmatpush1.msra.mxu0 0.0
      %4023 = vmatprep.subr.mxu0 0.0
      %4024 = vmatpush1.msra.mxu0 0.0
      %4025 = vmatprep.subr.mxu0 0.0
      %4026 = vmatpush1.msra.mxu0 0.0
      %4027 = vmatprep.subr.mxu0 0.0
      %4028 = vmatpush1.msra.mxu0 0.0
      %4029 = vmatprep.subr.mxu0 0.0
      %4030 = vmatpush1.msra.mxu0 %v3677
      %4031 = vmatprep.subr.mxu0 0.0
      %4032 = vmatpush1.msra.mxu0 %v3676
      %4033 = vmatprep.subr.mxu0 0.0
      %4034 = vmatpush2.msra.mxu0 0.0
      %4035 = vmatprep.subr.mxu0 0.0
      %4036 = vmatpush2.msra.mxu0 0.0
      %4037 = vmatprep.subr.mxu0 0.0
      %4038 = vmatpush2.msra.mxu0 0.0
      %4039 = vmatprep.subr.mxu0 0.0
      %4040 = vmatpush2.msra.mxu0 0.0
      %4041 = vmatprep.subr.mxu0 0.0
      %4042 = vmatpush2.msra.mxu0 0.0
      %4043 = vmatprep.subr.mxu0 0.0
      %4044 = vmatpush2.msra.mxu0 0.0
      %4045 = vmatprep.subr.mxu0 0.0
      %4046 = vmatpush2.msra.mxu0 0.0
      %4047 = vmatprep.subr.mxu0 0.0
      %4048 = vmatpush2.msra.mxu0 0.0
      %4049 = vmatprep.subr.mxu0 0.0
      %4050 = vmatpush2.msra.mxu0 0.0
      %4051 = vmatprep.subr.mxu0 0.0
      %4052 = vmatpush2.msra.mxu0 0.0
      %4053 = vmatprep.subr.mxu0 0.0
      %4054 = vmatpush2.msra.mxu0 0.0
      %4055 = vmatprep.subr.mxu0 0.0
      %4056 = vmatpush2.msra.mxu0 0.0
      %4057 = vmatprep.subr.mxu0 0.0
      %4058 = vmatpush2.msra.mxu0 0.0
      %4059 = vmatprep.subr.mxu0 0.0
      %4060 = vmatpush2.msra.mxu0 0.0
      %4061 = vmatprep.subr.mxu0 0.0
      %4062 = vmatpush2.msra.mxu0 0.0
      %4063 = vmatprep.subr.mxu0 0.0
      %4064 = vmatpush2.msra.mxu0 0.0
      %4065 = vmatprep.mubr.f32.mxu0 0.0
      %4066 = vmatmul.mubr.f32.gmra.mxu0 %v3906
      %v4067 = vpop.f32.mrf.mxu0
      %v4068 = vadd.f32 %v3747, %v4067
      %v4069 = vpop.f32.mrf.mxu0
      %4070 = vmatprep.mubr.f32.mxu0 0.0
      %4071 = vmatmul.mubr.f32.gmra.mxu0 %v3909
      %v4072 = vpop.f32.mrf.mxu0
      %v4073 = vadd.f32 %v3752, %v4072
      %v4074 = vpop.f32.mrf.mxu0
      %4075 = vmatprep.mubr.f32.mxu0 0.0
      %4076 = vmatmul.mubr.f32.gmra.mxu0 %v3912
      %v4077 = vpop.f32.mrf.mxu0
      %v4078 = vadd.f32 %v3757, %v4077
      %v4079 = vpop.f32.mrf.mxu0
      %4080 = vmatprep.mubr.f32.mxu0 0.0
      %4081 = vmatmul.mubr.f32.gmra.mxu0 %v3915
      %v4082 = vpop.f32.mrf.mxu0
      %v4083 = vadd.f32 %v3762, %v4082
      %v4084 = vpop.f32.mrf.mxu0
      %4085 = vmatprep.mubr.f32.mxu0 0.0
      %4086 = vmatmul.mubr.f32.gmra.mxu0 %v3918
      %v4087 = vpop.f32.mrf.mxu0
      %v4088 = vadd.f32 %v3767, %v4087
      %v4089 = vpop.f32.mrf.mxu0
      %4090 = vmatprep.mubr.f32.mxu0 0.0
      %4091 = vmatmul.mubr.f32.gmra.mxu0 %v3921
      %v4092 = vpop.f32.mrf.mxu0
      %v4093 = vadd.f32 %v3772, %v4092
      %v4094 = vpop.f32.mrf.mxu0
      %4095 = vmatprep.mubr.f32.mxu0 0.0
      %4096 = vmatmul.mubr.f32.gmra.mxu0 %v3924
      %v4097 = vpop.f32.mrf.mxu0
      %v4098 = vadd.f32 %v3777, %v4097
      %v4099 = vpop.f32.mrf.mxu0
      %4100 = vmatprep.mubr.f32.mxu0 0.0
      %4101 = vmatmul.mubr.f32.gmra.mxu0 %v3927
      %v4102 = vpop.f32.mrf.mxu0
      %v4103 = vadd.f32 %v3782, %v4102
      %v4104 = vpop.f32.mrf.mxu0
      %4105 = vmatprep.mubr.f32.mxu0 0.0
      %4106 = vmatmul.mubr.f32.gmra.mxu0 %v3930
      %v4107 = vpop.f32.mrf.mxu0
      %v4108 = vadd.f32 %v3787, %v4107
      %v4109 = vpop.f32.mrf.mxu0
      %4110 = vmatprep.mubr.f32.mxu0 0.0
      %4111 = vmatmul.mubr.f32.gmra.mxu0 %v3933
      %v4112 = vpop.f32.mrf.mxu0
      %v4113 = vadd.f32 %v3792, %v4112
      %v4114 = vpop.f32.mrf.mxu0
      %4115 = vmatprep.mubr.f32.mxu0 0.0
      %4116 = vmatmul.mubr.f32.gmra.mxu0 %v3936
      %v4117 = vpop.f32.mrf.mxu0
      %v4118 = vadd.f32 %v3797, %v4117
      %v4119 = vpop.f32.mrf.mxu0
      %4120 = vmatprep.mubr.f32.mxu0 0.0
      %4121 = vmatmul.mubr.f32.gmra.mxu0 %v3939
      %v4122 = vpop.f32.mrf.mxu0
      %v4123 = vadd.f32 %v3802, %v4122
      %v4124 = vpop.f32.mrf.mxu0
      %4125 = vmatprep.mubr.f32.mxu0 0.0
      %4126 = vmatmul.mubr.f32.gmra.mxu0 %v3942
      %v4127 = vpop.f32.mrf.mxu0
      %v4128 = vadd.f32 %v3807, %v4127
      %v4129 = vpop.f32.mrf.mxu0
      %4130 = vmatprep.mubr.f32.mxu0 0.0
      %4131 = vmatmul.mubr.f32.gmra.mxu0 %v3945
      %v4132 = vpop.f32.mrf.mxu0
      %v4133 = vadd.f32 %v3812, %v4132
      %v4134 = vpop.f32.mrf.mxu0
      %4135 = vmatprep.mubr.f32.mxu0 0.0
      %4136 = vmatmul.mubr.f32.gmra.mxu0 %v3948
      %v4137 = vpop.f32.mrf.mxu0
      %v4138 = vadd.f32 %v3817, %v4137
      %v4139 = vpop.f32.mrf.mxu0
      %4140 = vmatprep.mubr.f32.mxu0 0.0
      %4141 = vmatmul.mubr.f32.gmra.mxu0 %v3951
      %v4142 = vpop.f32.mrf.mxu0
      %v4143 = vadd.f32 %v3822, %v4142
      %v4144 = vpop.f32.mrf.mxu0
      %4145 = vmatprep.mubr.f32.mxu0 0.0
      %4146 = vmatmul.mubr.f32.gmra.mxu0 %v3954
      %v4147 = vpop.f32.mrf.mxu0
      %v4148 = vadd.f32 %v3827, %v4147
      %v4149 = vpop.f32.mrf.mxu0
      %4150 = vmatprep.mubr.f32.mxu0 0.0
      %4151 = vmatmul.mubr.f32.gmra.mxu0 %v3957
      %v4152 = vpop.f32.mrf.mxu0
      %v4153 = vadd.f32 %v3832, %v4152
      %v4154 = vpop.f32.mrf.mxu0
      %4155 = vmatprep.mubr.f32.mxu0 0.0
      %4156 = vmatmul.mubr.f32.gmra.mxu0 %v3960
      %v4157 = vpop.f32.mrf.mxu0
      %v4158 = vadd.f32 %v3837, %v4157
      %v4159 = vpop.f32.mrf.mxu0
      %4160 = vmatprep.mubr.f32.mxu0 0.0
      %4161 = vmatmul.mubr.f32.gmra.mxu0 %v3963
      %v4162 = vpop.f32.mrf.mxu0
      %v4163 = vadd.f32 %v3842, %v4162
      %v4164 = vpop.f32.mrf.mxu0
      %4165 = vmatprep.mubr.f32.mxu0 0.0
      %4166 = vmatmul.mubr.f32.gmra.mxu0 %v3966
      %v4167 = vpop.f32.mrf.mxu0
      %v4168 = vadd.f32 %v3847, %v4167
      %v4169 = vpop.f32.mrf.mxu0
      %4170 = vmatprep.mubr.f32.mxu0 0.0
      %4171 = vmatmul.mubr.f32.gmra.mxu0 %v3969
      %v4172 = vpop.f32.mrf.mxu0
      %v4173 = vadd.f32 %v3852, %v4172
      %v4174 = vpop.f32.mrf.mxu0
      %4175 = vmatprep.mubr.f32.mxu0 0.0
      %4176 = vmatmul.mubr.f32.gmra.mxu0 %v3972
      %v4177 = vpop.f32.mrf.mxu0
      %v4178 = vadd.f32 %v3857, %v4177
      %v4179 = vpop.f32.mrf.mxu0
      %4180 = vmatprep.mubr.f32.mxu0 0.0
      %4181 = vmatmul.mubr.f32.gmra.mxu0 %v3975
      %v4182 = vpop.f32.mrf.mxu0
      %v4183 = vadd.f32 %v3862, %v4182
      %v4184 = vpop.f32.mrf.mxu0
      %4185 = vmatprep.mubr.f32.mxu0 0.0
      %4186 = vmatmul.mubr.f32.gmra.mxu0 %v3978
      %v4187 = vpop.f32.mrf.mxu0
      %v4188 = vadd.f32 %v3867, %v4187
      %v4189 = vpop.f32.mrf.mxu0
      %4190 = vmatprep.mubr.f32.mxu0 0.0
      %4191 = vmatmul.mubr.f32.gmra.mxu0 %v3981
      %v4192 = vpop.f32.mrf.mxu0
      %v4193 = vadd.f32 %v3872, %v4192
      %v4194 = vpop.f32.mrf.mxu0
      %4195 = vmatprep.mubr.f32.mxu0 0.0
      %4196 = vmatmul.mubr.f32.gmra.mxu0 %v3984
      %v4197 = vpop.f32.mrf.mxu0
      %v4198 = vadd.f32 %v3877, %v4197
      %v4199 = vpop.f32.mrf.mxu0
      %4200 = vmatprep.mubr.f32.mxu0 0.0
      %4201 = vmatmul.mubr.f32.gmra.mxu0 %v3987
      %v4202 = vpop.f32.mrf.mxu0
      %v4203 = vadd.f32 %v3882, %v4202
      %v4204 = vpop.f32.mrf.mxu0
      %4205 = vmatprep.mubr.f32.mxu0 0.0
      %4206 = vmatmul.mubr.f32.gmra.mxu0 %v3990
      %v4207 = vpop.f32.mrf.mxu0
      %v4208 = vadd.f32 %v3887, %v4207
      %v4209 = vpop.f32.mrf.mxu0
      %4210 = vmatprep.mubr.f32.mxu0 0.0
      %4211 = vmatmul.mubr.f32.gmra.mxu0 %v3993
      %v4212 = vpop.f32.mrf.mxu0
      %v4213 = vadd.f32 %v3892, %v4212
      %v4214 = vpop.f32.mrf.mxu0
      %4215 = vmatprep.mubr.f32.mxu0 0.0
      %4216 = vmatmul.mubr.f32.gmra.mxu0 %v3996
      %v4217 = vpop.f32.mrf.mxu0
      %v4218 = vadd.f32 %v3897, %v4217
      %v4219 = vpop.f32.mrf.mxu0
      %4220 = vmatprep.mubr.f32.mxu0 0.0
      %4221 = vmatmul.mubr.f32.gmra.mxu0 %v3999
      %v4222 = vpop.f32.mrf.mxu0
      %v4223 = vadd.f32 %v3902, %v4222
      %v4224 = vpop.f32.mrf.mxu0
      %4225 = vdwg.mxu0
      %v4226 = vld [vmem:[%s1 + $0xb0] sm:$0x1]
      %v4227 = vlaneseq
      %v4228 = vshrl.u32 %v4227, 7
      %v4229 = vsub.s32 0, %v4228
      %v4230 = vrot.slane %v4226, %v4229
      %v4231 = vadd.f32 %v4068, %v4230
      %v4232 = vadd.f32 %v4073, %v4230
      %v4233 = vadd.f32 %v4078, %v4230
      %v4234 = vadd.f32 %v4083, %v4230
      %v4235 = vadd.f32 %v4088, %v4230
      %v4236 = vadd.f32 %v4093, %v4230
      %v4237 = vadd.f32 %v4098, %v4230
      %v4238 = vadd.f32 %v4103, %v4230
      %v4239 = vadd.f32 %v4108, %v4230
      %v4240 = vadd.f32 %v4113, %v4230
      %v4241 = vadd.f32 %v4118, %v4230
      %v4242 = vadd.f32 %v4123, %v4230
      %v4243 = vadd.f32 %v4128, %v4230
      %v4244 = vadd.f32 %v4133, %v4230
      %v4245 = vadd.f32 %v4138, %v4230
      %v4246 = vadd.f32 %v4143, %v4230
      %v4247 = vadd.f32 %v4148, %v4230
      %v4248 = vadd.f32 %v4153, %v4230
      %v4249 = vadd.f32 %v4158, %v4230
      %v4250 = vadd.f32 %v4163, %v4230
      %v4251 = vadd.f32 %v4168, %v4230
      %v4252 = vadd.f32 %v4173, %v4230
      %v4253 = vadd.f32 %v4178, %v4230
      %v4254 = vadd.f32 %v4183, %v4230
      %v4255 = vadd.f32 %v4188, %v4230
      %v4256 = vadd.f32 %v4193, %v4230
      %v4257 = vadd.f32 %v4198, %v4230
      %v4258 = vadd.f32 %v4203, %v4230
      %v4259 = vadd.f32 %v4208, %v4230
      %v4260 = vadd.f32 %v4213, %v4230
      %v4261 = vadd.f32 %v4218, %v4230
      %v4262 = vadd.f32 %v4223, %v4230
      %v4263 = vmax.f32 %v4231, 0.0
      %v4264 = vmax.f32 %v4232, 0.0
      %v4265 = vmax.f32 %v4233, 0.0
      %v4266 = vmax.f32 %v4234, 0.0
      %v4267 = vmax.f32 %v4235, 0.0
      %v4268 = vmax.f32 %v4236, 0.0
      %v4269 = vmax.f32 %v4237, 0.0
      %v4270 = vmax.f32 %v4238, 0.0
      %v4271 = vmax.f32 %v4239, 0.0
      %v4272 = vmax.f32 %v4240, 0.0
      %v4273 = vmax.f32 %v4241, 0.0
      %v4274 = vmax.f32 %v4242, 0.0
      %v4275 = vmax.f32 %v4243, 0.0
      %v4276 = vmax.f32 %v4244, 0.0
      %v4277 = vmax.f32 %v4245, 0.0
      %v4278 = vmax.f32 %v4246, 0.0
      %v4279 = vmax.f32 %v4247, 0.0
      %v4280 = vmax.f32 %v4248, 0.0
      %v4281 = vmax.f32 %v4249, 0.0
      %v4282 = vmax.f32 %v4250, 0.0
      %v4283 = vmax.f32 %v4251, 0.0
      %v4284 = vmax.f32 %v4252, 0.0
      %v4285 = vmax.f32 %v4253, 0.0
      %v4286 = vmax.f32 %v4254, 0.0
      %v4287 = vmax.f32 %v4255, 0.0
      %v4288 = vmax.f32 %v4256, 0.0
      %v4289 = vmax.f32 %v4257, 0.0
      %v4290 = vmax.f32 %v4258, 0.0
      %v4291 = vmax.f32 %v4259, 0.0
      %v4292 = vmax.f32 %v4260, 0.0
      %v4293 = vmax.f32 %v4261, 0.0
      %v4294 = vmax.f32 %v4262, 0.0
      %v4295 = vld [vmem:[%s1 + $0xb8] sm:$0xff]
      %v4296 = vld [vmem:[%s1 + $0xc0] sm:$0xff]
      %v4297 = vld [vmem:[%s1 + $0xc8] sm:$0xff]
      %v4298 = vld [vmem:[%s1 + $0xd0] sm:$0xff]
      %v4299 = vld [vmem:[%s1 + $0xd8] sm:$0x1]
      %v4300 = vlaneseq
      %v4301 = vshrl.u32 %v4300, 7
      %v4302 = vsub.s32 0, %v4301
      %v4303 = vrot.slane %v4299, %v4302
      %v4305 = vsel %vm549, %v4263, 0
      %v4308 = vsel %vm549, %v4264, 0
      %v4311 = vsel %vm549, %v4265, 0
      %v4314 = vsel %vm549, %v4266, 0
      %v4317 = vsel %vm549, %v4267, 0
      %v4320 = vsel %vm549, %v4268, 0
      %v4323 = vsel %vm549, %v4269, 0
      %v4326 = vsel %vm549, %v4270, 0
      %v4329 = vsel %vm549, %v4271, 0
      %v4332 = vsel %vm549, %v4272, 0
      %v4335 = vsel %vm549, %v4273, 0
      %v4338 = vsel %vm549, %v4274, 0
      %v4341 = vsel %vm549, %v4275, 0
      %v4344 = vsel %vm549, %v4276, 0
      %v4347 = vsel %vm549, %v4277, 0
      %v4350 = vsel %vm549, %v4278, 0
      %v4353 = vsel %vm549, %v4279, 0
      %v4356 = vsel %vm549, %v4280, 0
      %v4359 = vsel %vm549, %v4281, 0
      %v4362 = vsel %vm549, %v4282, 0
      %v4365 = vsel %vm549, %v4283, 0
      %v4368 = vsel %vm549, %v4284, 0
      %v4371 = vsel %vm549, %v4285, 0
      %v4374 = vsel %vm549, %v4286, 0
      %v4377 = vsel %vm549, %v4287, 0
      %v4380 = vsel %vm549, %v4288, 0
      %v4383 = vsel %vm549, %v4289, 0
      %v4386 = vsel %vm549, %v4290, 0
      %v4389 = vsel %vm549, %v4291, 0
      %v4392 = vsel %vm549, %v4292, 0
      %v4395 = vsel %vm549, %v4293, 0
      %v4398 = vsel %vm549, %v4294, 0
      %4400 = vmatprep.subr.mxu0 0.0
      %4401 = vmatpush1.msra.mxu0 0.0
      %4402 = vmatprep.subr.mxu0 0.0
      %4403 = vmatpush1.msra.mxu0 0.0
      %4404 = vmatprep.subr.mxu0 0.0
      %4405 = vmatpush1.msra.mxu0 0.0
      %4406 = vmatprep.subr.mxu0 0.0
      %4407 = vmatpush1.msra.mxu0 0.0
      %4408 = vmatprep.subr.mxu0 0.0
      %4409 = vmatpush1.msra.mxu0 0.0
      %4410 = vmatprep.subr.mxu0 0.0
      %4411 = vmatpush1.msra.mxu0 0.0
      %4412 = vmatprep.subr.mxu0 0.0
      %4413 = vmatpush1.msra.mxu0 0.0
      %4414 = vmatprep.subr.mxu0 0.0
      %4415 = vmatpush1.msra.mxu0 0.0
      %4416 = vmatprep.subr.mxu0 0.0
      %4417 = vmatpush1.msra.mxu0 0.0
      %4418 = vmatprep.subr.mxu0 0.0
      %4419 = vmatpush1.msra.mxu0 0.0
      %4420 = vmatprep.subr.mxu0 0.0
      %4421 = vmatpush1.msra.mxu0 0.0
      %4422 = vmatprep.subr.mxu0 0.0
      %4423 = vmatpush1.msra.mxu0 0.0
      %4424 = vmatprep.subr.mxu0 0.0
      %4425 = vmatpush1.msra.mxu0 %v4298
      %4426 = vmatprep.subr.mxu0 0.0
      %4427 = vmatpush1.msra.mxu0 %v4297
      %4428 = vmatprep.subr.mxu0 0.0
      %4429 = vmatpush1.msra.mxu0 %v4296
      %4430 = vmatprep.subr.mxu0 0.0
      %4431 = vmatpush1.msra.mxu0 %v4295
      %4432 = vmatprep.subr.mxu0 0.0
      %4433 = vmatpush2.msra.mxu0 0.0
      %4434 = vmatprep.subr.mxu0 0.0
      %4435 = vmatpush2.msra.mxu0 0.0
      %4436 = vmatprep.subr.mxu0 0.0
      %4437 = vmatpush2.msra.mxu0 0.0
      %4438 = vmatprep.subr.mxu0 0.0
      %4439 = vmatpush2.msra.mxu0 0.0
      %4440 = vmatprep.subr.mxu0 0.0
      %4441 = vmatpush2.msra.mxu0 0.0
      %4442 = vmatprep.subr.mxu0 0.0
      %4443 = vmatpush2.msra.mxu0 0.0
      %4444 = vmatprep.subr.mxu0 0.0
      %4445 = vmatpush2.msra.mxu0 0.0
      %4446 = vmatprep.subr.mxu0 0.0
      %4447 = vmatpush2.msra.mxu0 0.0
      %4448 = vmatprep.subr.mxu0 0.0
      %4449 = vmatpush2.msra.mxu0 0.0
      %4450 = vmatprep.subr.mxu0 0.0
      %4451 = vmatpush2.msra.mxu0 0.0
      %4452 = vmatprep.subr.mxu0 0.0
      %4453 = vmatpush2.msra.mxu0 0.0
      %4454 = vmatprep.subr.mxu0 0.0
      %4455 = vmatpush2.msra.mxu0 0.0
      %4456 = vmatprep.subr.mxu0 0.0
      %4457 = vmatpush2.msra.mxu0 0.0
      %4458 = vmatprep.subr.mxu0 0.0
      %4459 = vmatpush2.msra.mxu0 0.0
      %4460 = vmatprep.subr.mxu0 0.0
      %4461 = vmatpush2.msra.mxu0 0.0
      %4462 = vmatprep.subr.mxu0 0.0
      %4463 = vmatpush2.msra.mxu0 0.0
      %4464 = vmatprep.mubr.f32.mxu0 0.0
      %4465 = vmatmul.mubr.f32.gmra.mxu0 %v4305
      %v4466 = vpop.f32.mrf.mxu0
      %v4467 = vadd.f32 %v4303, %v4466
      %v4468 = vpop.f32.mrf.mxu0
      %4469 = vmatprep.mubr.f32.mxu0 0.0
      %4470 = vmatmul.mubr.f32.gmra.mxu0 %v4308
      %v4471 = vpop.f32.mrf.mxu0
      %v4472 = vadd.f32 %v4303, %v4471
      %v4473 = vpop.f32.mrf.mxu0
      %4474 = vmatprep.mubr.f32.mxu0 0.0
      %4475 = vmatmul.mubr.f32.gmra.mxu0 %v4311
      %v4476 = vpop.f32.mrf.mxu0
      %v4477 = vadd.f32 %v4303, %v4476
      %v4478 = vpop.f32.mrf.mxu0
      %4479 = vmatprep.mubr.f32.mxu0 0.0
      %4480 = vmatmul.mubr.f32.gmra.mxu0 %v4314
      %v4481 = vpop.f32.mrf.mxu0
      %v4482 = vadd.f32 %v4303, %v4481
      %v4483 = vpop.f32.mrf.mxu0
      %4484 = vmatprep.mubr.f32.mxu0 0.0
      %4485 = vmatmul.mubr.f32.gmra.mxu0 %v4317
      %v4486 = vpop.f32.mrf.mxu0
      %v4487 = vadd.f32 %v4303, %v4486
      %v4488 = vpop.f32.mrf.mxu0
      %4489 = vmatprep.mubr.f32.mxu0 0.0
      %4490 = vmatmul.mubr.f32.gmra.mxu0 %v4320
      %v4491 = vpop.f32.mrf.mxu0
      %v4492 = vadd.f32 %v4303, %v4491
      %v4493 = vpop.f32.mrf.mxu0
      %4494 = vmatprep.mubr.f32.mxu0 0.0
      %4495 = vmatmul.mubr.f32.gmra.mxu0 %v4323
      %v4496 = vpop.f32.mrf.mxu0
      %v4497 = vadd.f32 %v4303, %v4496
      %v4498 = vpop.f32.mrf.mxu0
      %4499 = vmatprep.mubr.f32.mxu0 0.0
      %4500 = vmatmul.mubr.f32.gmra.mxu0 %v4326
      %v4501 = vpop.f32.mrf.mxu0
      %v4502 = vadd.f32 %v4303, %v4501
      %v4503 = vpop.f32.mrf.mxu0
      %4504 = vmatprep.mubr.f32.mxu0 0.0
      %4505 = vmatmul.mubr.f32.gmra.mxu0 %v4329
      %v4506 = vpop.f32.mrf.mxu0
      %v4507 = vadd.f32 %v4303, %v4506
      %v4508 = vpop.f32.mrf.mxu0
      %4509 = vmatprep.mubr.f32.mxu0 0.0
      %4510 = vmatmul.mubr.f32.gmra.mxu0 %v4332
      %v4511 = vpop.f32.mrf.mxu0
      %v4512 = vadd.f32 %v4303, %v4511
      %v4513 = vpop.f32.mrf.mxu0
      %4514 = vmatprep.mubr.f32.mxu0 0.0
      %4515 = vmatmul.mubr.f32.gmra.mxu0 %v4335
      %v4516 = vpop.f32.mrf.mxu0
      %v4517 = vadd.f32 %v4303, %v4516
      %v4518 = vpop.f32.mrf.mxu0
      %4519 = vmatprep.mubr.f32.mxu0 0.0
      %4520 = vmatmul.mubr.f32.gmra.mxu0 %v4338
      %v4521 = vpop.f32.mrf.mxu0
      %v4522 = vadd.f32 %v4303, %v4521
      %v4523 = vpop.f32.mrf.mxu0
      %4524 = vmatprep.mubr.f32.mxu0 0.0
      %4525 = vmatmul.mubr.f32.gmra.mxu0 %v4341
      %v4526 = vpop.f32.mrf.mxu0
      %v4527 = vadd.f32 %v4303, %v4526
      %v4528 = vpop.f32.mrf.mxu0
      %4529 = vmatprep.mubr.f32.mxu0 0.0
      %4530 = vmatmul.mubr.f32.gmra.mxu0 %v4344
      %v4531 = vpop.f32.mrf.mxu0
      %v4532 = vadd.f32 %v4303, %v4531
      %v4533 = vpop.f32.mrf.mxu0
      %4534 = vmatprep.mubr.f32.mxu0 0.0
      %4535 = vmatmul.mubr.f32.gmra.mxu0 %v4347
      %v4536 = vpop.f32.mrf.mxu0
      %v4537 = vadd.f32 %v4303, %v4536
      %v4538 = vpop.f32.mrf.mxu0
      %4539 = vmatprep.mubr.f32.mxu0 0.0
      %4540 = vmatmul.mubr.f32.gmra.mxu0 %v4350
      %v4541 = vpop.f32.mrf.mxu0
      %v4542 = vadd.f32 %v4303, %v4541
      %v4543 = vpop.f32.mrf.mxu0
      %4544 = vmatprep.mubr.f32.mxu0 0.0
      %4545 = vmatmul.mubr.f32.gmra.mxu0 %v4353
      %v4546 = vpop.f32.mrf.mxu0
      %v4547 = vadd.f32 %v4303, %v4546
      %v4548 = vpop.f32.mrf.mxu0
      %4549 = vmatprep.mubr.f32.mxu0 0.0
      %4550 = vmatmul.mubr.f32.gmra.mxu0 %v4356
      %v4551 = vpop.f32.mrf.mxu0
      %v4552 = vadd.f32 %v4303, %v4551
      %v4553 = vpop.f32.mrf.mxu0
      %4554 = vmatprep.mubr.f32.mxu0 0.0
      %4555 = vmatmul.mubr.f32.gmra.mxu0 %v4359
      %v4556 = vpop.f32.mrf.mxu0
      %v4557 = vadd.f32 %v4303, %v4556
      %v4558 = vpop.f32.mrf.mxu0
      %4559 = vmatprep.mubr.f32.mxu0 0.0
      %4560 = vmatmul.mubr.f32.gmra.mxu0 %v4362
      %v4561 = vpop.f32.mrf.mxu0
      %v4562 = vadd.f32 %v4303, %v4561
      %v4563 = vpop.f32.mrf.mxu0
      %4564 = vmatprep.mubr.f32.mxu0 0.0
      %4565 = vmatmul.mubr.f32.gmra.mxu0 %v4365
      %v4566 = vpop.f32.mrf.mxu0
      %v4567 = vadd.f32 %v4303, %v4566
      %v4568 = vpop.f32.mrf.mxu0
      %4569 = vmatprep.mubr.f32.mxu0 0.0
      %4570 = vmatmul.mubr.f32.gmra.mxu0 %v4368
      %v4571 = vpop.f32.mrf.mxu0
      %v4572 = vadd.f32 %v4303, %v4571
      %v4573 = vpop.f32.mrf.mxu0
      %4574 = vmatprep.mubr.f32.mxu0 0.0
      %4575 = vmatmul.mubr.f32.gmra.mxu0 %v4371
      %v4576 = vpop.f32.mrf.mxu0
      %v4577 = vadd.f32 %v4303, %v4576
      %v4578 = vpop.f32.mrf.mxu0
      %4579 = vmatprep.mubr.f32.mxu0 0.0
      %4580 = vmatmul.mubr.f32.gmra.mxu0 %v4374
      %v4581 = vpop.f32.mrf.mxu0
      %v4582 = vadd.f32 %v4303, %v4581
      %v4583 = vpop.f32.mrf.mxu0
      %4584 = vmatprep.mubr.f32.mxu0 0.0
      %4585 = vmatmul.mubr.f32.gmra.mxu0 %v4377
      %v4586 = vpop.f32.mrf.mxu0
      %v4587 = vadd.f32 %v4303, %v4586
      %v4588 = vpop.f32.mrf.mxu0
      %4589 = vmatprep.mubr.f32.mxu0 0.0
      %4590 = vmatmul.mubr.f32.gmra.mxu0 %v4380
      %v4591 = vpop.f32.mrf.mxu0
      %v4592 = vadd.f32 %v4303, %v4591
      %v4593 = vpop.f32.mrf.mxu0
      %4594 = vmatprep.mubr.f32.mxu0 0.0
      %4595 = vmatmul.mubr.f32.gmra.mxu0 %v4383
      %v4596 = vpop.f32.mrf.mxu0
      %v4597 = vadd.f32 %v4303, %v4596
      %v4598 = vpop.f32.mrf.mxu0
      %4599 = vmatprep.mubr.f32.mxu0 0.0
      %4600 = vmatmul.mubr.f32.gmra.mxu0 %v4386
      %v4601 = vpop.f32.mrf.mxu0
      %v4602 = vadd.f32 %v4303, %v4601
      %v4603 = vpop.f32.mrf.mxu0
      %4604 = vmatprep.mubr.f32.mxu0 0.0
      %4605 = vmatmul.mubr.f32.gmra.mxu0 %v4389
      %v4606 = vpop.f32.mrf.mxu0
      %v4607 = vadd.f32 %v4303, %v4606
      %v4608 = vpop.f32.mrf.mxu0
      %4609 = vmatprep.mubr.f32.mxu0 0.0
      %4610 = vmatmul.mubr.f32.gmra.mxu0 %v4392
      %v4611 = vpop.f32.mrf.mxu0
      %v4612 = vadd.f32 %v4303, %v4611
      %v4613 = vpop.f32.mrf.mxu0
      %4614 = vmatprep.mubr.f32.mxu0 0.0
      %4615 = vmatmul.mubr.f32.gmra.mxu0 %v4395
      %v4616 = vpop.f32.mrf.mxu0
      %v4617 = vadd.f32 %v4303, %v4616
      %v4618 = vpop.f32.mrf.mxu0
      %4619 = vmatprep.mubr.f32.mxu0 0.0
      %4620 = vmatmul.mubr.f32.gmra.mxu0 %v4398
      %v4621 = vpop.f32.mrf.mxu0
      %v4622 = vadd.f32 %v4303, %v4621
      %v4623 = vpop.f32.mrf.mxu0
      %4624 = vdwg.mxu0
      %v4625 = vsel %vm186, %v3518, 0.0
      %v4626 = vrot.slane %v4625, 4
      %v4627 = vadd.f32 %v4625, %v4626
      %v4628 = vrot.slane %v4627, 2
      %v4629 = vadd.f32 %v4627, %v4628
      %v4630 = vrot.slane %v4629, 1
      %v4631 = vadd.f32 %v4629, %v4630
      %v4632 = vsel %vm186, %v3523, 0.0
      %v4633 = vrot.slane %v4632, 4
      %v4634 = vadd.f32 %v4632, %v4633
      %v4635 = vrot.slane %v4634, 2
      %v4636 = vadd.f32 %v4634, %v4635
      %v4637 = vrot.slane %v4636, 1
      %v4638 = vadd.f32 %v4636, %v4637
      %v4639 = vsel %vm186, %v3528, 0.0
      %v4640 = vrot.slane %v4639, 4
      %v4641 = vadd.f32 %v4639, %v4640
      %v4642 = vrot.slane %v4641, 2
      %v4643 = vadd.f32 %v4641, %v4642
      %v4644 = vrot.slane %v4643, 1
      %v4645 = vadd.f32 %v4643, %v4644
      %v4646 = vsel %vm186, %v3533, 0.0
      %v4647 = vrot.slane %v4646, 4
      %v4648 = vadd.f32 %v4646, %v4647
      %v4649 = vrot.slane %v4648, 2
      %v4650 = vadd.f32 %v4648, %v4649
      %v4651 = vrot.slane %v4650, 1
      %v4652 = vadd.f32 %v4650, %v4651
      %v4653 = vsel %vm186, %v3538, 0.0
      %v4654 = vrot.slane %v4653, 4
      %v4655 = vadd.f32 %v4653, %v4654
      %v4656 = vrot.slane %v4655, 2
      %v4657 = vadd.f32 %v4655, %v4656
      %v4658 = vrot.slane %v4657, 1
      %v4659 = vadd.f32 %v4657, %v4658
      %v4660 = vsel %vm186, %v3543, 0.0
      %v4661 = vrot.slane %v4660, 4
      %v4662 = vadd.f32 %v4660, %v4661
      %v4663 = vrot.slane %v4662, 2
      %v4664 = vadd.f32 %v4662, %v4663
      %v4665 = vrot.slane %v4664, 1
      %v4666 = vadd.f32 %v4664, %v4665
      %v4667 = vsel %vm186, %v3548, 0.0
      %v4668 = vrot.slane %v4667, 4
      %v4669 = vadd.f32 %v4667, %v4668
      %v4670 = vrot.slane %v4669, 2
      %v4671 = vadd.f32 %v4669, %v4670
      %v4672 = vrot.slane %v4671, 1
      %v4673 = vadd.f32 %v4671, %v4672
      %v4674 = vsel %vm186, %v3553, 0.0
      %v4675 = vrot.slane %v4674, 4
      %v4676 = vadd.f32 %v4674, %v4675
      %v4677 = vrot.slane %v4676, 2
      %v4678 = vadd.f32 %v4676, %v4677
      %v4679 = vrot.slane %v4678, 1
      %v4680 = vadd.f32 %v4678, %v4679
      %v4681 = vsel %vm186, %v3558, 0.0
      %v4682 = vrot.slane %v4681, 4
      %v4683 = vadd.f32 %v4681, %v4682
      %v4684 = vrot.slane %v4683, 2
      %v4685 = vadd.f32 %v4683, %v4684
      %v4686 = vrot.slane %v4685, 1
      %v4687 = vadd.f32 %v4685, %v4686
      %v4688 = vsel %vm186, %v3563, 0.0
      %v4689 = vrot.slane %v4688, 4
      %v4690 = vadd.f32 %v4688, %v4689
      %v4691 = vrot.slane %v4690, 2
      %v4692 = vadd.f32 %v4690, %v4691
      %v4693 = vrot.slane %v4692, 1
      %v4694 = vadd.f32 %v4692, %v4693
      %v4695 = vsel %vm186, %v3568, 0.0
      %v4696 = vrot.slane %v4695, 4
      %v4697 = vadd.f32 %v4695, %v4696
      %v4698 = vrot.slane %v4697, 2
      %v4699 = vadd.f32 %v4697, %v4698
      %v4700 = vrot.slane %v4699, 1
      %v4701 = vadd.f32 %v4699, %v4700
      %v4702 = vsel %vm186, %v3573, 0.0
      %v4703 = vrot.slane %v4702, 4
      %v4704 = vadd.f32 %v4702, %v4703
      %v4705 = vrot.slane %v4704, 2
      %v4706 = vadd.f32 %v4704, %v4705
      %v4707 = vrot.slane %v4706, 1
      %v4708 = vadd.f32 %v4706, %v4707
      %v4709 = vsel %vm186, %v3578, 0.0
      %v4710 = vrot.slane %v4709, 4
      %v4711 = vadd.f32 %v4709, %v4710
      %v4712 = vrot.slane %v4711, 2
      %v4713 = vadd.f32 %v4711, %v4712
      %v4714 = vrot.slane %v4713, 1
      %v4715 = vadd.f32 %v4713, %v4714
      %v4716 = vsel %vm186, %v3583, 0.0
      %v4717 = vrot.slane %v4716, 4
      %v4718 = vadd.f32 %v4716, %v4717
      %v4719 = vrot.slane %v4718, 2
      %v4720 = vadd.f32 %v4718, %v4719
      %v4721 = vrot.slane %v4720, 1
      %v4722 = vadd.f32 %v4720, %v4721
      %v4723 = vsel %vm186, %v3588, 0.0
      %v4724 = vrot.slane %v4723, 4
      %v4725 = vadd.f32 %v4723, %v4724
      %v4726 = vrot.slane %v4725, 2
      %v4727 = vadd.f32 %v4725, %v4726
      %v4728 = vrot.slane %v4727, 1
      %v4729 = vadd.f32 %v4727, %v4728
      %v4730 = vsel %vm186, %v3593, 0.0
      %v4731 = vrot.slane %v4730, 4
      %v4732 = vadd.f32 %v4730, %v4731
      %v4733 = vrot.slane %v4732, 2
      %v4734 = vadd.f32 %v4732, %v4733
      %v4735 = vrot.slane %v4734, 1
      %v4736 = vadd.f32 %v4734, %v4735
      %v4737 = vsel %vm186, %v3598, 0.0
      %v4738 = vrot.slane %v4737, 4
      %v4739 = vadd.f32 %v4737, %v4738
      %v4740 = vrot.slane %v4739, 2
      %v4741 = vadd.f32 %v4739, %v4740
      %v4742 = vrot.slane %v4741, 1
      %v4743 = vadd.f32 %v4741, %v4742
      %v4744 = vsel %vm186, %v3603, 0.0
      %v4745 = vrot.slane %v4744, 4
      %v4746 = vadd.f32 %v4744, %v4745
      %v4747 = vrot.slane %v4746, 2
      %v4748 = vadd.f32 %v4746, %v4747
      %v4749 = vrot.slane %v4748, 1
      %v4750 = vadd.f32 %v4748, %v4749
      %v4751 = vsel %vm186, %v3608, 0.0
      %v4752 = vrot.slane %v4751, 4
      %v4753 = vadd.f32 %v4751, %v4752
      %v4754 = vrot.slane %v4753, 2
      %v4755 = vadd.f32 %v4753, %v4754
      %v4756 = vrot.slane %v4755, 1
      %v4757 = vadd.f32 %v4755, %v4756
      %v4758 = vsel %vm186, %v3613, 0.0
      %v4759 = vrot.slane %v4758, 4
      %v4760 = vadd.f32 %v4758, %v4759
      %v4761 = vrot.slane %v4760, 2
      %v4762 = vadd.f32 %v4760, %v4761
      %v4763 = vrot.slane %v4762, 1
      %v4764 = vadd.f32 %v4762, %v4763
      %v4765 = vsel %vm186, %v3618, 0.0
      %v4766 = vrot.slane %v4765, 4
      %v4767 = vadd.f32 %v4765, %v4766
      %v4768 = vrot.slane %v4767, 2
      %v4769 = vadd.f32 %v4767, %v4768
      %v4770 = vrot.slane %v4769, 1
      %v4771 = vadd.f32 %v4769, %v4770
      %v4772 = vsel %vm186, %v3623, 0.0
      %v4773 = vrot.slane %v4772, 4
      %v4774 = vadd.f32 %v4772, %v4773
      %v4775 = vrot.slane %v4774, 2
      %v4776 = vadd.f32 %v4774, %v4775
      %v4777 = vrot.slane %v4776, 1
      %v4778 = vadd.f32 %v4776, %v4777
      %v4779 = vsel %vm186, %v3628, 0.0
      %v4780 = vrot.slane %v4779, 4
      %v4781 = vadd.f32 %v4779, %v4780
      %v4782 = vrot.slane %v4781, 2
      %v4783 = vadd.f32 %v4781, %v4782
      %v4784 = vrot.slane %v4783, 1
      %v4785 = vadd.f32 %v4783, %v4784
      %v4786 = vsel %vm186, %v3633, 0.0
      %v4787 = vrot.slane %v4786, 4
      %v4788 = vadd.f32 %v4786, %v4787
      %v4789 = vrot.slane %v4788, 2
      %v4790 = vadd.f32 %v4788, %v4789
      %v4791 = vrot.slane %v4790, 1
      %v4792 = vadd.f32 %v4790, %v4791
      %v4793 = vsel %vm186, %v3638, 0.0
      %v4794 = vrot.slane %v4793, 4
      %v4795 = vadd.f32 %v4793, %v4794
      %v4796 = vrot.slane %v4795, 2
      %v4797 = vadd.f32 %v4795, %v4796
      %v4798 = vrot.slane %v4797, 1
      %v4799 = vadd.f32 %v4797, %v4798
      %v4800 = vsel %vm186, %v3643, 0.0
      %v4801 = vrot.slane %v4800, 4
      %v4802 = vadd.f32 %v4800, %v4801
      %v4803 = vrot.slane %v4802, 2
      %v4804 = vadd.f32 %v4802, %v4803
      %v4805 = vrot.slane %v4804, 1
      %v4806 = vadd.f32 %v4804, %v4805
      %v4807 = vsel %vm186, %v3648, 0.0
      %v4808 = vrot.slane %v4807, 4
      %v4809 = vadd.f32 %v4807, %v4808
      %v4810 = vrot.slane %v4809, 2
      %v4811 = vadd.f32 %v4809, %v4810
      %v4812 = vrot.slane %v4811, 1
      %v4813 = vadd.f32 %v4811, %v4812
      %v4814 = vsel %vm186, %v3653, 0.0
      %v4815 = vrot.slane %v4814, 4
      %v4816 = vadd.f32 %v4814, %v4815
      %v4817 = vrot.slane %v4816, 2
      %v4818 = vadd.f32 %v4816, %v4817
      %v4819 = vrot.slane %v4818, 1
      %v4820 = vadd.f32 %v4818, %v4819
      %v4821 = vsel %vm186, %v3658, 0.0
      %v4822 = vrot.slane %v4821, 4
      %v4823 = vadd.f32 %v4821, %v4822
      %v4824 = vrot.slane %v4823, 2
      %v4825 = vadd.f32 %v4823, %v4824
      %v4826 = vrot.slane %v4825, 1
      %v4827 = vadd.f32 %v4825, %v4826
      %v4828 = vsel %vm186, %v3663, 0.0
      %v4829 = vrot.slane %v4828, 4
      %v4830 = vadd.f32 %v4828, %v4829
      %v4831 = vrot.slane %v4830, 2
      %v4832 = vadd.f32 %v4830, %v4831
      %v4833 = vrot.slane %v4832, 1
      %v4834 = vadd.f32 %v4832, %v4833
      %v4835 = vsel %vm186, %v3668, 0.0
      %v4836 = vrot.slane %v4835, 4
      %v4837 = vadd.f32 %v4835, %v4836
      %v4838 = vrot.slane %v4837, 2
      %v4839 = vadd.f32 %v4837, %v4838
      %v4840 = vrot.slane %v4839, 1
      %v4841 = vadd.f32 %v4839, %v4840
      %v4842 = vsel %vm186, %v3673, 0.0
      %v4843 = vrot.slane %v4842, 4
      %v4844 = vadd.f32 %v4842, %v4843
      %v4845 = vrot.slane %v4844, 2
      %v4846 = vadd.f32 %v4844, %v4845
      %v4847 = vrot.slane %v4846, 1
      %v4848 = vadd.f32 %v4846, %v4847
      %v4849 = vmul.f32 %v4631, 0.125
      %v4850 = vmul.f32 %v4638, 0.125
      %v4851 = vmul.f32 %v4645, 0.125
      %v4852 = vmul.f32 %v4652, 0.125
      %v4853 = vmul.f32 %v4659, 0.125
      %v4854 = vmul.f32 %v4666, 0.125
      %v4855 = vmul.f32 %v4673, 0.125
      %v4856 = vmul.f32 %v4680, 0.125
      %v4857 = vmul.f32 %v4687, 0.125
      %v4858 = vmul.f32 %v4694, 0.125
      %v4859 = vmul.f32 %v4701, 0.125
      %v4860 = vmul.f32 %v4708, 0.125
      %v4861 = vmul.f32 %v4715, 0.125
      %v4862 = vmul.f32 %v4722, 0.125
      %v4863 = vmul.f32 %v4729, 0.125
      %v4864 = vmul.f32 %v4736, 0.125
      %v4865 = vmul.f32 %v4743, 0.125
      %v4866 = vmul.f32 %v4750, 0.125
      %v4867 = vmul.f32 %v4757, 0.125
      %v4868 = vmul.f32 %v4764, 0.125
      %v4869 = vmul.f32 %v4771, 0.125
      %v4870 = vmul.f32 %v4778, 0.125
      %v4871 = vmul.f32 %v4785, 0.125
      %v4872 = vmul.f32 %v4792, 0.125
      %v4873 = vmul.f32 %v4799, 0.125
      %v4874 = vmul.f32 %v4806, 0.125
      %v4875 = vmul.f32 %v4813, 0.125
      %v4876 = vmul.f32 %v4820, 0.125
      %v4877 = vmul.f32 %v4827, 0.125
      %v4878 = vmul.f32 %v4834, 0.125
      %v4879 = vmul.f32 %v4841, 0.125
      %v4880 = vmul.f32 %v4848, 0.125
      %v4881 = vsel %vm186, %v4467, 0.0
      %v4882 = vrot.slane %v4881, 4
      %v4883 = vadd.f32 %v4881, %v4882
      %v4884 = vrot.slane %v4883, 2
      %v4885 = vadd.f32 %v4883, %v4884
      %v4886 = vrot.slane %v4885, 1
      %v4887 = vadd.f32 %v4885, %v4886
      %v4888 = vsel %vm186, %v4472, 0.0
      %v4889 = vrot.slane %v4888, 4
      %v4890 = vadd.f32 %v4888, %v4889
      %v4891 = vrot.slane %v4890, 2
      %v4892 = vadd.f32 %v4890, %v4891
      %v4893 = vrot.slane %v4892, 1
      %v4894 = vadd.f32 %v4892, %v4893
      %v4895 = vsel %vm186, %v4477, 0.0
      %v4896 = vrot.slane %v4895, 4
      %v4897 = vadd.f32 %v4895, %v4896
      %v4898 = vrot.slane %v4897, 2
      %v4899 = vadd.f32 %v4897, %v4898
      %v4900 = vrot.slane %v4899, 1
      %v4901 = vadd.f32 %v4899, %v4900
      %v4902 = vsel %vm186, %v4482, 0.0
      %v4903 = vrot.slane %v4902, 4
      %v4904 = vadd.f32 %v4902, %v4903
      %v4905 = vrot.slane %v4904, 2
      %v4906 = vadd.f32 %v4904, %v4905
      %v4907 = vrot.slane %v4906, 1
      %v4908 = vadd.f32 %v4906, %v4907
      %v4909 = vsel %vm186, %v4487, 0.0
      %v4910 = vrot.slane %v4909, 4
      %v4911 = vadd.f32 %v4909, %v4910
      %v4912 = vrot.slane %v4911, 2
      %v4913 = vadd.f32 %v4911, %v4912
      %v4914 = vrot.slane %v4913, 1
      %v4915 = vadd.f32 %v4913, %v4914
      %v4916 = vsel %vm186, %v4492, 0.0
      %v4917 = vrot.slane %v4916, 4
      %v4918 = vadd.f32 %v4916, %v4917
      %v4919 = vrot.slane %v4918, 2
      %v4920 = vadd.f32 %v4918, %v4919
      %v4921 = vrot.slane %v4920, 1
      %v4922 = vadd.f32 %v4920, %v4921
      %v4923 = vsel %vm186, %v4497, 0.0
      %v4924 = vrot.slane %v4923, 4
      %v4925 = vadd.f32 %v4923, %v4924
      %v4926 = vrot.slane %v4925, 2
      %v4927 = vadd.f32 %v4925, %v4926
      %v4928 = vrot.slane %v4927, 1
      %v4929 = vadd.f32 %v4927, %v4928
      %v4930 = vsel %vm186, %v4502, 0.0
      %v4931 = vrot.slane %v4930, 4
      %v4932 = vadd.f32 %v4930, %v4931
      %v4933 = vrot.slane %v4932, 2
      %v4934 = vadd.f32 %v4932, %v4933
      %v4935 = vrot.slane %v4934, 1
      %v4936 = vadd.f32 %v4934, %v4935
      %v4937 = vsel %vm186, %v4507, 0.0
      %v4938 = vrot.slane %v4937, 4
      %v4939 = vadd.f32 %v4937, %v4938
      %v4940 = vrot.slane %v4939, 2
      %v4941 = vadd.f32 %v4939, %v4940
      %v4942 = vrot.slane %v4941, 1
      %v4943 = vadd.f32 %v4941, %v4942
      %v4944 = vsel %vm186, %v4512, 0.0
      %v4945 = vrot.slane %v4944, 4
      %v4946 = vadd.f32 %v4944, %v4945
      %v4947 = vrot.slane %v4946, 2
      %v4948 = vadd.f32 %v4946, %v4947
      %v4949 = vrot.slane %v4948, 1
      %v4950 = vadd.f32 %v4948, %v4949
      %v4951 = vsel %vm186, %v4517, 0.0
      %v4952 = vrot.slane %v4951, 4
      %v4953 = vadd.f32 %v4951, %v4952
      %v4954 = vrot.slane %v4953, 2
      %v4955 = vadd.f32 %v4953, %v4954
      %v4956 = vrot.slane %v4955, 1
      %v4957 = vadd.f32 %v4955, %v4956
      %v4958 = vsel %vm186, %v4522, 0.0
      %v4959 = vrot.slane %v4958, 4
      %v4960 = vadd.f32 %v4958, %v4959
      %v4961 = vrot.slane %v4960, 2
      %v4962 = vadd.f32 %v4960, %v4961
      %v4963 = vrot.slane %v4962, 1
      %v4964 = vadd.f32 %v4962, %v4963
      %v4965 = vsel %vm186, %v4527, 0.0
      %v4966 = vrot.slane %v4965, 4
      %v4967 = vadd.f32 %v4965, %v4966
      %v4968 = vrot.slane %v4967, 2
      %v4969 = vadd.f32 %v4967, %v4968
      %v4970 = vrot.slane %v4969, 1
      %v4971 = vadd.f32 %v4969, %v4970
      %v4972 = vsel %vm186, %v4532, 0.0
      %v4973 = vrot.slane %v4972, 4
      %v4974 = vadd.f32 %v4972, %v4973
      %v4975 = vrot.slane %v4974, 2
      %v4976 = vadd.f32 %v4974, %v4975
      %v4977 = vrot.slane %v4976, 1
      %v4978 = vadd.f32 %v4976, %v4977
      %v4979 = vsel %vm186, %v4537, 0.0
      %v4980 = vrot.slane %v4979, 4
      %v4981 = vadd.f32 %v4979, %v4980
      %v4982 = vrot.slane %v4981, 2
      %v4983 = vadd.f32 %v4981, %v4982
      %v4984 = vrot.slane %v4983, 1
      %v4985 = vadd.f32 %v4983, %v4984
      %v4986 = vsel %vm186, %v4542, 0.0
      %v4987 = vrot.slane %v4986, 4
      %v4988 = vadd.f32 %v4986, %v4987
      %v4989 = vrot.slane %v4988, 2
      %v4990 = vadd.f32 %v4988, %v4989
      %v4991 = vrot.slane %v4990, 1
      %v4992 = vadd.f32 %v4990, %v4991
      %v4993 = vsel %vm186, %v4547, 0.0
      %v4994 = vrot.slane %v4993, 4
      %v4995 = vadd.f32 %v4993, %v4994
      %v4996 = vrot.slane %v4995, 2
      %v4997 = vadd.f32 %v4995, %v4996
      %v4998 = vrot.slane %v4997, 1
      %v4999 = vadd.f32 %v4997, %v4998
      %v5000 = vsel %vm186, %v4552, 0.0
      %v5001 = vrot.slane %v5000, 4
      %v5002 = vadd.f32 %v5000, %v5001
      %v5003 = vrot.slane %v5002, 2
      %v5004 = vadd.f32 %v5002, %v5003
      %v5005 = vrot.slane %v5004, 1
      %v5006 = vadd.f32 %v5004, %v5005
      %v5007 = vsel %vm186, %v4557, 0.0
      %v5008 = vrot.slane %v5007, 4
      %v5009 = vadd.f32 %v5007, %v5008
      %v5010 = vrot.slane %v5009, 2
      %v5011 = vadd.f32 %v5009, %v5010
      %v5012 = vrot.slane %v5011, 1
      %v5013 = vadd.f32 %v5011, %v5012
      %v5014 = vsel %vm186, %v4562, 0.0
      %v5015 = vrot.slane %v5014, 4
      %v5016 = vadd.f32 %v5014, %v5015
      %v5017 = vrot.slane %v5016, 2
      %v5018 = vadd.f32 %v5016, %v5017
      %v5019 = vrot.slane %v5018, 1
      %v5020 = vadd.f32 %v5018, %v5019
      %v5021 = vsel %vm186, %v4567, 0.0
      %v5022 = vrot.slane %v5021, 4
      %v5023 = vadd.f32 %v5021, %v5022
      %v5024 = vrot.slane %v5023, 2
      %v5025 = vadd.f32 %v5023, %v5024
      %v5026 = vrot.slane %v5025, 1
      %v5027 = vadd.f32 %v5025, %v5026
      %v5028 = vsel %vm186, %v4572, 0.0
      %v5029 = vrot.slane %v5028, 4
      %v5030 = vadd.f32 %v5028, %v5029
      %v5031 = vrot.slane %v5030, 2
      %v5032 = vadd.f32 %v5030, %v5031
      %v5033 = vrot.slane %v5032, 1
      %v5034 = vadd.f32 %v5032, %v5033
      %v5035 = vsel %vm186, %v4577, 0.0
      %v5036 = vrot.slane %v5035, 4
      %v5037 = vadd.f32 %v5035, %v5036
      %v5038 = vrot.slane %v5037, 2
      %v5039 = vadd.f32 %v5037, %v5038
      %v5040 = vrot.slane %v5039, 1
      %v5041 = vadd.f32 %v5039, %v5040
      %v5042 = vsel %vm186, %v4582, 0.0
      %v5043 = vrot.slane %v5042, 4
      %v5044 = vadd.f32 %v5042, %v5043
      %v5045 = vrot.slane %v5044, 2
      %v5046 = vadd.f32 %v5044, %v5045
      %v5047 = vrot.slane %v5046, 1
      %v5048 = vadd.f32 %v5046, %v5047
      %v5049 = vsel %vm186, %v4587, 0.0
      %v5050 = vrot.slane %v5049, 4
      %v5051 = vadd.f32 %v5049, %v5050
      %v5052 = vrot.slane %v5051, 2
      %v5053 = vadd.f32 %v5051, %v5052
      %v5054 = vrot.slane %v5053, 1
      %v5055 = vadd.f32 %v5053, %v5054
      %v5056 = vsel %vm186, %v4592, 0.0
      %v5057 = vrot.slane %v5056, 4
      %v5058 = vadd.f32 %v5056, %v5057
      %v5059 = vrot.slane %v5058, 2
      %v5060 = vadd.f32 %v5058, %v5059
      %v5061 = vrot.slane %v5060, 1
      %v5062 = vadd.f32 %v5060, %v5061
      %v5063 = vsel %vm186, %v4597, 0.0
      %v5064 = vrot.slane %v5063, 4
      %v5065 = vadd.f32 %v5063, %v5064
      %v5066 = vrot.slane %v5065, 2
      %v5067 = vadd.f32 %v5065, %v5066
      %v5068 = vrot.slane %v5067, 1
      %v5069 = vadd.f32 %v5067, %v5068
      %v5070 = vsel %vm186, %v4602, 0.0
      %v5071 = vrot.slane %v5070, 4
      %v5072 = vadd.f32 %v5070, %v5071
      %v5073 = vrot.slane %v5072, 2
      %v5074 = vadd.f32 %v5072, %v5073
      %v5075 = vrot.slane %v5074, 1
      %v5076 = vadd.f32 %v5074, %v5075
      %v5077 = vsel %vm186, %v4607, 0.0
      %v5078 = vrot.slane %v5077, 4
      %v5079 = vadd.f32 %v5077, %v5078
      %v5080 = vrot.slane %v5079, 2
      %v5081 = vadd.f32 %v5079, %v5080
      %v5082 = vrot.slane %v5081, 1
      %v5083 = vadd.f32 %v5081, %v5082
      %v5084 = vsel %vm186, %v4612, 0.0
      %v5085 = vrot.slane %v5084, 4
      %v5086 = vadd.f32 %v5084, %v5085
      %v5087 = vrot.slane %v5086, 2
      %v5088 = vadd.f32 %v5086, %v5087
      %v5089 = vrot.slane %v5088, 1
      %v5090 = vadd.f32 %v5088, %v5089
      %v5091 = vsel %vm186, %v4617, 0.0
      %v5092 = vrot.slane %v5091, 4
      %v5093 = vadd.f32 %v5091, %v5092
      %v5094 = vrot.slane %v5093, 2
      %v5095 = vadd.f32 %v5093, %v5094
      %v5096 = vrot.slane %v5095, 1
      %v5097 = vadd.f32 %v5095, %v5096
      %v5098 = vsel %vm186, %v4622, 0.0
      %v5099 = vrot.slane %v5098, 4
      %v5100 = vadd.f32 %v5098, %v5099
      %v5101 = vrot.slane %v5100, 2
      %v5102 = vadd.f32 %v5100, %v5101
      %v5103 = vrot.slane %v5102, 1
      %v5104 = vadd.f32 %v5102, %v5103
      %v5105 = vmul.f32 %v4887, 0.125
      %v5106 = vmul.f32 %v4894, 0.125
      %v5107 = vmul.f32 %v4901, 0.125
      %v5108 = vmul.f32 %v4908, 0.125
      %v5109 = vmul.f32 %v4915, 0.125
      %v5110 = vmul.f32 %v4922, 0.125
      %v5111 = vmul.f32 %v4929, 0.125
      %v5112 = vmul.f32 %v4936, 0.125
      %v5113 = vmul.f32 %v4943, 0.125
      %v5114 = vmul.f32 %v4950, 0.125
      %v5115 = vmul.f32 %v4957, 0.125
      %v5116 = vmul.f32 %v4964, 0.125
      %v5117 = vmul.f32 %v4971, 0.125
      %v5118 = vmul.f32 %v4978, 0.125
      %v5119 = vmul.f32 %v4985, 0.125
      %v5120 = vmul.f32 %v4992, 0.125
      %v5121 = vmul.f32 %v4999, 0.125
      %v5122 = vmul.f32 %v5006, 0.125
      %v5123 = vmul.f32 %v5013, 0.125
      %v5124 = vmul.f32 %v5020, 0.125
      %v5125 = vmul.f32 %v5027, 0.125
      %v5126 = vmul.f32 %v5034, 0.125
      %v5127 = vmul.f32 %v5041, 0.125
      %v5128 = vmul.f32 %v5048, 0.125
      %v5129 = vmul.f32 %v5055, 0.125
      %v5130 = vmul.f32 %v5062, 0.125
      %v5131 = vmul.f32 %v5069, 0.125
      %v5132 = vmul.f32 %v5076, 0.125
      %v5133 = vmul.f32 %v5083, 0.125
      %v5134 = vmul.f32 %v5090, 0.125
      %v5135 = vmul.f32 %v5097, 0.125
      %v5136 = vmul.f32 %v5104, 0.125
      %v5137 = vld [vmem:[%s1 + $0xe0] sm:$0xff]
      %v5138 = vld [vmem:[%s1 + $0xe8] sm:$0xff]
      %v5139 = vld [vmem:[%s1 + $0xf0] sm:$0xff]
      %v5140 = vld [vmem:[%s1 + $0xf8] sm:$0xff]
      %vm5173 = vcmask 1041409
      %v5174 = vsel %vm5173, %v5106, %v5105
      %vm5175 = vcmask 1042434
      %v5176 = vsel %vm5175, %v5107, %v5174
      %vm5177 = vcmask 1043459
      %v5178 = vsel %vm5177, %v5108, %v5176
      %vm5179 = vcmask 1044484
      %v5180 = vsel %vm5179, %v5109, %v5178
      %vm5181 = vcmask 1045509
      %v5182 = vsel %vm5181, %v5110, %v5180
      %vm5183 = vcmask 1046534
      %v5184 = vsel %vm5183, %v5111, %v5182
      %vm5185 = vcmask 1047559
      %v5186 = vsel %vm5185, %v5112, %v5184
      %v5187 = vsel %vm5173, %v5114, %v5113
      %v5188 = vsel %vm5175, %v5115, %v5187
      %v5189 = vsel %vm5177, %v5116, %v5188
      %v5190 = vsel %vm5179, %v5117, %v5189
      %v5191 = vsel %vm5181, %v5118, %v5190
      %v5192 = vsel %vm5183, %v5119, %v5191
      %v5193 = vsel %vm5185, %v5120, %v5192
      %v5194 = vsel %vm5173, %v5122, %v5121
      %v5195 = vsel %vm5175, %v5123, %v5194
      %v5196 = vsel %vm5177, %v5124, %v5195
      %v5197 = vsel %vm5179, %v5125, %v5196
      %v5198 = vsel %vm5181, %v5126, %v5197
      %v5199 = vsel %vm5183, %v5127, %v5198
      %v5200 = vsel %vm5185, %v5128, %v5199
      %v5201 = vsel %vm5173, %v5130, %v5129
      %v5202 = vsel %vm5175, %v5131, %v5201
      %v5203 = vsel %vm5177, %v5132, %v5202
      %v5204 = vsel %vm5179, %v5133, %v5203
      %v5205 = vsel %vm5181, %v5134, %v5204
      %v5206 = vsel %vm5183, %v5135, %v5205
      %v5207 = vsel %vm5185, %v5136, %v5206
      %v5208 = vsel %vm186, %v5186, 0
      %v5210 = vsel %vm186, %v5193, 0
      %v5212 = vsel %vm186, %v5200, 0
      %v5214 = vsel %vm186, %v5207, 0
      %5216 = vmatprep.subr.mxu0 0.0
      %5217 = vmatpush1.msra.mxu0 0.0
      %5218 = vmatprep.subr.mxu0 0.0
      %5219 = vmatpush1.msra.mxu0 0.0
      %5220 = vmatprep.subr.mxu0 0.0
      %5221 = vmatpush1.msra.mxu0 0.0
      %5222 = vmatprep.subr.mxu0 0.0
      %5223 = vmatpush1.msra.mxu0 0.0
      %5224 = vmatprep.subr.mxu0 0.0
      %5225 = vmatpush1.msra.mxu0 0.0
      %5226 = vmatprep.subr.mxu0 0.0
      %5227 = vmatpush1.msra.mxu0 0.0
      %5228 = vmatprep.subr.mxu0 0.0
      %5229 = vmatpush1.msra.mxu0 0.0
      %5230 = vmatprep.subr.mxu0 0.0
      %5231 = vmatpush1.msra.mxu0 0.0
      %5232 = vmatprep.subr.mxu0 0.0
      %5233 = vmatpush1.msra.mxu0 0.0
      %5234 = vmatprep.subr.mxu0 0.0
      %5235 = vmatpush1.msra.mxu0 0.0
      %5236 = vmatprep.subr.mxu0 0.0
      %5237 = vmatpush1.msra.mxu0 0.0
      %5238 = vmatprep.subr.mxu0 0.0
      %5239 = vmatpush1.msra.mxu0 0.0
      %5240 = vmatprep.subr.mxu0 0.0
      %5241 = vmatpush1.msra.mxu0 0.0
      %5242 = vmatprep.subr.mxu0 0.0
      %5243 = vmatpush1.msra.mxu0 0.0
      %5244 = vmatprep.subr.mxu0 0.0
      %5245 = vmatpush1.msra.mxu0 %v5140
      %5246 = vmatprep.subr.mxu0 0.0
      %5247 = vmatpush1.msra.mxu0 %v5139
      %5248 = vmatprep.subr.mxu0 0.0
      %5249 = vmatpush2.msra.mxu0 0.0
      %5250 = vmatprep.subr.mxu0 0.0
      %5251 = vmatpush2.msra.mxu0 0.0
      %5252 = vmatprep.subr.mxu0 0.0
      %5253 = vmatpush2.msra.mxu0 0.0
      %5254 = vmatprep.subr.mxu0 0.0
      %5255 = vmatpush2.msra.mxu0 0.0
      %5256 = vmatprep.subr.mxu0 0.0
      %5257 = vmatpush2.msra.mxu0 0.0
      %5258 = vmatprep.subr.mxu0 0.0
      %5259 = vmatpush2.msra.mxu0 0.0
      %5260 = vmatprep.subr.mxu0 0.0
      %5261 = vmatpush2.msra.mxu0 0.0
      %5262 = vmatprep.subr.mxu0 0.0
      %5263 = vmatpush2.msra.mxu0 0.0
      %5264 = vmatprep.subr.mxu0 0.0
      %5265 = vmatpush2.msra.mxu0 0.0
      %5266 = vmatprep.subr.mxu0 0.0
      %5267 = vmatpush2.msra.mxu0 0.0
      %5268 = vmatprep.subr.mxu0 0.0
      %5269 = vmatpush2.msra.mxu0 0.0
      %5270 = vmatprep.subr.mxu0 0.0
      %5271 = vmatpush2.msra.mxu0 0.0
      %5272 = vmatprep.subr.mxu0 0.0
      %5273 = vmatpush2.msra.mxu0 0.0
      %5274 = vmatprep.subr.mxu0 0.0
      %5275 = vmatpush2.msra.mxu0 0.0
      %5276 = vmatprep.subr.mxu0 0.0
      %5277 = vmatpush2.msra.mxu0 0.0
      %5278 = vmatprep.subr.mxu0 0.0
      %5279 = vmatpush2.msra.mxu0 0.0
      %5280 = vmatprep.mubr.f32.mxu0 0.0
      %5281 = vmatmul.mubr.f32.gmra.mxu0 %v5208
      %v5282 = vpop.f32.mrf.mxu0
      %v5283 = vadd.f32 0.0, %v5282
      %v5284 = vpop.f32.mrf.mxu0
      %5285 = vmatprep.mubr.f32.mxu0 0.0
      %5286 = vmatmul.mubr.f32.gmra.mxu0 %v5210
      %v5287 = vpop.f32.mrf.mxu0
      %v5288 = vadd.f32 0.0, %v5287
      %v5289 = vpop.f32.mrf.mxu0
      %5290 = vmatprep.mubr.f32.mxu0 0.0
      %5291 = vmatmul.mubr.f32.gmra.mxu0 %v5212
      %v5292 = vpop.f32.mrf.mxu0
      %v5293 = vadd.f32 0.0, %v5292
      %v5294 = vpop.f32.mrf.mxu0
      %5295 = vmatprep.mubr.f32.mxu0 0.0
      %5296 = vmatmul.mubr.f32.gmra.mxu0 %v5214
      %v5297 = vpop.f32.mrf.mxu0
      %v5298 = vadd.f32 0.0, %v5297
      %v5299 = vpop.f32.mrf.mxu0
      %5300 = vdwg.mxu0
      %v5333 = vsel %vm5173, %v4850, %v4849
      %v5334 = vsel %vm5175, %v4851, %v5333
      %v5335 = vsel %vm5177, %v4852, %v5334
      %v5336 = vsel %vm5179, %v4853, %v5335
      %v5337 = vsel %vm5181, %v4854, %v5336
      %v5338 = vsel %vm5183, %v4855, %v5337
      %v5339 = vsel %vm5185, %v4856, %v5338
      %v5340 = vsel %vm5173, %v4858, %v4857
      %v5341 = vsel %vm5175, %v4859, %v5340
      %v5342 = vsel %vm5177, %v4860, %v5341
      %v5343 = vsel %vm5179, %v4861, %v5342
      %v5344 = vsel %vm5181, %v4862, %v5343
      %v5345 = vsel %vm5183, %v4863, %v5344
      %v5346 = vsel %vm5185, %v4864, %v5345
      %v5347 = vsel %vm5173, %v4866, %v4865
      %v5348 = vsel %vm5175, %v4867, %v5347
      %v5349 = vsel %vm5177, %v4868, %v5348
      %v5350 = vsel %vm5179, %v4869, %v5349
      %v5351 = vsel %vm5181, %v4870, %v5350
      %v5352 = vsel %vm5183, %v4871, %v5351
      %v5353 = vsel %vm5185, %v4872, %v5352
      %v5354 = vsel %vm5173, %v4874, %v4873
      %v5355 = vsel %vm5175, %v4875, %v5354
      %v5356 = vsel %vm5177, %v4876, %v5355
      %v5357 = vsel %vm5179, %v4877, %v5356
      %v5358 = vsel %vm5181, %v4878, %v5357
      %v5359 = vsel %vm5183, %v4879, %v5358
      %v5360 = vsel %vm5185, %v4880, %v5359
      %v5361 = vsel %vm186, %v5339, 0
      %v5363 = vsel %vm186, %v5346, 0
      %v5365 = vsel %vm186, %v5353, 0
      %v5367 = vsel %vm186, %v5360, 0
      %5369 = vmatprep.subr.mxu0 0.0
      %5370 = vmatpush1.msra.mxu0 0.0
      %5371 = vmatprep.subr.mxu0 0.0
      %5372 = vmatpush1.msra.mxu0 0.0
      %5373 = vmatprep.subr.mxu0 0.0
      %5374 = vmatpush1.msra.mxu0 0.0
      %5375 = vmatprep.subr.mxu0 0.0
      %5376 = vmatpush1.msra.mxu0 0.0
      %5377 = vmatprep.subr.mxu0 0.0
      %5378 = vmatpush1.msra.mxu0 0.0
      %5379 = vmatprep.subr.mxu0 0.0
      %5380 = vmatpush1.msra.mxu0 0.0
      %5381 = vmatprep.subr.mxu0 0.0
      %5382 = vmatpush1.msra.mxu0 0.0
      %5383 = vmatprep.subr.mxu0 0.0
      %5384 = vmatpush1.msra.mxu0 0.0
      %5385 = vmatprep.subr.mxu0 0.0
      %5386 = vmatpush1.msra.mxu0 0.0
      %5387 = vmatprep.subr.mxu0 0.0
      %5388 = vmatpush1.msra.mxu0 0.0
      %5389 = vmatprep.subr.mxu0 0.0
      %5390 = vmatpush1.msra.mxu0 0.0
      %5391 = vmatprep.subr.mxu0 0.0
      %5392 = vmatpush1.msra.mxu0 0.0
      %5393 = vmatprep.subr.mxu0 0.0
      %5394 = vmatpush1.msra.mxu0 0.0
      %5395 = vmatprep.subr.mxu0 0.0
      %5396 = vmatpush1.msra.mxu0 0.0
      %5397 = vmatprep.subr.mxu0 0.0
      %5398 = vmatpush1.msra.mxu0 %v5138
      %5399 = vmatprep.subr.mxu0 0.0
      %5400 = vmatpush1.msra.mxu0 %v5137
      %5401 = vmatprep.subr.mxu0 0.0
      %5402 = vmatpush2.msra.mxu0 0.0
      %5403 = vmatprep.subr.mxu0 0.0
      %5404 = vmatpush2.msra.mxu0 0.0
      %5405 = vmatprep.subr.mxu0 0.0
      %5406 = vmatpush2.msra.mxu0 0.0
      %5407 = vmatprep.subr.mxu0 0.0
      %5408 = vmatpush2.msra.mxu0 0.0
      %5409 = vmatprep.subr.mxu0 0.0
      %5410 = vmatpush2.msra.mxu0 0.0
      %5411 = vmatprep.subr.mxu0 0.0
      %5412 = vmatpush2.msra.mxu0 0.0
      %5413 = vmatprep.subr.mxu0 0.0
      %5414 = vmatpush2.msra.mxu0 0.0
      %5415 = vmatprep.subr.mxu0 0.0
      %5416 = vmatpush2.msra.mxu0 0.0
      %5417 = vmatprep.subr.mxu0 0.0
      %5418 = vmatpush2.msra.mxu0 0.0
      %5419 = vmatprep.subr.mxu0 0.0
      %5420 = vmatpush2.msra.mxu0 0.0
      %5421 = vmatprep.subr.mxu0 0.0
      %5422 = vmatpush2.msra.mxu0 0.0
      %5423 = vmatprep.subr.mxu0 0.0
      %5424 = vmatpush2.msra.mxu0 0.0
      %5425 = vmatprep.subr.mxu0 0.0
      %5426 = vmatpush2.msra.mxu0 0.0
      %5427 = vmatprep.subr.mxu0 0.0
      %5428 = vmatpush2.msra.mxu0 0.0
      %5429 = vmatprep.subr.mxu0 0.0
      %5430 = vmatpush2.msra.mxu0 0.0
      %5431 = vmatprep.subr.mxu0 0.0
      %5432 = vmatpush2.msra.mxu0 0.0
      %5433 = vmatprep.mubr.f32.mxu0 0.0
      %5434 = vmatmul.mubr.f32.gmra.mxu0 %v5361
      %v5435 = vpop.f32.mrf.mxu0
      %v5436 = vadd.f32 %v5283, %v5435
      %v5437 = vpop.f32.mrf.mxu0
      %5438 = vmatprep.mubr.f32.mxu0 0.0
      %5439 = vmatmul.mubr.f32.gmra.mxu0 %v5363
      %v5440 = vpop.f32.mrf.mxu0
      %v5441 = vadd.f32 %v5288, %v5440
      %v5442 = vpop.f32.mrf.mxu0
      %5443 = vmatprep.mubr.f32.mxu0 0.0
      %5444 = vmatmul.mubr.f32.gmra.mxu0 %v5365
      %v5445 = vpop.f32.mrf.mxu0
      %v5446 = vadd.f32 %v5293, %v5445
      %v5447 = vpop.f32.mrf.mxu0
      %5448 = vmatprep.mubr.f32.mxu0 0.0
      %5449 = vmatmul.mubr.f32.gmra.mxu0 %v5367
      %v5450 = vpop.f32.mrf.mxu0
      %v5451 = vadd.f32 %v5298, %v5450
      %v5452 = vpop.f32.mrf.mxu0
      %5453 = vdwg.mxu0
      %v5454 = vld [vmem:[%s1 + $0x100] sm:$0x1]
      %v5455 = vlaneseq
      %v5456 = vshrl.u32 %v5455, 7
      %v5457 = vsub.s32 0, %v5456
      %v5458 = vrot.slane %v5454, %v5457
      %v5459 = vadd.f32 %v5436, %v5458
      %v5460 = vadd.f32 %v5441, %v5458
      %v5461 = vadd.f32 %v5446, %v5458
      %v5462 = vadd.f32 %v5451, %v5458
      %v5463 = vmax.f32 %v5459, 0.0
      %v5464 = vmax.f32 %v5460, 0.0
      %v5465 = vmax.f32 %v5461, 0.0
      %v5466 = vmax.f32 %v5462, 0.0
      %v5467 = vld [vmem:[%s1 + $0x108] sm:$0xff]
      %v5468 = vld [vmem:[%s1 + $0x110] sm:$0xff]
      %v5469 = vld [vmem:[%s1 + $0x118] sm:$0xff]
      %v5470 = vld [vmem:[%s1 + $0x120] sm:$0xff]
      %v5471 = vld [vmem:[%s1 + $0x128] sm:$0x1]
      %v5472 = vlaneseq
      %v5473 = vshrl.u32 %v5472, 7
      %v5474 = vsub.s32 0, %v5473
      %v5475 = vrot.slane %v5471, %v5474
      %v5477 = vsel %vm549, %v5463, 0
      %v5480 = vsel %vm549, %v5464, 0
      %v5483 = vsel %vm549, %v5465, 0
      %v5486 = vsel %vm549, %v5466, 0
      %5488 = vmatprep.subr.mxu0 0.0
      %5489 = vmatpush1.msra.mxu0 0.0
      %5490 = vmatprep.subr.mxu0 0.0
      %5491 = vmatpush1.msra.mxu0 0.0
      %5492 = vmatprep.subr.mxu0 0.0
      %5493 = vmatpush1.msra.mxu0 0.0
      %5494 = vmatprep.subr.mxu0 0.0
      %5495 = vmatpush1.msra.mxu0 0.0
      %5496 = vmatprep.subr.mxu0 0.0
      %5497 = vmatpush1.msra.mxu0 0.0
      %5498 = vmatprep.subr.mxu0 0.0
      %5499 = vmatpush1.msra.mxu0 0.0
      %5500 = vmatprep.subr.mxu0 0.0
      %5501 = vmatpush1.msra.mxu0 0.0
      %5502 = vmatprep.subr.mxu0 0.0
      %5503 = vmatpush1.msra.mxu0 0.0
      %5504 = vmatprep.subr.mxu0 0.0
      %5505 = vmatpush1.msra.mxu0 0.0
      %5506 = vmatprep.subr.mxu0 0.0
      %5507 = vmatpush1.msra.mxu0 0.0
      %5508 = vmatprep.subr.mxu0 0.0
      %5509 = vmatpush1.msra.mxu0 0.0
      %5510 = vmatprep.subr.mxu0 0.0
      %5511 = vmatpush1.msra.mxu0 0.0
      %5512 = vmatprep.subr.mxu0 0.0
      %5513 = vmatpush1.msra.mxu0 %v5470
      %5514 = vmatprep.subr.mxu0 0.0
      %5515 = vmatpush1.msra.mxu0 %v5469
      %5516 = vmatprep.subr.mxu0 0.0
      %5517 = vmatpush1.msra.mxu0 %v5468
      %5518 = vmatprep.subr.mxu0 0.0
      %5519 = vmatpush1.msra.mxu0 %v5467
      %5520 = vmatprep.subr.mxu0 0.0
      %5521 = vmatpush2.msra.mxu0 0.0
      %5522 = vmatprep.subr.mxu0 0.0
      %5523 = vmatpush2.msra.mxu0 0.0
      %5524 = vmatprep.subr.mxu0 0.0
      %5525 = vmatpush2.msra.mxu0 0.0
      %5526 = vmatprep.subr.mxu0 0.0
      %5527 = vmatpush2.msra.mxu0 0.0
      %5528 = vmatprep.subr.mxu0 0.0
      %5529 = vmatpush2.msra.mxu0 0.0
      %5530 = vmatprep.subr.mxu0 0.0
      %5531 = vmatpush2.msra.mxu0 0.0
      %5532 = vmatprep.subr.mxu0 0.0
      %5533 = vmatpush2.msra.mxu0 0.0
      %5534 = vmatprep.subr.mxu0 0.0
      %5535 = vmatpush2.msra.mxu0 0.0
      %5536 = vmatprep.subr.mxu0 0.0
      %5537 = vmatpush2.msra.mxu0 0.0
      %5538 = vmatprep.subr.mxu0 0.0
      %5539 = vmatpush2.msra.mxu0 0.0
      %5540 = vmatprep.subr.mxu0 0.0
      %5541 = vmatpush2.msra.mxu0 0.0
      %5542 = vmatprep.subr.mxu0 0.0
      %5543 = vmatpush2.msra.mxu0 0.0
      %5544 = vmatprep.subr.mxu0 0.0
      %5545 = vmatpush2.msra.mxu0 0.0
      %5546 = vmatprep.subr.mxu0 0.0
      %5547 = vmatpush2.msra.mxu0 0.0
      %5548 = vmatprep.subr.mxu0 0.0
      %5549 = vmatpush2.msra.mxu0 0.0
      %5550 = vmatprep.subr.mxu0 0.0
      %5551 = vmatpush2.msra.mxu0 0.0
      %5552 = vmatprep.mubr.f32.mxu0 0.0
      %5553 = vmatmul.mubr.f32.gmra.mxu0 %v5477
      %v5554 = vpop.f32.mrf.mxu0
      %v5555 = vadd.f32 %v5475, %v5554
      %v5556 = vpop.f32.mrf.mxu0
      %5557 = vmatprep.mubr.f32.mxu0 0.0
      %5558 = vmatmul.mubr.f32.gmra.mxu0 %v5480
      %v5559 = vpop.f32.mrf.mxu0
      %v5560 = vadd.f32 %v5475, %v5559
      %v5561 = vpop.f32.mrf.mxu0
      %5562 = vmatprep.mubr.f32.mxu0 0.0
      %5563 = vmatmul.mubr.f32.gmra.mxu0 %v5483
      %v5564 = vpop.f32.mrf.mxu0
      %v5565 = vadd.f32 %v5475, %v5564
      %v5566 = vpop.f32.mrf.mxu0
      %5567 = vmatprep.mubr.f32.mxu0 0.0
      %5568 = vmatmul.mubr.f32.gmra.mxu0 %v5486
      %v5569 = vpop.f32.mrf.mxu0
      %v5570 = vadd.f32 %v5475, %v5569
      %v5571 = vpop.f32.mrf.mxu0
      %5572 = vdwg.mxu0
      %vm5573 = vcmask 31744
      %5574 = vst.msk [vmem:[%s145] sm:$0xff] %vm5573, %v5555
      %5575 = vst.msk [vmem:[%s145 + $0x8] sm:$0xff] %vm5573, %v5560
      %5576 = vst.msk [vmem:[%s145 + $0x10] sm:$0xff] %vm5573, %v5565
      %5577 = vst.msk [vmem:[%s145 + $0x18] sm:$0xff] %vm5573, %v5570
      %s5578 = smul.u32 4, %s13
      %p5579 = scmp.lt.s32.totalorder %s5578, 7
      %s5580 = scalar_select %p5579, %s5578, 7
      %s5581 = smul.addr %s5580, 8
      %s5582 = scalar_lea.vmem %s2, %s5581
      // Predicated region
      $region29: #{tpu_custom_call.1} parent=27 // pred_check
        %p5583 = pneg %p78
      $region30: #{tpu_custom_call.1} parent=27 // pred_check_branch
        %5585 = sbr.rel (%p5583) target = $region32
      $region31: #{tpu_custom_call.1} parent=27 // pred_region
        %s5586 = smul.u32 4, %s13
      $region32: #{tpu_custom_call.1} parent=27 // pred_fallthru
        _
    $region28: #{tpu_custom_call.1} parent=5 // pred_fallthru
      _
    %p5587 = scmp.le.s32.totalorder 2, %s8
    // Predicated region
    $region33: #{tpu_custom_call.1} parent=5 // pred_check
      %p5588 = pneg %p5587
    $region34: #{tpu_custom_call.1} parent=5 // pred_check_branch
      %5590 = sbr.rel (%p5588) target = $region36
    $region35: #{tpu_custom_call.1} parent=5 // pred_region
      %s5591 = ssub.s32 %s8, 2
      // Predicated region
      $region37: #{tpu_custom_call.1} parent=35 // pred_check
        %p5592 = pneg %p84
      $region38: #{tpu_custom_call.1} parent=35 // pred_check_branch
        %5594 = sbr.rel (%p5592) target = $region40
      $region39: #{tpu_custom_call.1} parent=35 // pred_region
        %s5595 = smul.u32 4, %s14
        %p5596 = scmp.lt.s32.totalorder %s5595, 7
        %s5597 = scalar_select %p5596, %s5595, 7
        %s5598 = smul.addr %s5597, 8
        %s5599 = scalar_lea.vmem %s2, %s5598
      $region40: #{tpu_custom_call.1} parent=35 // pred_fallthru
        _
    $region36: #{tpu_custom_call.1} parent=5 // pred_fallthru
      _
  $region6: #{tpu_custom_call.1} parent=0 // loop_footer
    %s12 = sadd.s32 1, %s8
  $region7: #{tpu_custom_call.1} parent=0 // loop_footer_branch
    %7 = sbr.rel target = $region3
  $region8: #{tpu_custom_call.1} parent=0 // loop_exit
    _

</llo_original>
